<compile_context>
chip_gen: v7x
topology: tpu7x:2x2x1
jax: 0.10.0
libtpu: 0.0.40
codegen_flags: <defaults>
</compile_context>

<pallas_src>
import numpy as np
import jax
import jax.numpy as jnp
from jax.experimental import pallas as pl
from jax.experimental.pallas import tpu as pltpu

holidays = {'2019-04-05': 0, '2020-04-04': 0, '2019-05-01': 1, '2020-05-01': 1,
            '2019-06-07': 2, '2019-09-13': 3, '2019-10-01': 4, '2020-01-01': 5,
            '2020-01-25': 6, '2019-06-18': 7, '2019-11-11': 8}

H_DIM = max(holidays.values()) * 2 + 2      # 18
LOOKBACK = 30
LOOKAHEAD = 5
HIDDEN = 16                                  # GRU hidden size


# ---------------------------------------------------------------------------
# Pallas kernel
# ---------------------------------------------------------------------------
def model_kernel(feats_ref, hback_ref, hahead_ref,
                 hw_ref, hb_ref, wih_ref, bih_ref, bhhn_ref, whh_ref,
                 wm_ref, bm_ref, out_ref, gi_ref):
    LBP = feats_ref.shape[0]                 # L * Bp
    BP = LBP // LOOKBACK                     # padded batch (multiple of 8)
    B = out_ref.shape[0]                     # true batch
    H = HIDDEN
    hb = hb_ref[0, 0]                        # SMEM scalar (holiday bias)

    hw3 = hw_ref[...]                        # (1, 1, H_DIM)
    hw2 = hw3[0]                             # (1, H_DIM)

    # holiday_em: Linear(H_DIM, 1) as broadcast-multiply + lane reduction.
    h_back = jnp.sum(hback_ref[...] * hw2, axis=-1, keepdims=True) + hb   # (L*Bp, 1)
    h_ahead = jnp.sum(hahead_ref[...] * hw3, axis=-1) + hb                # (B, LA)

    # Input-gate projection for all timesteps as a single MXU matmul.
    # feats rows are [X, week_emb0, week_emb1]; the GRU input is
    # x_in = X - h_back, recovered by subtracting h_back * wih[0, :].
    # bih already contains b_ih + [b_hh_r, b_hh_z, 0] (folded in wrapper).
    wih = wih_ref[...]                                                    # (3, 3H)
    gi = (jnp.dot(feats_ref[...], wih, preferred_element_type=jnp.float32)
          - h_back * wih[0:1, :]
          + bih_ref[...])                                                 # (L*Bp, 3H)
    gi_ref[...] = gi

    whh = whh_ref[...]                                                    # (H, 3H)
    bhh_n = bhhn_ref[...]                    # (1, H): must stay inside r*( )

    def step(t, carry):
        h_state, h_sum = carry
        start = pl.multiple_of(t * BP, BP)               # tile-aligned slice
        g_i = gi_ref[pl.ds(start, BP), :]                # (Bp, 3H)
        # Tiny (Bp,H)x(H,3H) dot on the MXU. (A VPU MAC formulation could
        # trim MRF drain latency on v5e; kept as a dot for v6e/v7x.)
        g_h = jnp.dot(h_state, whh, preferred_element_type=jnp.float32)
        r = jax.nn.sigmoid(g_i[:, 0:H] + g_h[:, 0:H])
        z = jax.nn.sigmoid(g_i[:, H:2 * H] + g_h[:, H:2 * H])
        n = jnp.tanh(g_i[:, 2 * H:] + r * (g_h[:, 2 * H:] + bhh_n))
        h_new = (1.0 - z) * n + z * h_state
        return h_new, h_sum + h_new

    h0 = jnp.zeros((BP, H), jnp.float32)
    # Fully unrolled 30-step recurrence (the critical path of this kernel).
    h_last, h_sum = jax.lax.fori_loop(0, LOOKBACK, step, (h0, h0),
                                      unroll=True)

    # mlp( concat([mean(hid), hid[-1]]) ) as two dots (avoids a lane concat);
    # padded batch rows are dropped before the head.
    wm = wm_ref[...]                                                      # (2H, LA)
    out = (jnp.dot(h_sum[:B] * (1.0 / LOOKBACK), wm[0:H, :],
                   preferred_element_type=jnp.float32)
           + jnp.dot(h_last[:B], wm[H:, :],
                     preferred_element_type=jnp.float32)
           + bm_ref[...])                                                 # (B, LA)
    out_ref[...] = (out + h_ahead).astype(out_ref.dtype)


# ---------------------------------------------------------------------------
# JAX wrapper (glue: embedding gather, transposes, padding, bias folding)
# ---------------------------------------------------------------------------
def run_model(X, w, h, params):
    B = X.shape[0]
    L, LA, H = LOOKBACK, LOOKAHEAD, HIDDEN
    BP = ((B + 7) // 8) * 8                  # pad batch to the 8-sublane tile

    week_emb = params["week_em"][w]                        # (B, L, 2) gather
    xt = jnp.transpose(X.astype(jnp.float32))              # (L, B)
    wemb_t = jnp.transpose(week_emb, (1, 0, 2))            # (L, B, 2)
    feats = jnp.concatenate([xt[..., None], wemb_t], -1)   # (L, B, 3)
    feats = jnp.pad(feats, ((0, 0), (0, BP - B), (0, 0)))  # (L, Bp, 3)
    feats_flat = feats.reshape(L * BP, 3)

    hf = h.astype(jnp.float32)
    hback_t = jnp.transpose(hf[:, :L], (1, 0, 2))          # (L, B, H_DIM)
    hback_t = jnp.pad(hback_t, ((0, 0), (0, BP - B), (0, 0)))
    hback_flat = hback_t.reshape(L * BP, H_DIM)
    h_ahead_b = hf[:, L:]                                  # (B, LA, H_DIM)

    hw = params["hol_w"].reshape(1, 1, H_DIM)
    hb = params["hol_b"].reshape(1, 1)
    wih_t = params["w_ih"].T                               # (3, 3H)
    # Fold b_ih + (r/z slices of b_hh) into the gi bias; keep the n-gate
    # hidden bias separate (it must stay inside r*( ) to match PyTorch GRU).
    bhh = params["b_hh"]
    bih = (params["b_ih"]
           + jnp.concatenate([bhh[:2 * H], jnp.zeros((H,), jnp.float32)])
           ).reshape(1, 3 * H)                             # (1, 3H)
    bhh_n = bhh[2 * H:].reshape(1, H)                      # (1, H)
    whh_t = params["w_hh"].T                               # (H, 3H)
    wm_t = params["w_mlp"].T                               # (2H, LA)
    bm = params["b_mlp"].reshape(1, -1)                    # (1, LA)

    vmem = pltpu.MemorySpace.VMEM
    smem = pltpu.MemorySpace.SMEM
    in_specs = [
        pl.BlockSpec(memory_space=vmem),   # feats_flat
        pl.BlockSpec(memory_space=vmem),   # hback_flat
        pl.BlockSpec(memory_space=vmem),   # h_ahead
        pl.BlockSpec(memory_space=vmem),   # hol_w
        pl.BlockSpec(memory_space=smem),   # hol_b (true scalar -> SMEM)
        pl.BlockSpec(memory_space=vmem),   # w_ih^T
        pl.BlockSpec(memory_space=vmem),   # folded gi bias
        pl.BlockSpec(memory_space=vmem),   # b_hh n-gate slice
        pl.BlockSpec(memory_space=vmem),   # w_hh^T
        pl.BlockSpec(memory_space=vmem),   # w_mlp^T
        pl.BlockSpec(memory_space=vmem),   # b_mlp
    ]
    out = pl.pallas_call(
        model_kernel,
        out_shape=jax.ShapeDtypeStruct((B, LA), jnp.float32),
        in_specs=in_specs,
        out_specs=pl.BlockSpec(memory_space=vmem),
        scratch_shapes=[pltpu.VMEM((L * BP, 3 * HIDDEN), jnp.float32)],
    )(feats_flat, hback_flat, h_ahead_b, hw, hb, wih_t, bih, bhh_n, whh_t,
      wm_t, bm)
    return out


# ---------------------------------------------------------------------------
# Pure-JAX reference (mirrors the PyTorch forward, eval mode)
# ---------------------------------------------------------------------------
def reference(X, w, h, params):
    L, H = LOOKBACK, HIDDEN
    we = params["week_em"][w]                                         # (B,L,2)
    hp = h.astype(jnp.float32) @ params["hol_w"].reshape(H_DIM, 1) \
        + params["hol_b"]                                             # (B,T,1)
    h_back, h_ahead = hp[:, :L], hp[:, L:, 0]
    Xc = X.astype(jnp.float32)[..., None] - h_back
    Xc = jnp.concatenate([Xc, we], axis=-1)                           # (B,L,3)
    Xt = jnp.transpose(Xc, (1, 0, 2))                                 # (L,B,3)
    Wih, bih = params["w_ih"], params["b_ih"]
    Whh, bhh = params["w_hh"], params["b_hh"]

    def step(hstate, xt):
        gi = xt @ Wih.T + bih
        gh = hstate @ Whh.T + bhh
        r = jax.nn.sigmoid(gi[:, :H] + gh[:, :H])
        z = jax.nn.sigmoid(gi[:, H:2 * H] + gh[:, H:2 * H])
        n = jnp.tanh(gi[:, 2 * H:] + r * gh[:, 2 * H:])
        hnew = (1.0 - z) * n + z * hstate
        return hnew, hnew

    h0 = jnp.zeros((X.shape[0], H), jnp.float32)
    h_last, hs = jax.lax.scan(step, h0, Xt)
    feat = jnp.concatenate([hs.mean(axis=0), h_last], axis=-1)
    out = feat @ params["w_mlp"].T + params["b_mlp"]
    return out + h_ahead


def init_params(key):
    ks = jax.random.split(key, 8)
    return {
        "week_em": jax.random.normal(ks[0], (7, 2), jnp.float32),
        "hol_w":  jax.random.normal(ks[1], (1, H_DIM), jnp.float32) * 0.2,
        "hol_b":  jnp.full((1,), 0.05, jnp.float32),
        "w_ih":   jax.random.normal(ks[2], (3 * HIDDEN, 3), jnp.float32) * 0.25,
        "b_ih":   jax.random.normal(ks[3], (3 * HIDDEN,), jnp.float32) * 0.1,
        "w_hh":   jax.random.normal(ks[4], (3 * HIDDEN, HIDDEN), jnp.float32) * 0.25,
        "b_hh":   jax.random.normal(ks[5], (3 * HIDDEN,), jnp.float32) * 0.1,
        "w_mlp":  jax.random.normal(ks[6], (LOOKAHEAD, 2 * HIDDEN), jnp.float32) * 0.2,
        "b_mlp":  jax.random.normal(ks[7], (LOOKAHEAD,), jnp.float32) * 0.1,
    }


if __name__ == "__main__":
    key = jax.random.PRNGKey(0)
    kX, kw, kh, kp = jax.random.split(key, 4)
    B = 4
    T = LOOKBACK + LOOKAHEAD

    X = jax.random.normal(kX, (B, LOOKBACK), jnp.float32)
    w = jax.random.randint(kw, (B, LOOKBACK), 0, 7, jnp.int32)
    h = jax.random.normal(kh, (B, T, H_DIM), jnp.float32)
    params = init_params(kp)

    out = jax.jit(run_model)(X, w, h, params)
    out = jax.block_until_ready(out)

    ref = reference(X, w, h, params)
    assert out.shape == (B, LOOKAHEAD)
    np.testing.assert_allclose(np.asarray(out), np.asarray(ref),
                               rtol=1e-4, atol=1e-4)
    print("KERNEL_OK")
</pallas_src>

<mosaic_0001>
module attributes {stable_mosaic.version = 11 : i64} {
  func.func @model_kernel(%arg0: memref<240x3xf32, #tpu.memory_space<vmem>>, %arg1: memref<240x18xf32, #tpu.memory_space<vmem>>, %arg2: memref<4x5x18xf32, #tpu.memory_space<vmem>>, %arg3: memref<1x1x18xf32, #tpu.memory_space<vmem>>, %arg4: memref<1x1xf32, #tpu.memory_space<smem>>, %arg5: memref<3x48xf32, #tpu.memory_space<vmem>>, %arg6: memref<1x48xf32, #tpu.memory_space<vmem>>, %arg7: memref<1x16xf32, #tpu.memory_space<vmem>>, %arg8: memref<16x48xf32, #tpu.memory_space<vmem>>, %arg9: memref<32x5xf32, #tpu.memory_space<vmem>>, %arg10: memref<1x5xf32, #tpu.memory_space<vmem>>, %arg11: memref<4x5xf32, #tpu.memory_space<vmem>>, %arg12: memref<240x48xf32, #tpu.memory_space<vmem>>) attributes {dimension_semantics = [], scalar_prefetch = 0 : i64, scratch_operands = 1 : i64, tpu.core_type = #tpu.core_type<tc>} {
    %c0 = arith.constant 0 : index
    %c0_0 = arith.constant 0 : index
    %0 = memref.load %arg4[%c0, %c0_0] : memref<1x1xf32, #tpu.memory_space<smem>>
    %c0_1 = arith.constant 0 : index
    %c0_2 = arith.constant 0 : index
    %c0_3 = arith.constant 0 : index
    %1 = vector.load %arg3[%c0_1, %c0_2, %c0_3] : memref<1x1x18xf32, #tpu.memory_space<vmem>>, vector<1x1x18xf32>
    %2 = vector.shape_cast %1 : vector<1x1x18xf32> to vector<1x18xf32>
    %c0_4 = arith.constant 0 : index
    %c0_5 = arith.constant 0 : index
    %3 = vector.load %arg1[%c0_4, %c0_5] : memref<240x18xf32, #tpu.memory_space<vmem>>, vector<240x18xf32>
    %4 = vector.broadcast %2 : vector<1x18xf32> to vector<240x18xf32>
    %5 = arith.mulf %3, %4 : vector<240x18xf32>
    %cst = arith.constant dense<0.000000e+00> : vector<240xf32>
    %6 = vector.multi_reduction <add>, %5, %cst [1] : vector<240x18xf32> to vector<240xf32>
    %7 = vector.shape_cast %6 : vector<240xf32> to vector<240x1xf32>
    %8 = vector.broadcast %0 : f32 to vector<240x1xf32>
    %9 = arith.addf %7, %8 : vector<240x1xf32>
    %c0_6 = arith.constant 0 : index
    %c0_7 = arith.constant 0 : index
    %c0_8 = arith.constant 0 : index
    %10 = vector.load %arg2[%c0_6, %c0_7, %c0_8] : memref<4x5x18xf32, #tpu.memory_space<vmem>>, vector<4x5x18xf32>
    %11 = vector.broadcast %1 : vector<1x1x18xf32> to vector<4x5x18xf32>
    %12 = arith.mulf %10, %11 : vector<4x5x18xf32>
    %cst_9 = arith.constant dense<0.000000e+00> : vector<4x5xf32>
    %13 = vector.multi_reduction <add>, %12, %cst_9 [2] : vector<4x5x18xf32> to vector<4x5xf32>
    %14 = vector.broadcast %0 : f32 to vector<4x5xf32>
    %15 = arith.addf %13, %14 : vector<4x5xf32>
    %c0_10 = arith.constant 0 : index
    %c0_11 = arith.constant 0 : index
    %16 = vector.load %arg5[%c0_10, %c0_11] : memref<3x48xf32, #tpu.memory_space<vmem>>, vector<3x48xf32>
    %c0_12 = arith.constant 0 : index
    %c0_13 = arith.constant 0 : index
    %17 = vector.load %arg0[%c0_12, %c0_13] : memref<240x3xf32, #tpu.memory_space<vmem>>, vector<240x3xf32>
    %cst_14 = arith.constant dense<0.000000e+00> : vector<240x48xf32>
    %18 = tpu.matmul %17, %16, %cst_14 {dimension_numbers = #tpu.dot_dimension_numbers<[1], [0], [0], [1], [0, 0, 1, 1], [], []>} : vector<240x3xf32>, vector<3x48xf32>, vector<240x48xf32> -> vector<240x48xf32>
    %19 = vector.extract_strided_slice %16 {offsets = [0, 0], sizes = [1, 48], strides = [1, 1]} : vector<3x48xf32> to vector<1x48xf32>
    %20 = vector.broadcast %9 : vector<240x1xf32> to vector<240x48xf32>
    %21 = vector.broadcast %19 : vector<1x48xf32> to vector<240x48xf32>
    %22 = arith.mulf %20, %21 : vector<240x48xf32>
    %23 = arith.subf %18, %22 : vector<240x48xf32>
    %c0_15 = arith.constant 0 : index
    %c0_16 = arith.constant 0 : index
    %24 = vector.load %arg6[%c0_15, %c0_16] : memref<1x48xf32, #tpu.memory_space<vmem>>, vector<1x48xf32>
    %25 = vector.broadcast %24 : vector<1x48xf32> to vector<240x48xf32>
    %26 = arith.addf %23, %25 : vector<240x48xf32>
    %c0_17 = arith.constant 0 : index
    %c0_18 = arith.constant 0 : index
    %27 = vector.load %arg12[%c0_17, %c0_18] : memref<240x48xf32, #tpu.memory_space<vmem>>, vector<240x48xf32>
    tpu.vector_store %arg12[%c0_17, %c0_18], %26 {strides = array<i32>} : memref<240x48xf32, #tpu.memory_space<vmem>>, vector<240x48xf32>,
    %c0_19 = arith.constant 0 : index
    %c0_20 = arith.constant 0 : index
    %28 = vector.load %arg8[%c0_19, %c0_20] : memref<16x48xf32, #tpu.memory_space<vmem>>, vector<16x48xf32>
    %c0_21 = arith.constant 0 : index
    %c0_22 = arith.constant 0 : index
    %29 = vector.load %arg7[%c0_21, %c0_22] : memref<1x16xf32, #tpu.memory_space<vmem>>, vector<1x16xf32>
    %cst_23 = arith.constant 0.000000e+00 : f32
    %30 = vector.broadcast %cst_23 : f32 to vector<8x16xf32>
    %c0_i32 = arith.constant 0 : i32
    %c8_i32 = arith.constant 8 : i32
    %31 = arith.muli %c0_i32, %c8_i32 : i32
    %32 = tpu.assume_multiple %31, 8 : i32
    %33 = arith.index_cast %32 : i32 to index
    %c0_24 = arith.constant 0 : index
    %34 = vector.load %arg12[%33, %c0_24] : memref<240x48xf32, #tpu.memory_space<vmem>>, vector<8x48xf32>
    %cst_25 = arith.constant dense<0.000000e+00> : vector<8x48xf32>
    %35 = tpu.matmul %30, %28, %cst_25 {dimension_numbers = #tpu.dot_dimension_numbers<[1], [0], [0], [1], [0, 0, 1, 1], [], []>} : vector<8x16xf32>, vector<16x48xf32>, vector<8x48xf32> -> vector<8x48xf32>
    %36 = vector.extract_strided_slice %34 {offsets = [0, 0], sizes = [8, 16], strides = [1, 1]} : vector<8x48xf32> to vector<8x16xf32>
    %37 = vector.extract_strided_slice %35 {offsets = [0, 0], sizes = [8, 16], strides = [1, 1]} : vector<8x48xf32> to vector<8x16xf32>
    %38 = arith.addf %36, %37 : vector<8x16xf32>
    %39 = arith.negf %38 : vector<8x16xf32>
    %40 = math.exp %39 : vector<8x16xf32>
    %cst_26 = arith.constant 1.000000e+00 : f32
    %41 = vector.broadcast %cst_26 : f32 to vector<8x16xf32>
    %42 = arith.addf %41, %40 : vector<8x16xf32>
    %43 = arith.divf %41, %42 : vector<8x16xf32>
    %44 = vector.extract_strided_slice %34 {offsets = [0, 16], sizes = [8, 16], strides = [1, 1]} : vector<8x48xf32> to vector<8x16xf32>
    %45 = vector.extract_strided_slice %35 {offsets = [0, 16], sizes = [8, 16], strides = [1, 1]} : vector<8x48xf32> to vector<8x16xf32>
    %46 = arith.addf %44, %45 : vector<8x16xf32>
    %47 = arith.negf %46 : vector<8x16xf32>
    %48 = math.exp %47 : vector<8x16xf32>
    %cst_27 = arith.constant 1.000000e+00 : f32
    %49 = vector.broadcast %cst_27 : f32 to vector<8x16xf32>
    %50 = arith.addf %49, %48 : vector<8x16xf32>
    %51 = arith.divf %49, %50 : vector<8x16xf32>
    %52 = vector.extract_strided_slice %34 {offsets = [0, 32], sizes = [8, 16], strides = [1, 1]} : vector<8x48xf32> to vector<8x16xf32>
    %53 = vector.extract_strided_slice %35 {offsets = [0, 32], sizes = [8, 16], strides = [1, 1]} : vector<8x48xf32> to vector<8x16xf32>
    %54 = vector.broadcast %29 : vector<1x16xf32> to vector<8x16xf32>
    %55 = arith.addf %53, %54 : vector<8x16xf32>
    %56 = arith.mulf %43, %55 : vector<8x16xf32>
    %57 = arith.addf %52, %56 : vector<8x16xf32>
    %58 = math.tanh %57 : vector<8x16xf32>
    %cst_28 = arith.constant 1.000000e+00 : f32
    %59 = vector.broadcast %cst_28 : f32 to vector<8x16xf32>
    %60 = arith.subf %59, %51 : vector<8x16xf32>
    %61 = arith.mulf %60, %58 : vector<8x16xf32>
    %62 = arith.mulf %51, %30 : vector<8x16xf32>
    %63 = arith.addf %61, %62 : vector<8x16xf32>
    %64 = arith.addf %30, %63 : vector<8x16xf32>
    %c1_i32 = arith.constant 1 : i32
    %c8_i32_29 = arith.constant 8 : i32
    %65 = arith.muli %c1_i32, %c8_i32_29 : i32
    %66 = tpu.assume_multiple %65, 8 : i32
    %67 = arith.index_cast %66 : i32 to index
    %c0_30 = arith.constant 0 : index
    %68 = vector.load %arg12[%67, %c0_30] : memref<240x48xf32, #tpu.memory_space<vmem>>, vector<8x48xf32>
    %cst_31 = arith.constant dense<0.000000e+00> : vector<8x48xf32>
    %69 = tpu.matmul %63, %28, %cst_31 {dimension_numbers = #tpu.dot_dimension_numbers<[1], [0], [0], [1], [0, 0, 1, 1], [], []>} : vector<8x16xf32>, vector<16x48xf32>, vector<8x48xf32> -> vector<8x48xf32>
    %70 = vector.extract_strided_slice %68 {offsets = [0, 0], sizes = [8, 16], strides = [1, 1]} : vector<8x48xf32> to vector<8x16xf32>
    %71 = vector.extract_strided_slice %69 {offsets = [0, 0], sizes = [8, 16], strides = [1, 1]} : vector<8x48xf32> to vector<8x16xf32>
    %72 = arith.addf %70, %71 : vector<8x16xf32>
    %73 = arith.negf %72 : vector<8x16xf32>
    %74 = math.exp %73 : vector<8x16xf32>
    %cst_32 = arith.constant 1.000000e+00 : f32
    %75 = vector.broadcast %cst_32 : f32 to vector<8x16xf32>
    %76 = arith.addf %75, %74 : vector<8x16xf32>
    %77 = arith.divf %75, %76 : vector<8x16xf32>
    %78 = vector.extract_strided_slice %68 {offsets = [0, 16], sizes = [8, 16], strides = [1, 1]} : vector<8x48xf32> to vector<8x16xf32>
    %79 = vector.extract_strided_slice %69 {offsets = [0, 16], sizes = [8, 16], strides = [1, 1]} : vector<8x48xf32> to vector<8x16xf32>
    %80 = arith.addf %78, %79 : vector<8x16xf32>
    %81 = arith.negf %80 : vector<8x16xf32>
    %82 = math.exp %81 : vector<8x16xf32>
    %cst_33 = arith.constant 1.000000e+00 : f32
    %83 = vector.broadcast %cst_33 : f32 to vector<8x16xf32>
    %84 = arith.addf %83, %82 : vector<8x16xf32>
    %85 = arith.divf %83, %84 : vector<8x16xf32>
    %86 = vector.extract_strided_slice %68 {offsets = [0, 32], sizes = [8, 16], strides = [1, 1]} : vector<8x48xf32> to vector<8x16xf32>
    %87 = vector.extract_strided_slice %69 {offsets = [0, 32], sizes = [8, 16], strides = [1, 1]} : vector<8x48xf32> to vector<8x16xf32>
    %88 = vector.broadcast %29 : vector<1x16xf32> to vector<8x16xf32>
    %89 = arith.addf %87, %88 : vector<8x16xf32>
    %90 = arith.mulf %77, %89 : vector<8x16xf32>
    %91 = arith.addf %86, %90 : vector<8x16xf32>
    %92 = math.tanh %91 : vector<8x16xf32>
    %cst_34 = arith.constant 1.000000e+00 : f32
    %93 = vector.broadcast %cst_34 : f32 to vector<8x16xf32>
    %94 = arith.subf %93, %85 : vector<8x16xf32>
    %95 = arith.mulf %94, %92 : vector<8x16xf32>
    %96 = arith.mulf %85, %63 : vector<8x16xf32>
    %97 = arith.addf %95, %96 : vector<8x16xf32>
    %98 = arith.addf %64, %97 : vector<8x16xf32>
    %c2_i32 = arith.constant 2 : i32
    %c8_i32_35 = arith.constant 8 : i32
    %99 = arith.muli %c2_i32, %c8_i32_35 : i32
    %100 = tpu.assume_multiple %99, 8 : i32
    %101 = arith.index_cast %100 : i32 to index
    %c0_36 = arith.constant 0 : index
    %102 = vector.load %arg12[%101, %c0_36] : memref<240x48xf32, #tpu.memory_space<vmem>>, vector<8x48xf32>
    %cst_37 = arith.constant dense<0.000000e+00> : vector<8x48xf32>
    %103 = tpu.matmul %97, %28, %cst_37 {dimension_numbers = #tpu.dot_dimension_numbers<[1], [0], [0], [1], [0, 0, 1, 1], [], []>} : vector<8x16xf32>, vector<16x48xf32>, vector<8x48xf32> -> vector<8x48xf32>
    %104 = vector.extract_strided_slice %102 {offsets = [0, 0], sizes = [8, 16], strides = [1, 1]} : vector<8x48xf32> to vector<8x16xf32>
    %105 = vector.extract_strided_slice %103 {offsets = [0, 0], sizes = [8, 16], strides = [1, 1]} : vector<8x48xf32> to vector<8x16xf32>
    %106 = arith.addf %104, %105 : vector<8x16xf32>
    %107 = arith.negf %106 : vector<8x16xf32>
    %108 = math.exp %107 : vector<8x16xf32>
    %cst_38 = arith.constant 1.000000e+00 : f32
    %109 = vector.broadcast %cst_38 : f32 to vector<8x16xf32>
    %110 = arith.addf %109, %108 : vector<8x16xf32>
    %111 = arith.divf %109, %110 : vector<8x16xf32>
    %112 = vector.extract_strided_slice %102 {offsets = [0, 16], sizes = [8, 16], strides = [1, 1]} : vector<8x48xf32> to vector<8x16xf32>
    %113 = vector.extract_strided_slice %103 {offsets = [0, 16], sizes = [8, 16], strides = [1, 1]} : vector<8x48xf32> to vector<8x16xf32>
    %114 = arith.addf %112, %113 : vector<8x16xf32>
    %115 = arith.negf %114 : vector<8x16xf32>
    %116 = math.exp %115 : vector<8x16xf32>
    %cst_39 = arith.constant 1.000000e+00 : f32
    %117 = vector.broadcast %cst_39 : f32 to vector<8x16xf32>
    %118 = arith.addf %117, %116 : vector<8x16xf32>
    %119 = arith.divf %117, %118 : vector<8x16xf32>
    %120 = vector.extract_strided_slice %102 {offsets = [0, 32], sizes = [8, 16], strides = [1, 1]} : vector<8x48xf32> to vector<8x16xf32>
    %121 = vector.extract_strided_slice %103 {offsets = [0, 32], sizes = [8, 16], strides = [1, 1]} : vector<8x48xf32> to vector<8x16xf32>
    %122 = vector.broadcast %29 : vector<1x16xf32> to vector<8x16xf32>
    %123 = arith.addf %121, %122 : vector<8x16xf32>
    %124 = arith.mulf %111, %123 : vector<8x16xf32>
    %125 = arith.addf %120, %124 : vector<8x16xf32>
    %126 = math.tanh %125 : vector<8x16xf32>
    %cst_40 = arith.constant 1.000000e+00 : f32
    %127 = vector.broadcast %cst_40 : f32 to vector<8x16xf32>
    %128 = arith.subf %127, %119 : vector<8x16xf32>
    %129 = arith.mulf %128, %126 : vector<8x16xf32>
    %130 = arith.mulf %119, %97 : vector<8x16xf32>
    %131 = arith.addf %129, %130 : vector<8x16xf32>
    %132 = arith.addf %98, %131 : vector<8x16xf32>
    %c3_i32 = arith.constant 3 : i32
    %c8_i32_41 = arith.constant 8 : i32
    %133 = arith.muli %c3_i32, %c8_i32_41 : i32
    %134 = tpu.assume_multiple %133, 8 : i32
    %135 = arith.index_cast %134 : i32 to index
    %c0_42 = arith.constant 0 : index
    %136 = vector.load %arg12[%135, %c0_42] : memref<240x48xf32, #tpu.memory_space<vmem>>, vector<8x48xf32>
    %cst_43 = arith.constant dense<0.000000e+00> : vector<8x48xf32>
    %137 = tpu.matmul %131, %28, %cst_43 {dimension_numbers = #tpu.dot_dimension_numbers<[1], [0], [0], [1], [0, 0, 1, 1], [], []>} : vector<8x16xf32>, vector<16x48xf32>, vector<8x48xf32> -> vector<8x48xf32>
    %138 = vector.extract_strided_slice %136 {offsets = [0, 0], sizes = [8, 16], strides = [1, 1]} : vector<8x48xf32> to vector<8x16xf32>
    %139 = vector.extract_strided_slice %137 {offsets = [0, 0], sizes = [8, 16], strides = [1, 1]} : vector<8x48xf32> to vector<8x16xf32>
    %140 = arith.addf %138, %139 : vector<8x16xf32>
    %141 = arith.negf %140 : vector<8x16xf32>
    %142 = math.exp %141 : vector<8x16xf32>
    %cst_44 = arith.constant 1.000000e+00 : f32
    %143 = vector.broadcast %cst_44 : f32 to vector<8x16xf32>
    %144 = arith.addf %143, %142 : vector<8x16xf32>
    %145 = arith.divf %143, %144 : vector<8x16xf32>
    %146 = vector.extract_strided_slice %136 {offsets = [0, 16], sizes = [8, 16], strides = [1, 1]} : vector<8x48xf32> to vector<8x16xf32>
    %147 = vector.extract_strided_slice %137 {offsets = [0, 16], sizes = [8, 16], strides = [1, 1]} : vector<8x48xf32> to vector<8x16xf32>
    %148 = arith.addf %146, %147 : vector<8x16xf32>
    %149 = arith.negf %148 : vector<8x16xf32>
    %150 = math.exp %149 : vector<8x16xf32>
    %cst_45 = arith.constant 1.000000e+00 : f32
    %151 = vector.broadcast %cst_45 : f32 to vector<8x16xf32>
    %152 = arith.addf %151, %150 : vector<8x16xf32>
    %153 = arith.divf %151, %152 : vector<8x16xf32>
    %154 = vector.extract_strided_slice %136 {offsets = [0, 32], sizes = [8, 16], strides = [1, 1]} : vector<8x48xf32> to vector<8x16xf32>
    %155 = vector.extract_strided_slice %137 {offsets = [0, 32], sizes = [8, 16], strides = [1, 1]} : vector<8x48xf32> to vector<8x16xf32>
    %156 = vector.broadcast %29 : vector<1x16xf32> to vector<8x16xf32>
    %157 = arith.addf %155, %156 : vector<8x16xf32>
    %158 = arith.mulf %145, %157 : vector<8x16xf32>
    %159 = arith.addf %154, %158 : vector<8x16xf32>
    %160 = math.tanh %159 : vector<8x16xf32>
    %cst_46 = arith.constant 1.000000e+00 : f32
    %161 = vector.broadcast %cst_46 : f32 to vector<8x16xf32>
    %162 = arith.subf %161, %153 : vector<8x16xf32>
    %163 = arith.mulf %162, %160 : vector<8x16xf32>
    %164 = arith.mulf %153, %131 : vector<8x16xf32>
    %165 = arith.addf %163, %164 : vector<8x16xf32>
    %166 = arith.addf %132, %165 : vector<8x16xf32>
    %c4_i32 = arith.constant 4 : i32
    %c8_i32_47 = arith.constant 8 : i32
    %167 = arith.muli %c4_i32, %c8_i32_47 : i32
    %168 = tpu.assume_multiple %167, 8 : i32
    %169 = arith.index_cast %168 : i32 to index
    %c0_48 = arith.constant 0 : index
    %170 = vector.load %arg12[%169, %c0_48] : memref<240x48xf32, #tpu.memory_space<vmem>>, vector<8x48xf32>
    %cst_49 = arith.constant dense<0.000000e+00> : vector<8x48xf32>
    %171 = tpu.matmul %165, %28, %cst_49 {dimension_numbers = #tpu.dot_dimension_numbers<[1], [0], [0], [1], [0, 0, 1, 1], [], []>} : vector<8x16xf32>, vector<16x48xf32>, vector<8x48xf32> -> vector<8x48xf32>
    %172 = vector.extract_strided_slice %170 {offsets = [0, 0], sizes = [8, 16], strides = [1, 1]} : vector<8x48xf32> to vector<8x16xf32>
    %173 = vector.extract_strided_slice %171 {offsets = [0, 0], sizes = [8, 16], strides = [1, 1]} : vector<8x48xf32> to vector<8x16xf32>
    %174 = arith.addf %172, %173 : vector<8x16xf32>
    %175 = arith.negf %174 : vector<8x16xf32>
    %176 = math.exp %175 : vector<8x16xf32>
    %cst_50 = arith.constant 1.000000e+00 : f32
    %177 = vector.broadcast %cst_50 : f32 to vector<8x16xf32>
    %178 = arith.addf %177, %176 : vector<8x16xf32>
    %179 = arith.divf %177, %178 : vector<8x16xf32>
    %180 = vector.extract_strided_slice %170 {offsets = [0, 16], sizes = [8, 16], strides = [1, 1]} : vector<8x48xf32> to vector<8x16xf32>
    %181 = vector.extract_strided_slice %171 {offsets = [0, 16], sizes = [8, 16], strides = [1, 1]} : vector<8x48xf32> to vector<8x16xf32>
    %182 = arith.addf %180, %181 : vector<8x16xf32>
    %183 = arith.negf %182 : vector<8x16xf32>
    %184 = math.exp %183 : vector<8x16xf32>
    %cst_51 = arith.constant 1.000000e+00 : f32
    %185 = vector.broadcast %cst_51 : f32 to vector<8x16xf32>
    %186 = arith.addf %185, %184 : vector<8x16xf32>
    %187 = arith.divf %185, %186 : vector<8x16xf32>
    %188 = vector.extract_strided_slice %170 {offsets = [0, 32], sizes = [8, 16], strides = [1, 1]} : vector<8x48xf32> to vector<8x16xf32>
    %189 = vector.extract_strided_slice %171 {offsets = [0, 32], sizes = [8, 16], strides = [1, 1]} : vector<8x48xf32> to vector<8x16xf32>
    %190 = vector.broadcast %29 : vector<1x16xf32> to vector<8x16xf32>
    %191 = arith.addf %189, %190 : vector<8x16xf32>
    %192 = arith.mulf %179, %191 : vector<8x16xf32>
    %193 = arith.addf %188, %192 : vector<8x16xf32>
    %194 = math.tanh %193 : vector<8x16xf32>
    %cst_52 = arith.constant 1.000000e+00 : f32
    %195 = vector.broadcast %cst_52 : f32 to vector<8x16xf32>
    %196 = arith.subf %195, %187 : vector<8x16xf32>
    %197 = arith.mulf %196, %194 : vector<8x16xf32>
    %198 = arith.mulf %187, %165 : vector<8x16xf32>
    %199 = arith.addf %197, %198 : vector<8x16xf32>
    %200 = arith.addf %166, %199 : vector<8x16xf32>
    %c5_i32 = arith.constant 5 : i32
    %c8_i32_53 = arith.constant 8 : i32
    %201 = arith.muli %c5_i32, %c8_i32_53 : i32
    %202 = tpu.assume_multiple %201, 8 : i32
    %203 = arith.index_cast %202 : i32 to index
    %c0_54 = arith.constant 0 : index
    %204 = vector.load %arg12[%203, %c0_54] : memref<240x48xf32, #tpu.memory_space<vmem>>, vector<8x48xf32>
    %cst_55 = arith.constant dense<0.000000e+00> : vector<8x48xf32>
    %205 = tpu.matmul %199, %28, %cst_55 {dimension_numbers = #tpu.dot_dimension_numbers<[1], [0], [0], [1], [0, 0, 1, 1], [], []>} : vector<8x16xf32>, vector<16x48xf32>, vector<8x48xf32> -> vector<8x48xf32>
    %206 = vector.extract_strided_slice %204 {offsets = [0, 0], sizes = [8, 16], strides = [1, 1]} : vector<8x48xf32> to vector<8x16xf32>
    %207 = vector.extract_strided_slice %205 {offsets = [0, 0], sizes = [8, 16], strides = [1, 1]} : vector<8x48xf32> to vector<8x16xf32>
    %208 = arith.addf %206, %207 : vector<8x16xf32>
    %209 = arith.negf %208 : vector<8x16xf32>
    %210 = math.exp %209 : vector<8x16xf32>
    %cst_56 = arith.constant 1.000000e+00 : f32
    %211 = vector.broadcast %cst_56 : f32 to vector<8x16xf32>
    %212 = arith.addf %211, %210 : vector<8x16xf32>
    %213 = arith.divf %211, %212 : vector<8x16xf32>
    %214 = vector.extract_strided_slice %204 {offsets = [0, 16], sizes = [8, 16], strides = [1, 1]} : vector<8x48xf32> to vector<8x16xf32>
    %215 = vector.extract_strided_slice %205 {offsets = [0, 16], sizes = [8, 16], strides = [1, 1]} : vector<8x48xf32> to vector<8x16xf32>
    %216 = arith.addf %214, %215 : vector<8x16xf32>
    %217 = arith.negf %216 : vector<8x16xf32>
    %218 = math.exp %217 : vector<8x16xf32>
    %cst_57 = arith.constant 1.000000e+00 : f32
    %219 = vector.broadcast %cst_57 : f32 to vector<8x16xf32>
    %220 = arith.addf %219, %218 : vector<8x16xf32>
    %221 = arith.divf %219, %220 : vector<8x16xf32>
    %222 = vector.extract_strided_slice %204 {offsets = [0, 32], sizes = [8, 16], strides = [1, 1]} : vector<8x48xf32> to vector<8x16xf32>
    %223 = vector.extract_strided_slice %205 {offsets = [0, 32], sizes = [8, 16], strides = [1, 1]} : vector<8x48xf32> to vector<8x16xf32>
    %224 = vector.broadcast %29 : vector<1x16xf32> to vector<8x16xf32>
    %225 = arith.addf %223, %224 : vector<8x16xf32>
    %226 = arith.mulf %213, %225 : vector<8x16xf32>
    %227 = arith.addf %222, %226 : vector<8x16xf32>
    %228 = math.tanh %227 : vector<8x16xf32>
    %cst_58 = arith.constant 1.000000e+00 : f32
    %229 = vector.broadcast %cst_58 : f32 to vector<8x16xf32>
    %230 = arith.subf %229, %221 : vector<8x16xf32>
    %231 = arith.mulf %230, %228 : vector<8x16xf32>
    %232 = arith.mulf %221, %199 : vector<8x16xf32>
    %233 = arith.addf %231, %232 : vector<8x16xf32>
    %234 = arith.addf %200, %233 : vector<8x16xf32>
    %c6_i32 = arith.constant 6 : i32
    %c8_i32_59 = arith.constant 8 : i32
    %235 = arith.muli %c6_i32, %c8_i32_59 : i32
    %236 = tpu.assume_multiple %235, 8 : i32
    %237 = arith.index_cast %236 : i32 to index
    %c0_60 = arith.constant 0 : index
    %238 = vector.load %arg12[%237, %c0_60] : memref<240x48xf32, #tpu.memory_space<vmem>>, vector<8x48xf32>
    %cst_61 = arith.constant dense<0.000000e+00> : vector<8x48xf32>
    %239 = tpu.matmul %233, %28, %cst_61 {dimension_numbers = #tpu.dot_dimension_numbers<[1], [0], [0], [1], [0, 0, 1, 1], [], []>} : vector<8x16xf32>, vector<16x48xf32>, vector<8x48xf32> -> vector<8x48xf32>
    %240 = vector.extract_strided_slice %238 {offsets = [0, 0], sizes = [8, 16], strides = [1, 1]} : vector<8x48xf32> to vector<8x16xf32>
    %241 = vector.extract_strided_slice %239 {offsets = [0, 0], sizes = [8, 16], strides = [1, 1]} : vector<8x48xf32> to vector<8x16xf32>
    %242 = arith.addf %240, %241 : vector<8x16xf32>
    %243 = arith.negf %242 : vector<8x16xf32>
    %244 = math.exp %243 : vector<8x16xf32>
    %cst_62 = arith.constant 1.000000e+00 : f32
    %245 = vector.broadcast %cst_62 : f32 to vector<8x16xf32>
    %246 = arith.addf %245, %244 : vector<8x16xf32>
    %247 = arith.divf %245, %246 : vector<8x16xf32>
    %248 = vector.extract_strided_slice %238 {offsets = [0, 16], sizes = [8, 16], strides = [1, 1]} : vector<8x48xf32> to vector<8x16xf32>
    %249 = vector.extract_strided_slice %239 {offsets = [0, 16], sizes = [8, 16], strides = [1, 1]} : vector<8x48xf32> to vector<8x16xf32>
    %250 = arith.addf %248, %249 : vector<8x16xf32>
    %251 = arith.negf %250 : vector<8x16xf32>
    %252 = math.exp %251 : vector<8x16xf32>
    %cst_63 = arith.constant 1.000000e+00 : f32
    %253 = vector.broadcast %cst_63 : f32 to vector<8x16xf32>
    %254 = arith.addf %253, %252 : vector<8x16xf32>
    %255 = arith.divf %253, %254 : vector<8x16xf32>
    %256 = vector.extract_strided_slice %238 {offsets = [0, 32], sizes = [8, 16], strides = [1, 1]} : vector<8x48xf32> to vector<8x16xf32>
    %257 = vector.extract_strided_slice %239 {offsets = [0, 32], sizes = [8, 16], strides = [1, 1]} : vector<8x48xf32> to vector<8x16xf32>
    %258 = vector.broadcast %29 : vector<1x16xf32> to vector<8x16xf32>
    %259 = arith.addf %257, %258 : vector<8x16xf32>
    %260 = arith.mulf %247, %259 : vector<8x16xf32>
    %261 = arith.addf %256, %260 : vector<8x16xf32>
    %262 = math.tanh %261 : vector<8x16xf32>
    %cst_64 = arith.constant 1.000000e+00 : f32
    %263 = vector.broadcast %cst_64 : f32 to vector<8x16xf32>
    %264 = arith.subf %263, %255 : vector<8x16xf32>
    %265 = arith.mulf %264, %262 : vector<8x16xf32>
    %266 = arith.mulf %255, %233 : vector<8x16xf32>
    %267 = arith.addf %265, %266 : vector<8x16xf32>
    %268 = arith.addf %234, %267 : vector<8x16xf32>
    %c7_i32 = arith.constant 7 : i32
    %c8_i32_65 = arith.constant 8 : i32
    %269 = arith.muli %c7_i32, %c8_i32_65 : i32
    %270 = tpu.assume_multiple %269, 8 : i32
    %271 = arith.index_cast %270 : i32 to index
    %c0_66 = arith.constant 0 : index
    %272 = vector.load %arg12[%271, %c0_66] : memref<240x48xf32, #tpu.memory_space<vmem>>, vector<8x48xf32>
    %cst_67 = arith.constant dense<0.000000e+00> : vector<8x48xf32>
    %273 = tpu.matmul %267, %28, %cst_67 {dimension_numbers = #tpu.dot_dimension_numbers<[1], [0], [0], [1], [0, 0, 1, 1], [], []>} : vector<8x16xf32>, vector<16x48xf32>, vector<8x48xf32> -> vector<8x48xf32>
    %274 = vector.extract_strided_slice %272 {offsets = [0, 0], sizes = [8, 16], strides = [1, 1]} : vector<8x48xf32> to vector<8x16xf32>
    %275 = vector.extract_strided_slice %273 {offsets = [0, 0], sizes = [8, 16], strides = [1, 1]} : vector<8x48xf32> to vector<8x16xf32>
    %276 = arith.addf %274, %275 : vector<8x16xf32>
    %277 = arith.negf %276 : vector<8x16xf32>
    %278 = math.exp %277 : vector<8x16xf32>
    %cst_68 = arith.constant 1.000000e+00 : f32
    %279 = vector.broadcast %cst_68 : f32 to vector<8x16xf32>
    %280 = arith.addf %279, %278 : vector<8x16xf32>
    %281 = arith.divf %279, %280 : vector<8x16xf32>
    %282 = vector.extract_strided_slice %272 {offsets = [0, 16], sizes = [8, 16], strides = [1, 1]} : vector<8x48xf32> to vector<8x16xf32>
    %283 = vector.extract_strided_slice %273 {offsets = [0, 16], sizes = [8, 16], strides = [1, 1]} : vector<8x48xf32> to vector<8x16xf32>
    %284 = arith.addf %282, %283 : vector<8x16xf32>
    %285 = arith.negf %284 : vector<8x16xf32>
    %286 = math.exp %285 : vector<8x16xf32>
    %cst_69 = arith.constant 1.000000e+00 : f32
    %287 = vector.broadcast %cst_69 : f32 to vector<8x16xf32>
    %288 = arith.addf %287, %286 : vector<8x16xf32>
    %289 = arith.divf %287, %288 : vector<8x16xf32>
    %290 = vector.extract_strided_slice %272 {offsets = [0, 32], sizes = [8, 16], strides = [1, 1]} : vector<8x48xf32> to vector<8x16xf32>
    %291 = vector.extract_strided_slice %273 {offsets = [0, 32], sizes = [8, 16], strides = [1, 1]} : vector<8x48xf32> to vector<8x16xf32>
    %292 = vector.broadcast %29 : vector<1x16xf32> to vector<8x16xf32>
    %293 = arith.addf %291, %292 : vector<8x16xf32>
    %294 = arith.mulf %281, %293 : vector<8x16xf32>
    %295 = arith.addf %290, %294 : vector<8x16xf32>
    %296 = math.tanh %295 : vector<8x16xf32>
    %cst_70 = arith.constant 1.000000e+00 : f32
    %297 = vector.broadcast %cst_70 : f32 to vector<8x16xf32>
    %298 = arith.subf %297, %289 : vector<8x16xf32>
    %299 = arith.mulf %298, %296 : vector<8x16xf32>
    %300 = arith.mulf %289, %267 : vector<8x16xf32>
    %301 = arith.addf %299, %300 : vector<8x16xf32>
    %302 = arith.addf %268, %301 : vector<8x16xf32>
    %c8_i32_71 = arith.constant 8 : i32
    %c8_i32_72 = arith.constant 8 : i32
    %303 = arith.muli %c8_i32_71, %c8_i32_72 : i32
    %304 = tpu.assume_multiple %303, 8 : i32
    %305 = arith.index_cast %304 : i32 to index
    %c0_73 = arith.constant 0 : index
    %306 = vector.load %arg12[%305, %c0_73] : memref<240x48xf32, #tpu.memory_space<vmem>>, vector<8x48xf32>
    %cst_74 = arith.constant dense<0.000000e+00> : vector<8x48xf32>
    %307 = tpu.matmul %301, %28, %cst_74 {dimension_numbers = #tpu.dot_dimension_numbers<[1], [0], [0], [1], [0, 0, 1, 1], [], []>} : vector<8x16xf32>, vector<16x48xf32>, vector<8x48xf32> -> vector<8x48xf32>
    %308 = vector.extract_strided_slice %306 {offsets = [0, 0], sizes = [8, 16], strides = [1, 1]} : vector<8x48xf32> to vector<8x16xf32>
    %309 = vector.extract_strided_slice %307 {offsets = [0, 0], sizes = [8, 16], strides = [1, 1]} : vector<8x48xf32> to vector<8x16xf32>
    %310 = arith.addf %308, %309 : vector<8x16xf32>
    %311 = arith.negf %310 : vector<8x16xf32>
    %312 = math.exp %311 : vector<8x16xf32>
    %cst_75 = arith.constant 1.000000e+00 : f32
    %313 = vector.broadcast %cst_75 : f32 to vector<8x16xf32>
    %314 = arith.addf %313, %312 : vector<8x16xf32>
    %315 = arith.divf %313, %314 : vector<8x16xf32>
    %316 = vector.extract_strided_slice %306 {offsets = [0, 16], sizes = [8, 16], strides = [1, 1]} : vector<8x48xf32> to vector<8x16xf32>
    %317 = vector.extract_strided_slice %307 {offsets = [0, 16], sizes = [8, 16], strides = [1, 1]} : vector<8x48xf32> to vector<8x16xf32>
    %318 = arith.addf %316, %317 : vector<8x16xf32>
    %319 = arith.negf %318 : vector<8x16xf32>
    %320 = math.exp %319 : vector<8x16xf32>
    %cst_76 = arith.constant 1.000000e+00 : f32
    %321 = vector.broadcast %cst_76 : f32 to vector<8x16xf32>
    %322 = arith.addf %321, %320 : vector<8x16xf32>
    %323 = arith.divf %321, %322 : vector<8x16xf32>
    %324 = vector.extract_strided_slice %306 {offsets = [0, 32], sizes = [8, 16], strides = [1, 1]} : vector<8x48xf32> to vector<8x16xf32>
    %325 = vector.extract_strided_slice %307 {offsets = [0, 32], sizes = [8, 16], strides = [1, 1]} : vector<8x48xf32> to vector<8x16xf32>
    %326 = vector.broadcast %29 : vector<1x16xf32> to vector<8x16xf32>
    %327 = arith.addf %325, %326 : vector<8x16xf32>
    %328 = arith.mulf %315, %327 : vector<8x16xf32>
    %329 = arith.addf %324, %328 : vector<8x16xf32>
    %330 = math.tanh %329 : vector<8x16xf32>
    %cst_77 = arith.constant 1.000000e+00 : f32
    %331 = vector.broadcast %cst_77 : f32 to vector<8x16xf32>
    %332 = arith.subf %331, %323 : vector<8x16xf32>
    %333 = arith.mulf %332, %330 : vector<8x16xf32>
    %334 = arith.mulf %323, %301 : vector<8x16xf32>
    %335 = arith.addf %333, %334 : vector<8x16xf32>
    %336 = arith.addf %302, %335 : vector<8x16xf32>
    %c9_i32 = arith.constant 9 : i32
    %c8_i32_78 = arith.constant 8 : i32
    %337 = arith.muli %c9_i32, %c8_i32_78 : i32
    %338 = tpu.assume_multiple %337, 8 : i32
    %339 = arith.index_cast %338 : i32 to index
    %c0_79 = arith.constant 0 : index
    %340 = vector.load %arg12[%339, %c0_79] : memref<240x48xf32, #tpu.memory_space<vmem>>, vector<8x48xf32>
    %cst_80 = arith.constant dense<0.000000e+00> : vector<8x48xf32>
    %341 = tpu.matmul %335, %28, %cst_80 {dimension_numbers = #tpu.dot_dimension_numbers<[1], [0], [0], [1], [0, 0, 1, 1], [], []>} : vector<8x16xf32>, vector<16x48xf32>, vector<8x48xf32> -> vector<8x48xf32>
    %342 = vector.extract_strided_slice %340 {offsets = [0, 0], sizes = [8, 16], strides = [1, 1]} : vector<8x48xf32> to vector<8x16xf32>
    %343 = vector.extract_strided_slice %341 {offsets = [0, 0], sizes = [8, 16], strides = [1, 1]} : vector<8x48xf32> to vector<8x16xf32>
    %344 = arith.addf %342, %343 : vector<8x16xf32>
    %345 = arith.negf %344 : vector<8x16xf32>
    %346 = math.exp %345 : vector<8x16xf32>
    %cst_81 = arith.constant 1.000000e+00 : f32
    %347 = vector.broadcast %cst_81 : f32 to vector<8x16xf32>
    %348 = arith.addf %347, %346 : vector<8x16xf32>
    %349 = arith.divf %347, %348 : vector<8x16xf32>
    %350 = vector.extract_strided_slice %340 {offsets = [0, 16], sizes = [8, 16], strides = [1, 1]} : vector<8x48xf32> to vector<8x16xf32>
    %351 = vector.extract_strided_slice %341 {offsets = [0, 16], sizes = [8, 16], strides = [1, 1]} : vector<8x48xf32> to vector<8x16xf32>
    %352 = arith.addf %350, %351 : vector<8x16xf32>
    %353 = arith.negf %352 : vector<8x16xf32>
    %354 = math.exp %353 : vector<8x16xf32>
    %cst_82 = arith.constant 1.000000e+00 : f32
    %355 = vector.broadcast %cst_82 : f32 to vector<8x16xf32>
    %356 = arith.addf %355, %354 : vector<8x16xf32>
    %357 = arith.divf %355, %356 : vector<8x16xf32>
    %358 = vector.extract_strided_slice %340 {offsets = [0, 32], sizes = [8, 16], strides = [1, 1]} : vector<8x48xf32> to vector<8x16xf32>
    %359 = vector.extract_strided_slice %341 {offsets = [0, 32], sizes = [8, 16], strides = [1, 1]} : vector<8x48xf32> to vector<8x16xf32>
    %360 = vector.broadcast %29 : vector<1x16xf32> to vector<8x16xf32>
    %361 = arith.addf %359, %360 : vector<8x16xf32>
    %362 = arith.mulf %349, %361 : vector<8x16xf32>
    %363 = arith.addf %358, %362 : vector<8x16xf32>
    %364 = math.tanh %363 : vector<8x16xf32>
    %cst_83 = arith.constant 1.000000e+00 : f32
    %365 = vector.broadcast %cst_83 : f32 to vector<8x16xf32>
    %366 = arith.subf %365, %357 : vector<8x16xf32>
    %367 = arith.mulf %366, %364 : vector<8x16xf32>
    %368 = arith.mulf %357, %335 : vector<8x16xf32>
    %369 = arith.addf %367, %368 : vector<8x16xf32>
    %370 = arith.addf %336, %369 : vector<8x16xf32>
    %c10_i32 = arith.constant 10 : i32
    %c8_i32_84 = arith.constant 8 : i32
    %371 = arith.muli %c10_i32, %c8_i32_84 : i32
    %372 = tpu.assume_multiple %371, 8 : i32
    %373 = arith.index_cast %372 : i32 to index
    %c0_85 = arith.constant 0 : index
    %374 = vector.load %arg12[%373, %c0_85] : memref<240x48xf32, #tpu.memory_space<vmem>>, vector<8x48xf32>
    %cst_86 = arith.constant dense<0.000000e+00> : vector<8x48xf32>
    %375 = tpu.matmul %369, %28, %cst_86 {dimension_numbers = #tpu.dot_dimension_numbers<[1], [0], [0], [1], [0, 0, 1, 1], [], []>} : vector<8x16xf32>, vector<16x48xf32>, vector<8x48xf32> -> vector<8x48xf32>
    %376 = vector.extract_strided_slice %374 {offsets = [0, 0], sizes = [8, 16], strides = [1, 1]} : vector<8x48xf32> to vector<8x16xf32>
    %377 = vector.extract_strided_slice %375 {offsets = [0, 0], sizes = [8, 16], strides = [1, 1]} : vector<8x48xf32> to vector<8x16xf32>
    %378 = arith.addf %376, %377 : vector<8x16xf32>
    %379 = arith.negf %378 : vector<8x16xf32>
    %380 = math.exp %379 : vector<8x16xf32>
    %cst_87 = arith.constant 1.000000e+00 : f32
    %381 = vector.broadcast %cst_87 : f32 to vector<8x16xf32>
    %382 = arith.addf %381, %380 : vector<8x16xf32>
    %383 = arith.divf %381, %382 : vector<8x16xf32>
    %384 = vector.extract_strided_slice %374 {offsets = [0, 16], sizes = [8, 16], strides = [1, 1]} : vector<8x48xf32> to vector<8x16xf32>
    %385 = vector.extract_strided_slice %375 {offsets = [0, 16], sizes = [8, 16], strides = [1, 1]} : vector<8x48xf32> to vector<8x16xf32>
    %386 = arith.addf %384, %385 : vector<8x16xf32>
    %387 = arith.negf %386 : vector<8x16xf32>
    %388 = math.exp %387 : vector<8x16xf32>
    %cst_88 = arith.constant 1.000000e+00 : f32
    %389 = vector.broadcast %cst_88 : f32 to vector<8x16xf32>
    %390 = arith.addf %389, %388 : vector<8x16xf32>
    %391 = arith.divf %389, %390 : vector<8x16xf32>
    %392 = vector.extract_strided_slice %374 {offsets = [0, 32], sizes = [8, 16], strides = [1, 1]} : vector<8x48xf32> to vector<8x16xf32>
    %393 = vector.extract_strided_slice %375 {offsets = [0, 32], sizes = [8, 16], strides = [1, 1]} : vector<8x48xf32> to vector<8x16xf32>
    %394 = vector.broadcast %29 : vector<1x16xf32> to vector<8x16xf32>
    %395 = arith.addf %393, %394 : vector<8x16xf32>
    %396 = arith.mulf %383, %395 : vector<8x16xf32>
    %397 = arith.addf %392, %396 : vector<8x16xf32>
    %398 = math.tanh %397 : vector<8x16xf32>
    %cst_89 = arith.constant 1.000000e+00 : f32
    %399 = vector.broadcast %cst_89 : f32 to vector<8x16xf32>
    %400 = arith.subf %399, %391 : vector<8x16xf32>
    %401 = arith.mulf %400, %398 : vector<8x16xf32>
    %402 = arith.mulf %391, %369 : vector<8x16xf32>
    %403 = arith.addf %401, %402 : vector<8x16xf32>
    %404 = arith.addf %370, %403 : vector<8x16xf32>
    %c11_i32 = arith.constant 11 : i32
    %c8_i32_90 = arith.constant 8 : i32
    %405 = arith.muli %c11_i32, %c8_i32_90 : i32
    %406 = tpu.assume_multiple %405, 8 : i32
    %407 = arith.index_cast %406 : i32 to index
    %c0_91 = arith.constant 0 : index
    %408 = vector.load %arg12[%407, %c0_91] : memref<240x48xf32, #tpu.memory_space<vmem>>, vector<8x48xf32>
    %cst_92 = arith.constant dense<0.000000e+00> : vector<8x48xf32>
    %409 = tpu.matmul %403, %28, %cst_92 {dimension_numbers = #tpu.dot_dimension_numbers<[1], [0], [0], [1], [0, 0, 1, 1], [], []>} : vector<8x16xf32>, vector<16x48xf32>, vector<8x48xf32> -> vector<8x48xf32>
    %410 = vector.extract_strided_slice %408 {offsets = [0, 0], sizes = [8, 16], strides = [1, 1]} : vector<8x48xf32> to vector<8x16xf32>
    %411 = vector.extract_strided_slice %409 {offsets = [0, 0], sizes = [8, 16], strides = [1, 1]} : vector<8x48xf32> to vector<8x16xf32>
    %412 = arith.addf %410, %411 : vector<8x16xf32>
    %413 = arith.negf %412 : vector<8x16xf32>
    %414 = math.exp %413 : vector<8x16xf32>
    %cst_93 = arith.constant 1.000000e+00 : f32
    %415 = vector.broadcast %cst_93 : f32 to vector<8x16xf32>
    %416 = arith.addf %415, %414 : vector<8x16xf32>
    %417 = arith.divf %415, %416 : vector<8x16xf32>
    %418 = vector.extract_strided_slice %408 {offsets = [0, 16], sizes = [8, 16], strides = [1, 1]} : vector<8x48xf32> to vector<8x16xf32>
    %419 = vector.extract_strided_slice %409 {offsets = [0, 16], sizes = [8, 16], strides = [1, 1]} : vector<8x48xf32> to vector<8x16xf32>
    %420 = arith.addf %418, %419 : vector<8x16xf32>
    %421 = arith.negf %420 : vector<8x16xf32>
    %422 = math.exp %421 : vector<8x16xf32>
    %cst_94 = arith.constant 1.000000e+00 : f32
    %423 = vector.broadcast %cst_94 : f32 to vector<8x16xf32>
    %424 = arith.addf %423, %422 : vector<8x16xf32>
    %425 = arith.divf %423, %424 : vector<8x16xf32>
    %426 = vector.extract_strided_slice %408 {offsets = [0, 32], sizes = [8, 16], strides = [1, 1]} : vector<8x48xf32> to vector<8x16xf32>
    %427 = vector.extract_strided_slice %409 {offsets = [0, 32], sizes = [8, 16], strides = [1, 1]} : vector<8x48xf32> to vector<8x16xf32>
    %428 = vector.broadcast %29 : vector<1x16xf32> to vector<8x16xf32>
    %429 = arith.addf %427, %428 : vector<8x16xf32>
    %430 = arith.mulf %417, %429 : vector<8x16xf32>
    %431 = arith.addf %426, %430 : vector<8x16xf32>
    %432 = math.tanh %431 : vector<8x16xf32>
    %cst_95 = arith.constant 1.000000e+00 : f32
    %433 = vector.broadcast %cst_95 : f32 to vector<8x16xf32>
    %434 = arith.subf %433, %425 : vector<8x16xf32>
    %435 = arith.mulf %434, %432 : vector<8x16xf32>
    %436 = arith.mulf %425, %403 : vector<8x16xf32>
    %437 = arith.addf %435, %436 : vector<8x16xf32>
    %438 = arith.addf %404, %437 : vector<8x16xf32>
    %c12_i32 = arith.constant 12 : i32
    %c8_i32_96 = arith.constant 8 : i32
    %439 = arith.muli %c12_i32, %c8_i32_96 : i32
    %440 = tpu.assume_multiple %439, 8 : i32
    %441 = arith.index_cast %440 : i32 to index
    %c0_97 = arith.constant 0 : index
    %442 = vector.load %arg12[%441, %c0_97] : memref<240x48xf32, #tpu.memory_space<vmem>>, vector<8x48xf32>
    %cst_98 = arith.constant dense<0.000000e+00> : vector<8x48xf32>
    %443 = tpu.matmul %437, %28, %cst_98 {dimension_numbers = #tpu.dot_dimension_numbers<[1], [0], [0], [1], [0, 0, 1, 1], [], []>} : vector<8x16xf32>, vector<16x48xf32>, vector<8x48xf32> -> vector<8x48xf32>
    %444 = vector.extract_strided_slice %442 {offsets = [0, 0], sizes = [8, 16], strides = [1, 1]} : vector<8x48xf32> to vector<8x16xf32>
    %445 = vector.extract_strided_slice %443 {offsets = [0, 0], sizes = [8, 16], strides = [1, 1]} : vector<8x48xf32> to vector<8x16xf32>
    %446 = arith.addf %444, %445 : vector<8x16xf32>
    %447 = arith.negf %446 : vector<8x16xf32>
    %448 = math.exp %447 : vector<8x16xf32>
    %cst_99 = arith.constant 1.000000e+00 : f32
    %449 = vector.broadcast %cst_99 : f32 to vector<8x16xf32>
    %450 = arith.addf %449, %448 : vector<8x16xf32>
    %451 = arith.divf %449, %450 : vector<8x16xf32>
    %452 = vector.extract_strided_slice %442 {offsets = [0, 16], sizes = [8, 16], strides = [1, 1]} : vector<8x48xf32> to vector<8x16xf32>
    %453 = vector.extract_strided_slice %443 {offsets = [0, 16], sizes = [8, 16], strides = [1, 1]} : vector<8x48xf32> to vector<8x16xf32>
    %454 = arith.addf %452, %453 : vector<8x16xf32>
    %455 = arith.negf %454 : vector<8x16xf32>
    %456 = math.exp %455 : vector<8x16xf32>
    %cst_100 = arith.constant 1.000000e+00 : f32
    %457 = vector.broadcast %cst_100 : f32 to vector<8x16xf32>
    %458 = arith.addf %457, %456 : vector<8x16xf32>
    %459 = arith.divf %457, %458 : vector<8x16xf32>
    %460 = vector.extract_strided_slice %442 {offsets = [0, 32], sizes = [8, 16], strides = [1, 1]} : vector<8x48xf32> to vector<8x16xf32>
    %461 = vector.extract_strided_slice %443 {offsets = [0, 32], sizes = [8, 16], strides = [1, 1]} : vector<8x48xf32> to vector<8x16xf32>
    %462 = vector.broadcast %29 : vector<1x16xf32> to vector<8x16xf32>
    %463 = arith.addf %461, %462 : vector<8x16xf32>
    %464 = arith.mulf %451, %463 : vector<8x16xf32>
    %465 = arith.addf %460, %464 : vector<8x16xf32>
    %466 = math.tanh %465 : vector<8x16xf32>
    %cst_101 = arith.constant 1.000000e+00 : f32
    %467 = vector.broadcast %cst_101 : f32 to vector<8x16xf32>
    %468 = arith.subf %467, %459 : vector<8x16xf32>
    %469 = arith.mulf %468, %466 : vector<8x16xf32>
    %470 = arith.mulf %459, %437 : vector<8x16xf32>
    %471 = arith.addf %469, %470 : vector<8x16xf32>
    %472 = arith.addf %438, %471 : vector<8x16xf32>
    %c13_i32 = arith.constant 13 : i32
    %c8_i32_102 = arith.constant 8 : i32
    %473 = arith.muli %c13_i32, %c8_i32_102 : i32
    %474 = tpu.assume_multiple %473, 8 : i32
    %475 = arith.index_cast %474 : i32 to index
    %c0_103 = arith.constant 0 : index
    %476 = vector.load %arg12[%475, %c0_103] : memref<240x48xf32, #tpu.memory_space<vmem>>, vector<8x48xf32>
    %cst_104 = arith.constant dense<0.000000e+00> : vector<8x48xf32>
    %477 = tpu.matmul %471, %28, %cst_104 {dimension_numbers = #tpu.dot_dimension_numbers<[1], [0], [0], [1], [0, 0, 1, 1], [], []>} : vector<8x16xf32>, vector<16x48xf32>, vector<8x48xf32> -> vector<8x48xf32>
    %478 = vector.extract_strided_slice %476 {offsets = [0, 0], sizes = [8, 16], strides = [1, 1]} : vector<8x48xf32> to vector<8x16xf32>
    %479 = vector.extract_strided_slice %477 {offsets = [0, 0], sizes = [8, 16], strides = [1, 1]} : vector<8x48xf32> to vector<8x16xf32>
    %480 = arith.addf %478, %479 : vector<8x16xf32>
    %481 = arith.negf %480 : vector<8x16xf32>
    %482 = math.exp %481 : vector<8x16xf32>
    %cst_105 = arith.constant 1.000000e+00 : f32
    %483 = vector.broadcast %cst_105 : f32 to vector<8x16xf32>
    %484 = arith.addf %483, %482 : vector<8x16xf32>
    %485 = arith.divf %483, %484 : vector<8x16xf32>
    %486 = vector.extract_strided_slice %476 {offsets = [0, 16], sizes = [8, 16], strides = [1, 1]} : vector<8x48xf32> to vector<8x16xf32>
    %487 = vector.extract_strided_slice %477 {offsets = [0, 16], sizes = [8, 16], strides = [1, 1]} : vector<8x48xf32> to vector<8x16xf32>
    %488 = arith.addf %486, %487 : vector<8x16xf32>
    %489 = arith.negf %488 : vector<8x16xf32>
    %490 = math.exp %489 : vector<8x16xf32>
    %cst_106 = arith.constant 1.000000e+00 : f32
    %491 = vector.broadcast %cst_106 : f32 to vector<8x16xf32>
    %492 = arith.addf %491, %490 : vector<8x16xf32>
    %493 = arith.divf %491, %492 : vector<8x16xf32>
    %494 = vector.extract_strided_slice %476 {offsets = [0, 32], sizes = [8, 16], strides = [1, 1]} : vector<8x48xf32> to vector<8x16xf32>
    %495 = vector.extract_strided_slice %477 {offsets = [0, 32], sizes = [8, 16], strides = [1, 1]} : vector<8x48xf32> to vector<8x16xf32>
    %496 = vector.broadcast %29 : vector<1x16xf32> to vector<8x16xf32>
    %497 = arith.addf %495, %496 : vector<8x16xf32>
    %498 = arith.mulf %485, %497 : vector<8x16xf32>
    %499 = arith.addf %494, %498 : vector<8x16xf32>
    %500 = math.tanh %499 : vector<8x16xf32>
    %cst_107 = arith.constant 1.000000e+00 : f32
    %501 = vector.broadcast %cst_107 : f32 to vector<8x16xf32>
    %502 = arith.subf %501, %493 : vector<8x16xf32>
    %503 = arith.mulf %502, %500 : vector<8x16xf32>
    %504 = arith.mulf %493, %471 : vector<8x16xf32>
    %505 = arith.addf %503, %504 : vector<8x16xf32>
    %506 = arith.addf %472, %505 : vector<8x16xf32>
    %c14_i32 = arith.constant 14 : i32
    %c8_i32_108 = arith.constant 8 : i32
    %507 = arith.muli %c14_i32, %c8_i32_108 : i32
    %508 = tpu.assume_multiple %507, 8 : i32
    %509 = arith.index_cast %508 : i32 to index
    %c0_109 = arith.constant 0 : index
    %510 = vector.load %arg12[%509, %c0_109] : memref<240x48xf32, #tpu.memory_space<vmem>>, vector<8x48xf32>
    %cst_110 = arith.constant dense<0.000000e+00> : vector<8x48xf32>
    %511 = tpu.matmul %505, %28, %cst_110 {dimension_numbers = #tpu.dot_dimension_numbers<[1], [0], [0], [1], [0, 0, 1, 1], [], []>} : vector<8x16xf32>, vector<16x48xf32>, vector<8x48xf32> -> vector<8x48xf32>
    %512 = vector.extract_strided_slice %510 {offsets = [0, 0], sizes = [8, 16], strides = [1, 1]} : vector<8x48xf32> to vector<8x16xf32>
    %513 = vector.extract_strided_slice %511 {offsets = [0, 0], sizes = [8, 16], strides = [1, 1]} : vector<8x48xf32> to vector<8x16xf32>
    %514 = arith.addf %512, %513 : vector<8x16xf32>
    %515 = arith.negf %514 : vector<8x16xf32>
    %516 = math.exp %515 : vector<8x16xf32>
    %cst_111 = arith.constant 1.000000e+00 : f32
    %517 = vector.broadcast %cst_111 : f32 to vector<8x16xf32>
    %518 = arith.addf %517, %516 : vector<8x16xf32>
    %519 = arith.divf %517, %518 : vector<8x16xf32>
    %520 = vector.extract_strided_slice %510 {offsets = [0, 16], sizes = [8, 16], strides = [1, 1]} : vector<8x48xf32> to vector<8x16xf32>
    %521 = vector.extract_strided_slice %511 {offsets = [0, 16], sizes = [8, 16], strides = [1, 1]} : vector<8x48xf32> to vector<8x16xf32>
    %522 = arith.addf %520, %521 : vector<8x16xf32>
    %523 = arith.negf %522 : vector<8x16xf32>
    %524 = math.exp %523 : vector<8x16xf32>
    %cst_112 = arith.constant 1.000000e+00 : f32
    %525 = vector.broadcast %cst_112 : f32 to vector<8x16xf32>
    %526 = arith.addf %525, %524 : vector<8x16xf32>
    %527 = arith.divf %525, %526 : vector<8x16xf32>
    %528 = vector.extract_strided_slice %510 {offsets = [0, 32], sizes = [8, 16], strides = [1, 1]} : vector<8x48xf32> to vector<8x16xf32>
    %529 = vector.extract_strided_slice %511 {offsets = [0, 32], sizes = [8, 16], strides = [1, 1]} : vector<8x48xf32> to vector<8x16xf32>
    %530 = vector.broadcast %29 : vector<1x16xf32> to vector<8x16xf32>
    %531 = arith.addf %529, %530 : vector<8x16xf32>
    %532 = arith.mulf %519, %531 : vector<8x16xf32>
    %533 = arith.addf %528, %532 : vector<8x16xf32>
    %534 = math.tanh %533 : vector<8x16xf32>
    %cst_113 = arith.constant 1.000000e+00 : f32
    %535 = vector.broadcast %cst_113 : f32 to vector<8x16xf32>
    %536 = arith.subf %535, %527 : vector<8x16xf32>
    %537 = arith.mulf %536, %534 : vector<8x16xf32>
    %538 = arith.mulf %527, %505 : vector<8x16xf32>
    %539 = arith.addf %537, %538 : vector<8x16xf32>
    %540 = arith.addf %506, %539 : vector<8x16xf32>
    %c15_i32 = arith.constant 15 : i32
    %c8_i32_114 = arith.constant 8 : i32
    %541 = arith.muli %c15_i32, %c8_i32_114 : i32
    %542 = tpu.assume_multiple %541, 8 : i32
    %543 = arith.index_cast %542 : i32 to index
    %c0_115 = arith.constant 0 : index
    %544 = vector.load %arg12[%543, %c0_115] : memref<240x48xf32, #tpu.memory_space<vmem>>, vector<8x48xf32>
    %cst_116 = arith.constant dense<0.000000e+00> : vector<8x48xf32>
    %545 = tpu.matmul %539, %28, %cst_116 {dimension_numbers = #tpu.dot_dimension_numbers<[1], [0], [0], [1], [0, 0, 1, 1], [], []>} : vector<8x16xf32>, vector<16x48xf32>, vector<8x48xf32> -> vector<8x48xf32>
    %546 = vector.extract_strided_slice %544 {offsets = [0, 0], sizes = [8, 16], strides = [1, 1]} : vector<8x48xf32> to vector<8x16xf32>
    %547 = vector.extract_strided_slice %545 {offsets = [0, 0], sizes = [8, 16], strides = [1, 1]} : vector<8x48xf32> to vector<8x16xf32>
    %548 = arith.addf %546, %547 : vector<8x16xf32>
    %549 = arith.negf %548 : vector<8x16xf32>
    %550 = math.exp %549 : vector<8x16xf32>
    %cst_117 = arith.constant 1.000000e+00 : f32
    %551 = vector.broadcast %cst_117 : f32 to vector<8x16xf32>
    %552 = arith.addf %551, %550 : vector<8x16xf32>
    %553 = arith.divf %551, %552 : vector<8x16xf32>
    %554 = vector.extract_strided_slice %544 {offsets = [0, 16], sizes = [8, 16], strides = [1, 1]} : vector<8x48xf32> to vector<8x16xf32>
    %555 = vector.extract_strided_slice %545 {offsets = [0, 16], sizes = [8, 16], strides = [1, 1]} : vector<8x48xf32> to vector<8x16xf32>
    %556 = arith.addf %554, %555 : vector<8x16xf32>
    %557 = arith.negf %556 : vector<8x16xf32>
    %558 = math.exp %557 : vector<8x16xf32>
    %cst_118 = arith.constant 1.000000e+00 : f32
    %559 = vector.broadcast %cst_118 : f32 to vector<8x16xf32>
    %560 = arith.addf %559, %558 : vector<8x16xf32>
    %561 = arith.divf %559, %560 : vector<8x16xf32>
    %562 = vector.extract_strided_slice %544 {offsets = [0, 32], sizes = [8, 16], strides = [1, 1]} : vector<8x48xf32> to vector<8x16xf32>
    %563 = vector.extract_strided_slice %545 {offsets = [0, 32], sizes = [8, 16], strides = [1, 1]} : vector<8x48xf32> to vector<8x16xf32>
    %564 = vector.broadcast %29 : vector<1x16xf32> to vector<8x16xf32>
    %565 = arith.addf %563, %564 : vector<8x16xf32>
    %566 = arith.mulf %553, %565 : vector<8x16xf32>
    %567 = arith.addf %562, %566 : vector<8x16xf32>
    %568 = math.tanh %567 : vector<8x16xf32>
    %cst_119 = arith.constant 1.000000e+00 : f32
    %569 = vector.broadcast %cst_119 : f32 to vector<8x16xf32>
    %570 = arith.subf %569, %561 : vector<8x16xf32>
    %571 = arith.mulf %570, %568 : vector<8x16xf32>
    %572 = arith.mulf %561, %539 : vector<8x16xf32>
    %573 = arith.addf %571, %572 : vector<8x16xf32>
    %574 = arith.addf %540, %573 : vector<8x16xf32>
    %c16_i32 = arith.constant 16 : i32
    %c8_i32_120 = arith.constant 8 : i32
    %575 = arith.muli %c16_i32, %c8_i32_120 : i32
    %576 = tpu.assume_multiple %575, 8 : i32
    %577 = arith.index_cast %576 : i32 to index
    %c0_121 = arith.constant 0 : index
    %578 = vector.load %arg12[%577, %c0_121] : memref<240x48xf32, #tpu.memory_space<vmem>>, vector<8x48xf32>
    %cst_122 = arith.constant dense<0.000000e+00> : vector<8x48xf32>
    %579 = tpu.matmul %573, %28, %cst_122 {dimension_numbers = #tpu.dot_dimension_numbers<[1], [0], [0], [1], [0, 0, 1, 1], [], []>} : vector<8x16xf32>, vector<16x48xf32>, vector<8x48xf32> -> vector<8x48xf32>
    %580 = vector.extract_strided_slice %578 {offsets = [0, 0], sizes = [8, 16], strides = [1, 1]} : vector<8x48xf32> to vector<8x16xf32>
    %581 = vector.extract_strided_slice %579 {offsets = [0, 0], sizes = [8, 16], strides = [1, 1]} : vector<8x48xf32> to vector<8x16xf32>
    %582 = arith.addf %580, %581 : vector<8x16xf32>
    %583 = arith.negf %582 : vector<8x16xf32>
    %584 = math.exp %583 : vector<8x16xf32>
    %cst_123 = arith.constant 1.000000e+00 : f32
    %585 = vector.broadcast %cst_123 : f32 to vector<8x16xf32>
    %586 = arith.addf %585, %584 : vector<8x16xf32>
    %587 = arith.divf %585, %586 : vector<8x16xf32>
    %588 = vector.extract_strided_slice %578 {offsets = [0, 16], sizes = [8, 16], strides = [1, 1]} : vector<8x48xf32> to vector<8x16xf32>
    %589 = vector.extract_strided_slice %579 {offsets = [0, 16], sizes = [8, 16], strides = [1, 1]} : vector<8x48xf32> to vector<8x16xf32>
    %590 = arith.addf %588, %589 : vector<8x16xf32>
    %591 = arith.negf %590 : vector<8x16xf32>
    %592 = math.exp %591 : vector<8x16xf32>
    %cst_124 = arith.constant 1.000000e+00 : f32
    %593 = vector.broadcast %cst_124 : f32 to vector<8x16xf32>
    %594 = arith.addf %593, %592 : vector<8x16xf32>
    %595 = arith.divf %593, %594 : vector<8x16xf32>
    %596 = vector.extract_strided_slice %578 {offsets = [0, 32], sizes = [8, 16], strides = [1, 1]} : vector<8x48xf32> to vector<8x16xf32>
    %597 = vector.extract_strided_slice %579 {offsets = [0, 32], sizes = [8, 16], strides = [1, 1]} : vector<8x48xf32> to vector<8x16xf32>
    %598 = vector.broadcast %29 : vector<1x16xf32> to vector<8x16xf32>
    %599 = arith.addf %597, %598 : vector<8x16xf32>
    %600 = arith.mulf %587, %599 : vector<8x16xf32>
    %601 = arith.addf %596, %600 : vector<8x16xf32>
    %602 = math.tanh %601 : vector<8x16xf32>
    %cst_125 = arith.constant 1.000000e+00 : f32
    %603 = vector.broadcast %cst_125 : f32 to vector<8x16xf32>
    %604 = arith.subf %603, %595 : vector<8x16xf32>
    %605 = arith.mulf %604, %602 : vector<8x16xf32>
    %606 = arith.mulf %595, %573 : vector<8x16xf32>
    %607 = arith.addf %605, %606 : vector<8x16xf32>
    %608 = arith.addf %574, %607 : vector<8x16xf32>
    %c17_i32 = arith.constant 17 : i32
    %c8_i32_126 = arith.constant 8 : i32
    %609 = arith.muli %c17_i32, %c8_i32_126 : i32
    %610 = tpu.assume_multiple %609, 8 : i32
    %611 = arith.index_cast %610 : i32 to index
    %c0_127 = arith.constant 0 : index
    %612 = vector.load %arg12[%611, %c0_127] : memref<240x48xf32, #tpu.memory_space<vmem>>, vector<8x48xf32>
    %cst_128 = arith.constant dense<0.000000e+00> : vector<8x48xf32>
    %613 = tpu.matmul %607, %28, %cst_128 {dimension_numbers = #tpu.dot_dimension_numbers<[1], [0], [0], [1], [0, 0, 1, 1], [], []>} : vector<8x16xf32>, vector<16x48xf32>, vector<8x48xf32> -> vector<8x48xf32>
    %614 = vector.extract_strided_slice %612 {offsets = [0, 0], sizes = [8, 16], strides = [1, 1]} : vector<8x48xf32> to vector<8x16xf32>
    %615 = vector.extract_strided_slice %613 {offsets = [0, 0], sizes = [8, 16], strides = [1, 1]} : vector<8x48xf32> to vector<8x16xf32>
    %616 = arith.addf %614, %615 : vector<8x16xf32>
    %617 = arith.negf %616 : vector<8x16xf32>
    %618 = math.exp %617 : vector<8x16xf32>
    %cst_129 = arith.constant 1.000000e+00 : f32
    %619 = vector.broadcast %cst_129 : f32 to vector<8x16xf32>
    %620 = arith.addf %619, %618 : vector<8x16xf32>
    %621 = arith.divf %619, %620 : vector<8x16xf32>
    %622 = vector.extract_strided_slice %612 {offsets = [0, 16], sizes = [8, 16], strides = [1, 1]} : vector<8x48xf32> to vector<8x16xf32>
    %623 = vector.extract_strided_slice %613 {offsets = [0, 16], sizes = [8, 16], strides = [1, 1]} : vector<8x48xf32> to vector<8x16xf32>
    %624 = arith.addf %622, %623 : vector<8x16xf32>
    %625 = arith.negf %624 : vector<8x16xf32>
    %626 = math.exp %625 : vector<8x16xf32>
    %cst_130 = arith.constant 1.000000e+00 : f32
    %627 = vector.broadcast %cst_130 : f32 to vector<8x16xf32>
    %628 = arith.addf %627, %626 : vector<8x16xf32>
    %629 = arith.divf %627, %628 : vector<8x16xf32>
    %630 = vector.extract_strided_slice %612 {offsets = [0, 32], sizes = [8, 16], strides = [1, 1]} : vector<8x48xf32> to vector<8x16xf32>
    %631 = vector.extract_strided_slice %613 {offsets = [0, 32], sizes = [8, 16], strides = [1, 1]} : vector<8x48xf32> to vector<8x16xf32>
    %632 = vector.broadcast %29 : vector<1x16xf32> to vector<8x16xf32>
    %633 = arith.addf %631, %632 : vector<8x16xf32>
    %634 = arith.mulf %621, %633 : vector<8x16xf32>
    %635 = arith.addf %630, %634 : vector<8x16xf32>
    %636 = math.tanh %635 : vector<8x16xf32>
    %cst_131 = arith.constant 1.000000e+00 : f32
    %637 = vector.broadcast %cst_131 : f32 to vector<8x16xf32>
    %638 = arith.subf %637, %629 : vector<8x16xf32>
    %639 = arith.mulf %638, %636 : vector<8x16xf32>
    %640 = arith.mulf %629, %607 : vector<8x16xf32>
    %641 = arith.addf %639, %640 : vector<8x16xf32>
    %642 = arith.addf %608, %641 : vector<8x16xf32>
    %c18_i32 = arith.constant 18 : i32
    %c8_i32_132 = arith.constant 8 : i32
    %643 = arith.muli %c18_i32, %c8_i32_132 : i32
    %644 = tpu.assume_multiple %643, 8 : i32
    %645 = arith.index_cast %644 : i32 to index
    %c0_133 = arith.constant 0 : index
    %646 = vector.load %arg12[%645, %c0_133] : memref<240x48xf32, #tpu.memory_space<vmem>>, vector<8x48xf32>
    %cst_134 = arith.constant dense<0.000000e+00> : vector<8x48xf32>
    %647 = tpu.matmul %641, %28, %cst_134 {dimension_numbers = #tpu.dot_dimension_numbers<[1], [0], [0], [1], [0, 0, 1, 1], [], []>} : vector<8x16xf32>, vector<16x48xf32>, vector<8x48xf32> -> vector<8x48xf32>
    %648 = vector.extract_strided_slice %646 {offsets = [0, 0], sizes = [8, 16], strides = [1, 1]} : vector<8x48xf32> to vector<8x16xf32>
    %649 = vector.extract_strided_slice %647 {offsets = [0, 0], sizes = [8, 16], strides = [1, 1]} : vector<8x48xf32> to vector<8x16xf32>
    %650 = arith.addf %648, %649 : vector<8x16xf32>
    %651 = arith.negf %650 : vector<8x16xf32>
    %652 = math.exp %651 : vector<8x16xf32>
    %cst_135 = arith.constant 1.000000e+00 : f32
    %653 = vector.broadcast %cst_135 : f32 to vector<8x16xf32>
    %654 = arith.addf %653, %652 : vector<8x16xf32>
    %655 = arith.divf %653, %654 : vector<8x16xf32>
    %656 = vector.extract_strided_slice %646 {offsets = [0, 16], sizes = [8, 16], strides = [1, 1]} : vector<8x48xf32> to vector<8x16xf32>
    %657 = vector.extract_strided_slice %647 {offsets = [0, 16], sizes = [8, 16], strides = [1, 1]} : vector<8x48xf32> to vector<8x16xf32>
    %658 = arith.addf %656, %657 : vector<8x16xf32>
    %659 = arith.negf %658 : vector<8x16xf32>
    %660 = math.exp %659 : vector<8x16xf32>
    %cst_136 = arith.constant 1.000000e+00 : f32
    %661 = vector.broadcast %cst_136 : f32 to vector<8x16xf32>
    %662 = arith.addf %661, %660 : vector<8x16xf32>
    %663 = arith.divf %661, %662 : vector<8x16xf32>
    %664 = vector.extract_strided_slice %646 {offsets = [0, 32], sizes = [8, 16], strides = [1, 1]} : vector<8x48xf32> to vector<8x16xf32>
    %665 = vector.extract_strided_slice %647 {offsets = [0, 32], sizes = [8, 16], strides = [1, 1]} : vector<8x48xf32> to vector<8x16xf32>
    %666 = vector.broadcast %29 : vector<1x16xf32> to vector<8x16xf32>
    %667 = arith.addf %665, %666 : vector<8x16xf32>
    %668 = arith.mulf %655, %667 : vector<8x16xf32>
    %669 = arith.addf %664, %668 : vector<8x16xf32>
    %670 = math.tanh %669 : vector<8x16xf32>
    %cst_137 = arith.constant 1.000000e+00 : f32
    %671 = vector.broadcast %cst_137 : f32 to vector<8x16xf32>
    %672 = arith.subf %671, %663 : vector<8x16xf32>
    %673 = arith.mulf %672, %670 : vector<8x16xf32>
    %674 = arith.mulf %663, %641 : vector<8x16xf32>
    %675 = arith.addf %673, %674 : vector<8x16xf32>
    %676 = arith.addf %642, %675 : vector<8x16xf32>
    %c19_i32 = arith.constant 19 : i32
    %c8_i32_138 = arith.constant 8 : i32
    %677 = arith.muli %c19_i32, %c8_i32_138 : i32
    %678 = tpu.assume_multiple %677, 8 : i32
    %679 = arith.index_cast %678 : i32 to index
    %c0_139 = arith.constant 0 : index
    %680 = vector.load %arg12[%679, %c0_139] : memref<240x48xf32, #tpu.memory_space<vmem>>, vector<8x48xf32>
    %cst_140 = arith.constant dense<0.000000e+00> : vector<8x48xf32>
    %681 = tpu.matmul %675, %28, %cst_140 {dimension_numbers = #tpu.dot_dimension_numbers<[1], [0], [0], [1], [0, 0, 1, 1], [], []>} : vector<8x16xf32>, vector<16x48xf32>, vector<8x48xf32> -> vector<8x48xf32>
    %682 = vector.extract_strided_slice %680 {offsets = [0, 0], sizes = [8, 16], strides = [1, 1]} : vector<8x48xf32> to vector<8x16xf32>
    %683 = vector.extract_strided_slice %681 {offsets = [0, 0], sizes = [8, 16], strides = [1, 1]} : vector<8x48xf32> to vector<8x16xf32>
    %684 = arith.addf %682, %683 : vector<8x16xf32>
    %685 = arith.negf %684 : vector<8x16xf32>
    %686 = math.exp %685 : vector<8x16xf32>
    %cst_141 = arith.constant 1.000000e+00 : f32
    %687 = vector.broadcast %cst_141 : f32 to vector<8x16xf32>
    %688 = arith.addf %687, %686 : vector<8x16xf32>
    %689 = arith.divf %687, %688 : vector<8x16xf32>
    %690 = vector.extract_strided_slice %680 {offsets = [0, 16], sizes = [8, 16], strides = [1, 1]} : vector<8x48xf32> to vector<8x16xf32>
    %691 = vector.extract_strided_slice %681 {offsets = [0, 16], sizes = [8, 16], strides = [1, 1]} : vector<8x48xf32> to vector<8x16xf32>
    %692 = arith.addf %690, %691 : vector<8x16xf32>
    %693 = arith.negf %692 : vector<8x16xf32>
    %694 = math.exp %693 : vector<8x16xf32>
    %cst_142 = arith.constant 1.000000e+00 : f32
    %695 = vector.broadcast %cst_142 : f32 to vector<8x16xf32>
    %696 = arith.addf %695, %694 : vector<8x16xf32>
    %697 = arith.divf %695, %696 : vector<8x16xf32>
    %698 = vector.extract_strided_slice %680 {offsets = [0, 32], sizes = [8, 16], strides = [1, 1]} : vector<8x48xf32> to vector<8x16xf32>
    %699 = vector.extract_strided_slice %681 {offsets = [0, 32], sizes = [8, 16], strides = [1, 1]} : vector<8x48xf32> to vector<8x16xf32>
    %700 = vector.broadcast %29 : vector<1x16xf32> to vector<8x16xf32>
    %701 = arith.addf %699, %700 : vector<8x16xf32>
    %702 = arith.mulf %689, %701 : vector<8x16xf32>
    %703 = arith.addf %698, %702 : vector<8x16xf32>
    %704 = math.tanh %703 : vector<8x16xf32>
    %cst_143 = arith.constant 1.000000e+00 : f32
    %705 = vector.broadcast %cst_143 : f32 to vector<8x16xf32>
    %706 = arith.subf %705, %697 : vector<8x16xf32>
    %707 = arith.mulf %706, %704 : vector<8x16xf32>
    %708 = arith.mulf %697, %675 : vector<8x16xf32>
    %709 = arith.addf %707, %708 : vector<8x16xf32>
    %710 = arith.addf %676, %709 : vector<8x16xf32>
    %c20_i32 = arith.constant 20 : i32
    %c8_i32_144 = arith.constant 8 : i32
    %711 = arith.muli %c20_i32, %c8_i32_144 : i32
    %712 = tpu.assume_multiple %711, 8 : i32
    %713 = arith.index_cast %712 : i32 to index
    %c0_145 = arith.constant 0 : index
    %714 = vector.load %arg12[%713, %c0_145] : memref<240x48xf32, #tpu.memory_space<vmem>>, vector<8x48xf32>
    %cst_146 = arith.constant dense<0.000000e+00> : vector<8x48xf32>
    %715 = tpu.matmul %709, %28, %cst_146 {dimension_numbers = #tpu.dot_dimension_numbers<[1], [0], [0], [1], [0, 0, 1, 1], [], []>} : vector<8x16xf32>, vector<16x48xf32>, vector<8x48xf32> -> vector<8x48xf32>
    %716 = vector.extract_strided_slice %714 {offsets = [0, 0], sizes = [8, 16], strides = [1, 1]} : vector<8x48xf32> to vector<8x16xf32>
    %717 = vector.extract_strided_slice %715 {offsets = [0, 0], sizes = [8, 16], strides = [1, 1]} : vector<8x48xf32> to vector<8x16xf32>
    %718 = arith.addf %716, %717 : vector<8x16xf32>
    %719 = arith.negf %718 : vector<8x16xf32>
    %720 = math.exp %719 : vector<8x16xf32>
    %cst_147 = arith.constant 1.000000e+00 : f32
    %721 = vector.broadcast %cst_147 : f32 to vector<8x16xf32>
    %722 = arith.addf %721, %720 : vector<8x16xf32>
    %723 = arith.divf %721, %722 : vector<8x16xf32>
    %724 = vector.extract_strided_slice %714 {offsets = [0, 16], sizes = [8, 16], strides = [1, 1]} : vector<8x48xf32> to vector<8x16xf32>
    %725 = vector.extract_strided_slice %715 {offsets = [0, 16], sizes = [8, 16], strides = [1, 1]} : vector<8x48xf32> to vector<8x16xf32>
    %726 = arith.addf %724, %725 : vector<8x16xf32>
    %727 = arith.negf %726 : vector<8x16xf32>
    %728 = math.exp %727 : vector<8x16xf32>
    %cst_148 = arith.constant 1.000000e+00 : f32
    %729 = vector.broadcast %cst_148 : f32 to vector<8x16xf32>
    %730 = arith.addf %729, %728 : vector<8x16xf32>
    %731 = arith.divf %729, %730 : vector<8x16xf32>
    %732 = vector.extract_strided_slice %714 {offsets = [0, 32], sizes = [8, 16], strides = [1, 1]} : vector<8x48xf32> to vector<8x16xf32>
    %733 = vector.extract_strided_slice %715 {offsets = [0, 32], sizes = [8, 16], strides = [1, 1]} : vector<8x48xf32> to vector<8x16xf32>
    %734 = vector.broadcast %29 : vector<1x16xf32> to vector<8x16xf32>
    %735 = arith.addf %733, %734 : vector<8x16xf32>
    %736 = arith.mulf %723, %735 : vector<8x16xf32>
    %737 = arith.addf %732, %736 : vector<8x16xf32>
    %738 = math.tanh %737 : vector<8x16xf32>
    %cst_149 = arith.constant 1.000000e+00 : f32
    %739 = vector.broadcast %cst_149 : f32 to vector<8x16xf32>
    %740 = arith.subf %739, %731 : vector<8x16xf32>
    %741 = arith.mulf %740, %738 : vector<8x16xf32>
    %742 = arith.mulf %731, %709 : vector<8x16xf32>
    %743 = arith.addf %741, %742 : vector<8x16xf32>
    %744 = arith.addf %710, %743 : vector<8x16xf32>
    %c21_i32 = arith.constant 21 : i32
    %c8_i32_150 = arith.constant 8 : i32
    %745 = arith.muli %c21_i32, %c8_i32_150 : i32
    %746 = tpu.assume_multiple %745, 8 : i32
    %747 = arith.index_cast %746 : i32 to index
    %c0_151 = arith.constant 0 : index
    %748 = vector.load %arg12[%747, %c0_151] : memref<240x48xf32, #tpu.memory_space<vmem>>, vector<8x48xf32>
    %cst_152 = arith.constant dense<0.000000e+00> : vector<8x48xf32>
    %749 = tpu.matmul %743, %28, %cst_152 {dimension_numbers = #tpu.dot_dimension_numbers<[1], [0], [0], [1], [0, 0, 1, 1], [], []>} : vector<8x16xf32>, vector<16x48xf32>, vector<8x48xf32> -> vector<8x48xf32>
    %750 = vector.extract_strided_slice %748 {offsets = [0, 0], sizes = [8, 16], strides = [1, 1]} : vector<8x48xf32> to vector<8x16xf32>
    %751 = vector.extract_strided_slice %749 {offsets = [0, 0], sizes = [8, 16], strides = [1, 1]} : vector<8x48xf32> to vector<8x16xf32>
    %752 = arith.addf %750, %751 : vector<8x16xf32>
    %753 = arith.negf %752 : vector<8x16xf32>
    %754 = math.exp %753 : vector<8x16xf32>
    %cst_153 = arith.constant 1.000000e+00 : f32
    %755 = vector.broadcast %cst_153 : f32 to vector<8x16xf32>
    %756 = arith.addf %755, %754 : vector<8x16xf32>
    %757 = arith.divf %755, %756 : vector<8x16xf32>
    %758 = vector.extract_strided_slice %748 {offsets = [0, 16], sizes = [8, 16], strides = [1, 1]} : vector<8x48xf32> to vector<8x16xf32>
    %759 = vector.extract_strided_slice %749 {offsets = [0, 16], sizes = [8, 16], strides = [1, 1]} : vector<8x48xf32> to vector<8x16xf32>
    %760 = arith.addf %758, %759 : vector<8x16xf32>
    %761 = arith.negf %760 : vector<8x16xf32>
    %762 = math.exp %761 : vector<8x16xf32>
    %cst_154 = arith.constant 1.000000e+00 : f32
    %763 = vector.broadcast %cst_154 : f32 to vector<8x16xf32>
    %764 = arith.addf %763, %762 : vector<8x16xf32>
    %765 = arith.divf %763, %764 : vector<8x16xf32>
    %766 = vector.extract_strided_slice %748 {offsets = [0, 32], sizes = [8, 16], strides = [1, 1]} : vector<8x48xf32> to vector<8x16xf32>
    %767 = vector.extract_strided_slice %749 {offsets = [0, 32], sizes = [8, 16], strides = [1, 1]} : vector<8x48xf32> to vector<8x16xf32>
    %768 = vector.broadcast %29 : vector<1x16xf32> to vector<8x16xf32>
    %769 = arith.addf %767, %768 : vector<8x16xf32>
    %770 = arith.mulf %757, %769 : vector<8x16xf32>
    %771 = arith.addf %766, %770 : vector<8x16xf32>
    %772 = math.tanh %771 : vector<8x16xf32>
    %cst_155 = arith.constant 1.000000e+00 : f32
    %773 = vector.broadcast %cst_155 : f32 to vector<8x16xf32>
    %774 = arith.subf %773, %765 : vector<8x16xf32>
    %775 = arith.mulf %774, %772 : vector<8x16xf32>
    %776 = arith.mulf %765, %743 : vector<8x16xf32>
    %777 = arith.addf %775, %776 : vector<8x16xf32>
    %778 = arith.addf %744, %777 : vector<8x16xf32>
    %c22_i32 = arith.constant 22 : i32
    %c8_i32_156 = arith.constant 8 : i32
    %779 = arith.muli %c22_i32, %c8_i32_156 : i32
    %780 = tpu.assume_multiple %779, 8 : i32
    %781 = arith.index_cast %780 : i32 to index
    %c0_157 = arith.constant 0 : index
    %782 = vector.load %arg12[%781, %c0_157] : memref<240x48xf32, #tpu.memory_space<vmem>>, vector<8x48xf32>
    %cst_158 = arith.constant dense<0.000000e+00> : vector<8x48xf32>
    %783 = tpu.matmul %777, %28, %cst_158 {dimension_numbers = #tpu.dot_dimension_numbers<[1], [0], [0], [1], [0, 0, 1, 1], [], []>} : vector<8x16xf32>, vector<16x48xf32>, vector<8x48xf32> -> vector<8x48xf32>
    %784 = vector.extract_strided_slice %782 {offsets = [0, 0], sizes = [8, 16], strides = [1, 1]} : vector<8x48xf32> to vector<8x16xf32>
    %785 = vector.extract_strided_slice %783 {offsets = [0, 0], sizes = [8, 16], strides = [1, 1]} : vector<8x48xf32> to vector<8x16xf32>
    %786 = arith.addf %784, %785 : vector<8x16xf32>
    %787 = arith.negf %786 : vector<8x16xf32>
    %788 = math.exp %787 : vector<8x16xf32>
    %cst_159 = arith.constant 1.000000e+00 : f32
    %789 = vector.broadcast %cst_159 : f32 to vector<8x16xf32>
    %790 = arith.addf %789, %788 : vector<8x16xf32>
    %791 = arith.divf %789, %790 : vector<8x16xf32>
    %792 = vector.extract_strided_slice %782 {offsets = [0, 16], sizes = [8, 16], strides = [1, 1]} : vector<8x48xf32> to vector<8x16xf32>
    %793 = vector.extract_strided_slice %783 {offsets = [0, 16], sizes = [8, 16], strides = [1, 1]} : vector<8x48xf32> to vector<8x16xf32>
    %794 = arith.addf %792, %793 : vector<8x16xf32>
    %795 = arith.negf %794 : vector<8x16xf32>
    %796 = math.exp %795 : vector<8x16xf32>
    %cst_160 = arith.constant 1.000000e+00 : f32
    %797 = vector.broadcast %cst_160 : f32 to vector<8x16xf32>
    %798 = arith.addf %797, %796 : vector<8x16xf32>
    %799 = arith.divf %797, %798 : vector<8x16xf32>
    %800 = vector.extract_strided_slice %782 {offsets = [0, 32], sizes = [8, 16], strides = [1, 1]} : vector<8x48xf32> to vector<8x16xf32>
    %801 = vector.extract_strided_slice %783 {offsets = [0, 32], sizes = [8, 16], strides = [1, 1]} : vector<8x48xf32> to vector<8x16xf32>
    %802 = vector.broadcast %29 : vector<1x16xf32> to vector<8x16xf32>
    %803 = arith.addf %801, %802 : vector<8x16xf32>
    %804 = arith.mulf %791, %803 : vector<8x16xf32>
    %805 = arith.addf %800, %804 : vector<8x16xf32>
    %806 = math.tanh %805 : vector<8x16xf32>
    %cst_161 = arith.constant 1.000000e+00 : f32
    %807 = vector.broadcast %cst_161 : f32 to vector<8x16xf32>
    %808 = arith.subf %807, %799 : vector<8x16xf32>
    %809 = arith.mulf %808, %806 : vector<8x16xf32>
    %810 = arith.mulf %799, %777 : vector<8x16xf32>
    %811 = arith.addf %809, %810 : vector<8x16xf32>
    %812 = arith.addf %778, %811 : vector<8x16xf32>
    %c23_i32 = arith.constant 23 : i32
    %c8_i32_162 = arith.constant 8 : i32
    %813 = arith.muli %c23_i32, %c8_i32_162 : i32
    %814 = tpu.assume_multiple %813, 8 : i32
    %815 = arith.index_cast %814 : i32 to index
    %c0_163 = arith.constant 0 : index
    %816 = vector.load %arg12[%815, %c0_163] : memref<240x48xf32, #tpu.memory_space<vmem>>, vector<8x48xf32>
    %cst_164 = arith.constant dense<0.000000e+00> : vector<8x48xf32>
    %817 = tpu.matmul %811, %28, %cst_164 {dimension_numbers = #tpu.dot_dimension_numbers<[1], [0], [0], [1], [0, 0, 1, 1], [], []>} : vector<8x16xf32>, vector<16x48xf32>, vector<8x48xf32> -> vector<8x48xf32>
    %818 = vector.extract_strided_slice %816 {offsets = [0, 0], sizes = [8, 16], strides = [1, 1]} : vector<8x48xf32> to vector<8x16xf32>
    %819 = vector.extract_strided_slice %817 {offsets = [0, 0], sizes = [8, 16], strides = [1, 1]} : vector<8x48xf32> to vector<8x16xf32>
    %820 = arith.addf %818, %819 : vector<8x16xf32>
    %821 = arith.negf %820 : vector<8x16xf32>
    %822 = math.exp %821 : vector<8x16xf32>
    %cst_165 = arith.constant 1.000000e+00 : f32
    %823 = vector.broadcast %cst_165 : f32 to vector<8x16xf32>
    %824 = arith.addf %823, %822 : vector<8x16xf32>
    %825 = arith.divf %823, %824 : vector<8x16xf32>
    %826 = vector.extract_strided_slice %816 {offsets = [0, 16], sizes = [8, 16], strides = [1, 1]} : vector<8x48xf32> to vector<8x16xf32>
    %827 = vector.extract_strided_slice %817 {offsets = [0, 16], sizes = [8, 16], strides = [1, 1]} : vector<8x48xf32> to vector<8x16xf32>
    %828 = arith.addf %826, %827 : vector<8x16xf32>
    %829 = arith.negf %828 : vector<8x16xf32>
    %830 = math.exp %829 : vector<8x16xf32>
    %cst_166 = arith.constant 1.000000e+00 : f32
    %831 = vector.broadcast %cst_166 : f32 to vector<8x16xf32>
    %832 = arith.addf %831, %830 : vector<8x16xf32>
    %833 = arith.divf %831, %832 : vector<8x16xf32>
    %834 = vector.extract_strided_slice %816 {offsets = [0, 32], sizes = [8, 16], strides = [1, 1]} : vector<8x48xf32> to vector<8x16xf32>
    %835 = vector.extract_strided_slice %817 {offsets = [0, 32], sizes = [8, 16], strides = [1, 1]} : vector<8x48xf32> to vector<8x16xf32>
    %836 = vector.broadcast %29 : vector<1x16xf32> to vector<8x16xf32>
    %837 = arith.addf %835, %836 : vector<8x16xf32>
    %838 = arith.mulf %825, %837 : vector<8x16xf32>
    %839 = arith.addf %834, %838 : vector<8x16xf32>
    %840 = math.tanh %839 : vector<8x16xf32>
    %cst_167 = arith.constant 1.000000e+00 : f32
    %841 = vector.broadcast %cst_167 : f32 to vector<8x16xf32>
    %842 = arith.subf %841, %833 : vector<8x16xf32>
    %843 = arith.mulf %842, %840 : vector<8x16xf32>
    %844 = arith.mulf %833, %811 : vector<8x16xf32>
    %845 = arith.addf %843, %844 : vector<8x16xf32>
    %846 = arith.addf %812, %845 : vector<8x16xf32>
    %c24_i32 = arith.constant 24 : i32
    %c8_i32_168 = arith.constant 8 : i32
    %847 = arith.muli %c24_i32, %c8_i32_168 : i32
    %848 = tpu.assume_multiple %847, 8 : i32
    %849 = arith.index_cast %848 : i32 to index
    %c0_169 = arith.constant 0 : index
    %850 = vector.load %arg12[%849, %c0_169] : memref<240x48xf32, #tpu.memory_space<vmem>>, vector<8x48xf32>
    %cst_170 = arith.constant dense<0.000000e+00> : vector<8x48xf32>
    %851 = tpu.matmul %845, %28, %cst_170 {dimension_numbers = #tpu.dot_dimension_numbers<[1], [0], [0], [1], [0, 0, 1, 1], [], []>} : vector<8x16xf32>, vector<16x48xf32>, vector<8x48xf32> -> vector<8x48xf32>
    %852 = vector.extract_strided_slice %850 {offsets = [0, 0], sizes = [8, 16], strides = [1, 1]} : vector<8x48xf32> to vector<8x16xf32>
    %853 = vector.extract_strided_slice %851 {offsets = [0, 0], sizes = [8, 16], strides = [1, 1]} : vector<8x48xf32> to vector<8x16xf32>
    %854 = arith.addf %852, %853 : vector<8x16xf32>
    %855 = arith.negf %854 : vector<8x16xf32>
    %856 = math.exp %855 : vector<8x16xf32>
    %cst_171 = arith.constant 1.000000e+00 : f32
    %857 = vector.broadcast %cst_171 : f32 to vector<8x16xf32>
    %858 = arith.addf %857, %856 : vector<8x16xf32>
    %859 = arith.divf %857, %858 : vector<8x16xf32>
    %860 = vector.extract_strided_slice %850 {offsets = [0, 16], sizes = [8, 16], strides = [1, 1]} : vector<8x48xf32> to vector<8x16xf32>
    %861 = vector.extract_strided_slice %851 {offsets = [0, 16], sizes = [8, 16], strides = [1, 1]} : vector<8x48xf32> to vector<8x16xf32>
    %862 = arith.addf %860, %861 : vector<8x16xf32>
    %863 = arith.negf %862 : vector<8x16xf32>
    %864 = math.exp %863 : vector<8x16xf32>
    %cst_172 = arith.constant 1.000000e+00 : f32
    %865 = vector.broadcast %cst_172 : f32 to vector<8x16xf32>
    %866 = arith.addf %865, %864 : vector<8x16xf32>
    %867 = arith.divf %865, %866 : vector<8x16xf32>
    %868 = vector.extract_strided_slice %850 {offsets = [0, 32], sizes = [8, 16], strides = [1, 1]} : vector<8x48xf32> to vector<8x16xf32>
    %869 = vector.extract_strided_slice %851 {offsets = [0, 32], sizes = [8, 16], strides = [1, 1]} : vector<8x48xf32> to vector<8x16xf32>
    %870 = vector.broadcast %29 : vector<1x16xf32> to vector<8x16xf32>
    %871 = arith.addf %869, %870 : vector<8x16xf32>
    %872 = arith.mulf %859, %871 : vector<8x16xf32>
    %873 = arith.addf %868, %872 : vector<8x16xf32>
    %874 = math.tanh %873 : vector<8x16xf32>
    %cst_173 = arith.constant 1.000000e+00 : f32
    %875 = vector.broadcast %cst_173 : f32 to vector<8x16xf32>
    %876 = arith.subf %875, %867 : vector<8x16xf32>
    %877 = arith.mulf %876, %874 : vector<8x16xf32>
    %878 = arith.mulf %867, %845 : vector<8x16xf32>
    %879 = arith.addf %877, %878 : vector<8x16xf32>
    %880 = arith.addf %846, %879 : vector<8x16xf32>
    %c25_i32 = arith.constant 25 : i32
    %c8_i32_174 = arith.constant 8 : i32
    %881 = arith.muli %c25_i32, %c8_i32_174 : i32
    %882 = tpu.assume_multiple %881, 8 : i32
    %883 = arith.index_cast %882 : i32 to index
    %c0_175 = arith.constant 0 : index
    %884 = vector.load %arg12[%883, %c0_175] : memref<240x48xf32, #tpu.memory_space<vmem>>, vector<8x48xf32>
    %cst_176 = arith.constant dense<0.000000e+00> : vector<8x48xf32>
    %885 = tpu.matmul %879, %28, %cst_176 {dimension_numbers = #tpu.dot_dimension_numbers<[1], [0], [0], [1], [0, 0, 1, 1], [], []>} : vector<8x16xf32>, vector<16x48xf32>, vector<8x48xf32> -> vector<8x48xf32>
    %886 = vector.extract_strided_slice %884 {offsets = [0, 0], sizes = [8, 16], strides = [1, 1]} : vector<8x48xf32> to vector<8x16xf32>
    %887 = vector.extract_strided_slice %885 {offsets = [0, 0], sizes = [8, 16], strides = [1, 1]} : vector<8x48xf32> to vector<8x16xf32>
    %888 = arith.addf %886, %887 : vector<8x16xf32>
    %889 = arith.negf %888 : vector<8x16xf32>
    %890 = math.exp %889 : vector<8x16xf32>
    %cst_177 = arith.constant 1.000000e+00 : f32
    %891 = vector.broadcast %cst_177 : f32 to vector<8x16xf32>
    %892 = arith.addf %891, %890 : vector<8x16xf32>
    %893 = arith.divf %891, %892 : vector<8x16xf32>
    %894 = vector.extract_strided_slice %884 {offsets = [0, 16], sizes = [8, 16], strides = [1, 1]} : vector<8x48xf32> to vector<8x16xf32>
    %895 = vector.extract_strided_slice %885 {offsets = [0, 16], sizes = [8, 16], strides = [1, 1]} : vector<8x48xf32> to vector<8x16xf32>
    %896 = arith.addf %894, %895 : vector<8x16xf32>
    %897 = arith.negf %896 : vector<8x16xf32>
    %898 = math.exp %897 : vector<8x16xf32>
    %cst_178 = arith.constant 1.000000e+00 : f32
    %899 = vector.broadcast %cst_178 : f32 to vector<8x16xf32>
    %900 = arith.addf %899, %898 : vector<8x16xf32>
    %901 = arith.divf %899, %900 : vector<8x16xf32>
    %902 = vector.extract_strided_slice %884 {offsets = [0, 32], sizes = [8, 16], strides = [1, 1]} : vector<8x48xf32> to vector<8x16xf32>
    %903 = vector.extract_strided_slice %885 {offsets = [0, 32], sizes = [8, 16], strides = [1, 1]} : vector<8x48xf32> to vector<8x16xf32>
    %904 = vector.broadcast %29 : vector<1x16xf32> to vector<8x16xf32>
    %905 = arith.addf %903, %904 : vector<8x16xf32>
    %906 = arith.mulf %893, %905 : vector<8x16xf32>
    %907 = arith.addf %902, %906 : vector<8x16xf32>
    %908 = math.tanh %907 : vector<8x16xf32>
    %cst_179 = arith.constant 1.000000e+00 : f32
    %909 = vector.broadcast %cst_179 : f32 to vector<8x16xf32>
    %910 = arith.subf %909, %901 : vector<8x16xf32>
    %911 = arith.mulf %910, %908 : vector<8x16xf32>
    %912 = arith.mulf %901, %879 : vector<8x16xf32>
    %913 = arith.addf %911, %912 : vector<8x16xf32>
    %914 = arith.addf %880, %913 : vector<8x16xf32>
    %c26_i32 = arith.constant 26 : i32
    %c8_i32_180 = arith.constant 8 : i32
    %915 = arith.muli %c26_i32, %c8_i32_180 : i32
    %916 = tpu.assume_multiple %915, 8 : i32
    %917 = arith.index_cast %916 : i32 to index
    %c0_181 = arith.constant 0 : index
    %918 = vector.load %arg12[%917, %c0_181] : memref<240x48xf32, #tpu.memory_space<vmem>>, vector<8x48xf32>
    %cst_182 = arith.constant dense<0.000000e+00> : vector<8x48xf32>
    %919 = tpu.matmul %913, %28, %cst_182 {dimension_numbers = #tpu.dot_dimension_numbers<[1], [0], [0], [1], [0, 0, 1, 1], [], []>} : vector<8x16xf32>, vector<16x48xf32>, vector<8x48xf32> -> vector<8x48xf32>
    %920 = vector.extract_strided_slice %918 {offsets = [0, 0], sizes = [8, 16], strides = [1, 1]} : vector<8x48xf32> to vector<8x16xf32>
    %921 = vector.extract_strided_slice %919 {offsets = [0, 0], sizes = [8, 16], strides = [1, 1]} : vector<8x48xf32> to vector<8x16xf32>
    %922 = arith.addf %920, %921 : vector<8x16xf32>
    %923 = arith.negf %922 : vector<8x16xf32>
    %924 = math.exp %923 : vector<8x16xf32>
    %cst_183 = arith.constant 1.000000e+00 : f32
    %925 = vector.broadcast %cst_183 : f32 to vector<8x16xf32>
    %926 = arith.addf %925, %924 : vector<8x16xf32>
    %927 = arith.divf %925, %926 : vector<8x16xf32>
    %928 = vector.extract_strided_slice %918 {offsets = [0, 16], sizes = [8, 16], strides = [1, 1]} : vector<8x48xf32> to vector<8x16xf32>
    %929 = vector.extract_strided_slice %919 {offsets = [0, 16], sizes = [8, 16], strides = [1, 1]} : vector<8x48xf32> to vector<8x16xf32>
    %930 = arith.addf %928, %929 : vector<8x16xf32>
    %931 = arith.negf %930 : vector<8x16xf32>
    %932 = math.exp %931 : vector<8x16xf32>
    %cst_184 = arith.constant 1.000000e+00 : f32
    %933 = vector.broadcast %cst_184 : f32 to vector<8x16xf32>
    %934 = arith.addf %933, %932 : vector<8x16xf32>
    %935 = arith.divf %933, %934 : vector<8x16xf32>
    %936 = vector.extract_strided_slice %918 {offsets = [0, 32], sizes = [8, 16], strides = [1, 1]} : vector<8x48xf32> to vector<8x16xf32>
    %937 = vector.extract_strided_slice %919 {offsets = [0, 32], sizes = [8, 16], strides = [1, 1]} : vector<8x48xf32> to vector<8x16xf32>
    %938 = vector.broadcast %29 : vector<1x16xf32> to vector<8x16xf32>
    %939 = arith.addf %937, %938 : vector<8x16xf32>
    %940 = arith.mulf %927, %939 : vector<8x16xf32>
    %941 = arith.addf %936, %940 : vector<8x16xf32>
    %942 = math.tanh %941 : vector<8x16xf32>
    %cst_185 = arith.constant 1.000000e+00 : f32
    %943 = vector.broadcast %cst_185 : f32 to vector<8x16xf32>
    %944 = arith.subf %943, %935 : vector<8x16xf32>
    %945 = arith.mulf %944, %942 : vector<8x16xf32>
    %946 = arith.mulf %935, %913 : vector<8x16xf32>
    %947 = arith.addf %945, %946 : vector<8x16xf32>
    %948 = arith.addf %914, %947 : vector<8x16xf32>
    %c27_i32 = arith.constant 27 : i32
    %c8_i32_186 = arith.constant 8 : i32
    %949 = arith.muli %c27_i32, %c8_i32_186 : i32
    %950 = tpu.assume_multiple %949, 8 : i32
    %951 = arith.index_cast %950 : i32 to index
    %c0_187 = arith.constant 0 : index
    %952 = vector.load %arg12[%951, %c0_187] : memref<240x48xf32, #tpu.memory_space<vmem>>, vector<8x48xf32>
    %cst_188 = arith.constant dense<0.000000e+00> : vector<8x48xf32>
    %953 = tpu.matmul %947, %28, %cst_188 {dimension_numbers = #tpu.dot_dimension_numbers<[1], [0], [0], [1], [0, 0, 1, 1], [], []>} : vector<8x16xf32>, vector<16x48xf32>, vector<8x48xf32> -> vector<8x48xf32>
    %954 = vector.extract_strided_slice %952 {offsets = [0, 0], sizes = [8, 16], strides = [1, 1]} : vector<8x48xf32> to vector<8x16xf32>
    %955 = vector.extract_strided_slice %953 {offsets = [0, 0], sizes = [8, 16], strides = [1, 1]} : vector<8x48xf32> to vector<8x16xf32>
    %956 = arith.addf %954, %955 : vector<8x16xf32>
    %957 = arith.negf %956 : vector<8x16xf32>
    %958 = math.exp %957 : vector<8x16xf32>
    %cst_189 = arith.constant 1.000000e+00 : f32
    %959 = vector.broadcast %cst_189 : f32 to vector<8x16xf32>
    %960 = arith.addf %959, %958 : vector<8x16xf32>
    %961 = arith.divf %959, %960 : vector<8x16xf32>
    %962 = vector.extract_strided_slice %952 {offsets = [0, 16], sizes = [8, 16], strides = [1, 1]} : vector<8x48xf32> to vector<8x16xf32>
    %963 = vector.extract_strided_slice %953 {offsets = [0, 16], sizes = [8, 16], strides = [1, 1]} : vector<8x48xf32> to vector<8x16xf32>
    %964 = arith.addf %962, %963 : vector<8x16xf32>
    %965 = arith.negf %964 : vector<8x16xf32>
    %966 = math.exp %965 : vector<8x16xf32>
    %cst_190 = arith.constant 1.000000e+00 : f32
    %967 = vector.broadcast %cst_190 : f32 to vector<8x16xf32>
    %968 = arith.addf %967, %966 : vector<8x16xf32>
    %969 = arith.divf %967, %968 : vector<8x16xf32>
    %970 = vector.extract_strided_slice %952 {offsets = [0, 32], sizes = [8, 16], strides = [1, 1]} : vector<8x48xf32> to vector<8x16xf32>
    %971 = vector.extract_strided_slice %953 {offsets = [0, 32], sizes = [8, 16], strides = [1, 1]} : vector<8x48xf32> to vector<8x16xf32>
    %972 = vector.broadcast %29 : vector<1x16xf32> to vector<8x16xf32>
    %973 = arith.addf %971, %972 : vector<8x16xf32>
    %974 = arith.mulf %961, %973 : vector<8x16xf32>
    %975 = arith.addf %970, %974 : vector<8x16xf32>
    %976 = math.tanh %975 : vector<8x16xf32>
    %cst_191 = arith.constant 1.000000e+00 : f32
    %977 = vector.broadcast %cst_191 : f32 to vector<8x16xf32>
    %978 = arith.subf %977, %969 : vector<8x16xf32>
    %979 = arith.mulf %978, %976 : vector<8x16xf32>
    %980 = arith.mulf %969, %947 : vector<8x16xf32>
    %981 = arith.addf %979, %980 : vector<8x16xf32>
    %982 = arith.addf %948, %981 : vector<8x16xf32>
    %c28_i32 = arith.constant 28 : i32
    %c8_i32_192 = arith.constant 8 : i32
    %983 = arith.muli %c28_i32, %c8_i32_192 : i32
    %984 = tpu.assume_multiple %983, 8 : i32
    %985 = arith.index_cast %984 : i32 to index
    %c0_193 = arith.constant 0 : index
    %986 = vector.load %arg12[%985, %c0_193] : memref<240x48xf32, #tpu.memory_space<vmem>>, vector<8x48xf32>
    %cst_194 = arith.constant dense<0.000000e+00> : vector<8x48xf32>
    %987 = tpu.matmul %981, %28, %cst_194 {dimension_numbers = #tpu.dot_dimension_numbers<[1], [0], [0], [1], [0, 0, 1, 1], [], []>} : vector<8x16xf32>, vector<16x48xf32>, vector<8x48xf32> -> vector<8x48xf32>
    %988 = vector.extract_strided_slice %986 {offsets = [0, 0], sizes = [8, 16], strides = [1, 1]} : vector<8x48xf32> to vector<8x16xf32>
    %989 = vector.extract_strided_slice %987 {offsets = [0, 0], sizes = [8, 16], strides = [1, 1]} : vector<8x48xf32> to vector<8x16xf32>
    %990 = arith.addf %988, %989 : vector<8x16xf32>
    %991 = arith.negf %990 : vector<8x16xf32>
    %992 = math.exp %991 : vector<8x16xf32>
    %cst_195 = arith.constant 1.000000e+00 : f32
    %993 = vector.broadcast %cst_195 : f32 to vector<8x16xf32>
    %994 = arith.addf %993, %992 : vector<8x16xf32>
    %995 = arith.divf %993, %994 : vector<8x16xf32>
    %996 = vector.extract_strided_slice %986 {offsets = [0, 16], sizes = [8, 16], strides = [1, 1]} : vector<8x48xf32> to vector<8x16xf32>
    %997 = vector.extract_strided_slice %987 {offsets = [0, 16], sizes = [8, 16], strides = [1, 1]} : vector<8x48xf32> to vector<8x16xf32>
    %998 = arith.addf %996, %997 : vector<8x16xf32>
    %999 = arith.negf %998 : vector<8x16xf32>
    %1000 = math.exp %999 : vector<8x16xf32>
    %cst_196 = arith.constant 1.000000e+00 : f32
    %1001 = vector.broadcast %cst_196 : f32 to vector<8x16xf32>
    %1002 = arith.addf %1001, %1000 : vector<8x16xf32>
    %1003 = arith.divf %1001, %1002 : vector<8x16xf32>
    %1004 = vector.extract_strided_slice %986 {offsets = [0, 32], sizes = [8, 16], strides = [1, 1]} : vector<8x48xf32> to vector<8x16xf32>
    %1005 = vector.extract_strided_slice %987 {offsets = [0, 32], sizes = [8, 16], strides = [1, 1]} : vector<8x48xf32> to vector<8x16xf32>
    %1006 = vector.broadcast %29 : vector<1x16xf32> to vector<8x16xf32>
    %1007 = arith.addf %1005, %1006 : vector<8x16xf32>
    %1008 = arith.mulf %995, %1007 : vector<8x16xf32>
    %1009 = arith.addf %1004, %1008 : vector<8x16xf32>
    %1010 = math.tanh %1009 : vector<8x16xf32>
    %cst_197 = arith.constant 1.000000e+00 : f32
    %1011 = vector.broadcast %cst_197 : f32 to vector<8x16xf32>
    %1012 = arith.subf %1011, %1003 : vector<8x16xf32>
    %1013 = arith.mulf %1012, %1010 : vector<8x16xf32>
    %1014 = arith.mulf %1003, %981 : vector<8x16xf32>
    %1015 = arith.addf %1013, %1014 : vector<8x16xf32>
    %1016 = arith.addf %982, %1015 : vector<8x16xf32>
    %c29_i32 = arith.constant 29 : i32
    %c8_i32_198 = arith.constant 8 : i32
    %1017 = arith.muli %c29_i32, %c8_i32_198 : i32
    %1018 = tpu.assume_multiple %1017, 8 : i32
    %1019 = arith.index_cast %1018 : i32 to index
    %c0_199 = arith.constant 0 : index
    %1020 = vector.load %arg12[%1019, %c0_199] : memref<240x48xf32, #tpu.memory_space<vmem>>, vector<8x48xf32>
    %cst_200 = arith.constant dense<0.000000e+00> : vector<8x48xf32>
    %1021 = tpu.matmul %1015, %28, %cst_200 {dimension_numbers = #tpu.dot_dimension_numbers<[1], [0], [0], [1], [0, 0, 1, 1], [], []>} : vector<8x16xf32>, vector<16x48xf32>, vector<8x48xf32> -> vector<8x48xf32>
    %1022 = vector.extract_strided_slice %1020 {offsets = [0, 0], sizes = [8, 16], strides = [1, 1]} : vector<8x48xf32> to vector<8x16xf32>
    %1023 = vector.extract_strided_slice %1021 {offsets = [0, 0], sizes = [8, 16], strides = [1, 1]} : vector<8x48xf32> to vector<8x16xf32>
    %1024 = arith.addf %1022, %1023 : vector<8x16xf32>
    %1025 = arith.negf %1024 : vector<8x16xf32>
    %1026 = math.exp %1025 : vector<8x16xf32>
    %cst_201 = arith.constant 1.000000e+00 : f32
    %1027 = vector.broadcast %cst_201 : f32 to vector<8x16xf32>
    %1028 = arith.addf %1027, %1026 : vector<8x16xf32>
    %1029 = arith.divf %1027, %1028 : vector<8x16xf32>
    %1030 = vector.extract_strided_slice %1020 {offsets = [0, 16], sizes = [8, 16], strides = [1, 1]} : vector<8x48xf32> to vector<8x16xf32>
    %1031 = vector.extract_strided_slice %1021 {offsets = [0, 16], sizes = [8, 16], strides = [1, 1]} : vector<8x48xf32> to vector<8x16xf32>
    %1032 = arith.addf %1030, %1031 : vector<8x16xf32>
    %1033 = arith.negf %1032 : vector<8x16xf32>
    %1034 = math.exp %1033 : vector<8x16xf32>
    %cst_202 = arith.constant 1.000000e+00 : f32
    %1035 = vector.broadcast %cst_202 : f32 to vector<8x16xf32>
    %1036 = arith.addf %1035, %1034 : vector<8x16xf32>
    %1037 = arith.divf %1035, %1036 : vector<8x16xf32>
    %1038 = vector.extract_strided_slice %1020 {offsets = [0, 32], sizes = [8, 16], strides = [1, 1]} : vector<8x48xf32> to vector<8x16xf32>
    %1039 = vector.extract_strided_slice %1021 {offsets = [0, 32], sizes = [8, 16], strides = [1, 1]} : vector<8x48xf32> to vector<8x16xf32>
    %1040 = vector.broadcast %29 : vector<1x16xf32> to vector<8x16xf32>
    %1041 = arith.addf %1039, %1040 : vector<8x16xf32>
    %1042 = arith.mulf %1029, %1041 : vector<8x16xf32>
    %1043 = arith.addf %1038, %1042 : vector<8x16xf32>
    %1044 = math.tanh %1043 : vector<8x16xf32>
    %cst_203 = arith.constant 1.000000e+00 : f32
    %1045 = vector.broadcast %cst_203 : f32 to vector<8x16xf32>
    %1046 = arith.subf %1045, %1037 : vector<8x16xf32>
    %1047 = arith.mulf %1046, %1044 : vector<8x16xf32>
    %1048 = arith.mulf %1037, %1015 : vector<8x16xf32>
    %1049 = arith.addf %1047, %1048 : vector<8x16xf32>
    %1050 = arith.addf %1016, %1049 : vector<8x16xf32>
    %c30_i32 = arith.constant 30 : i32
    %c0_204 = arith.constant 0 : index
    %c0_205 = arith.constant 0 : index
    %1051 = vector.load %arg9[%c0_204, %c0_205] : memref<32x5xf32, #tpu.memory_space<vmem>>, vector<32x5xf32>
    %1052 = vector.extract_strided_slice %1050 {offsets = [0, 0], sizes = [4, 16], strides = [1, 1]} : vector<8x16xf32> to vector<4x16xf32>
    %cst_206 = arith.constant 0.0333333351 : f32
    %1053 = vector.broadcast %cst_206 : f32 to vector<4x16xf32>
    %1054 = arith.mulf %1052, %1053 : vector<4x16xf32>
    %1055 = vector.extract_strided_slice %1051 {offsets = [0, 0], sizes = [16, 5], strides = [1, 1]} : vector<32x5xf32> to vector<16x5xf32>
    %cst_207 = arith.constant dense<0.000000e+00> : vector<4x5xf32>
    %1056 = tpu.matmul %1054, %1055, %cst_207 {dimension_numbers = #tpu.dot_dimension_numbers<[1], [0], [0], [1], [0, 0, 1, 1], [], []>} : vector<4x16xf32>, vector<16x5xf32>, vector<4x5xf32> -> vector<4x5xf32>
    %1057 = vector.extract_strided_slice %1049 {offsets = [0, 0], sizes = [4, 16], strides = [1, 1]} : vector<8x16xf32> to vector<4x16xf32>
    %1058 = vector.extract_strided_slice %1051 {offsets = [16, 0], sizes = [16, 5], strides = [1, 1]} : vector<32x5xf32> to vector<16x5xf32>
    %cst_208 = arith.constant dense<0.000000e+00> : vector<4x5xf32>
    %1059 = tpu.matmul %1057, %1058, %cst_208 {dimension_numbers = #tpu.dot_dimension_numbers<[1], [0], [0], [1], [0, 0, 1, 1], [], []>} : vector<4x16xf32>, vector<16x5xf32>, vector<4x5xf32> -> vector<4x5xf32>
    %1060 = arith.addf %1056, %1059 : vector<4x5xf32>
    %c0_209 = arith.constant 0 : index
    %c0_210 = arith.constant 0 : index
    %1061 = vector.load %arg10[%c0_209, %c0_210] : memref<1x5xf32, #tpu.memory_space<vmem>>, vector<1x5xf32>
    %1062 = vector.broadcast %1061 : vector<1x5xf32> to vector<4x5xf32>
    %1063 = arith.addf %1060, %1062 : vector<4x5xf32>
    %1064 = arith.addf %1063, %15 : vector<4x5xf32>
    %c0_211 = arith.constant 0 : index
    %c0_212 = arith.constant 0 : index
    %1065 = vector.load %arg11[%c0_211, %c0_212] : memref<4x5xf32, #tpu.memory_space<vmem>>, vector<4x5xf32>
    tpu.vector_store %arg11[%c0_211, %c0_212], %1064 {strides = array<i32>} : memref<4x5xf32, #tpu.memory_space<vmem>>, vector<4x5xf32>,
    return
  }
}

</mosaic_0001>

<llo_original>
// kernel: run_model.1
$region0: #{run_model.1}
  #allocation0 [shape = 'u32[]', space=smem, size = 0x4, offset = 0x4, fixed_abs, tag = 'smem constant byte address 0x4 - core index']
  #allocation1 [shape = 'u32[144,128]{1,0:T(1,128)}', space=vmem, size = 0x12000, scoped, tag = 'internal scratch']
  #allocation2 [shape = 'f32[240,48]{1,0:T(8,128)}', space=vmem, size = 0x1e000, scoped, tag = 'scratch operand']
  #allocation3 [shape = 'f32[1,1]{1,0:T(1,128)S(6)}', space=smem, size = 0x200, scoped, tag = 'scoped memory for run_model.1']
  %s0 = inlined_call_operand.vmem [shape: f32[240,3], index: 0, kind: input, shape index: {}]
  %s1 = inlined_call_operand.vmem [shape: f32[240,18], index: 1, kind: input, shape index: {}]
  %s2 = inlined_call_operand.vmem [shape: f32[4,5,18], index: 2, kind: input, shape index: {}]
  %s3 = inlined_call_operand.vmem [shape: f32[1,1,18], index: 3, kind: input, shape index: {}]
  %s4 = inlined_call_operand.<no memory space> [shape: f32[1,1], index: 4, kind: input, shape index: {}]
  %s5 = inlined_call_operand.vmem [shape: f32[3,48], index: 5, kind: input, shape index: {}]
  %s6 = inlined_call_operand.vmem [shape: f32[1,48], index: 6, kind: input, shape index: {}]
  %s7 = inlined_call_operand.vmem [shape: f32[1,16], index: 7, kind: input, shape index: {}]
  %s8 = inlined_call_operand.vmem [shape: f32[16,48], index: 8, kind: input, shape index: {}]
  %s9 = inlined_call_operand.vmem [shape: f32[32,5], index: 9, kind: input, shape index: {}]
  %s10 = inlined_call_operand.vmem [shape: f32[1,5], index: 10, kind: input, shape index: {}]
  %s11 = inlined_call_operand.hbm [shape: f32[4,5], index: 11, kind: output, shape index: {}]
  %s12 = sld [smem:[#allocation0]]
  $region54: #{run_model.1} parent=0
    _
  %s14 = ssub.s32 1, %s12
  %s15 = scalar_select 0, %s14, %s12
  %16 = sst [smem:[#allocation3]] %s4
  $region1: #{run_model.1} parent=0
    #allocation4 [shape = 'u8[2048]{0}', space=vmem, size = 0x800, scoped, tag = 'output window, operand 0, single buffered']
    #allocation5 [shape = 's32[1]{0}', space=sflag, size = 0x4, scoped, tag = 'scoped memory for run_model.1']
    %17 = vsyncpa [#allocation5], 0
    // Predicated region
    $region2: #{run_model.1} parent=1 // pred_check
      _
    $region3: #{run_model.1} parent=1 // pred_check_branch
      %19 = sbr.rel (0) target = $region5
    $region4: #{run_model.1} parent=1 // pred_region
      _
    $region5: #{run_model.1} parent=1 // pred_fallthru
      _
    // Predicated region
    $region6: #{run_model.1} parent=1 // pred_check
      _
    $region7: #{run_model.1} parent=1 // pred_check_branch
      %21 = sbr.rel (0) target = $region9
    $region8: #{run_model.1} parent=1 // pred_region
      _
    $region9: #{run_model.1} parent=1 // pred_fallthru
      _
    // Predicated region
    $region10: #{run_model.1} parent=1 // pred_check
      _
    $region11: #{run_model.1} parent=1 // pred_check_branch
      %23 = sbr.rel (0) target = $region13
    $region12: #{run_model.1} parent=1 // pred_region
      _
    $region13: #{run_model.1} parent=1 // pred_fallthru
      _
    // Predicated region
    $region14: #{run_model.1} parent=1 // pred_check
      _
    $region15: #{run_model.1} parent=1 // pred_check_branch
      %25 = sbr.rel (0) target = $region17
    $region16: #{run_model.1} parent=1 // pred_region
      _
    $region17: #{run_model.1} parent=1 // pred_fallthru
      _
    // Predicated region
    $region18: #{run_model.1} parent=1 // pred_check
      _
    $region19: #{run_model.1} parent=1 // pred_check_branch
      %27 = sbr.rel (0) target = $region21
    $region20: #{run_model.1} parent=1 // pred_region
      _
    $region21: #{run_model.1} parent=1 // pred_fallthru
      _
    // Predicated region
    $region22: #{run_model.1} parent=1 // pred_check
      _
    $region23: #{run_model.1} parent=1 // pred_check_branch
      %29 = sbr.rel (0) target = $region25
    $region24: #{run_model.1} parent=1 // pred_region
      _
    $region25: #{run_model.1} parent=1 // pred_fallthru
      _
    // Predicated region
    $region26: #{run_model.1} parent=1 // pred_check
      _
    $region27: #{run_model.1} parent=1 // pred_check_branch
      %31 = sbr.rel (0) target = $region29
    $region28: #{run_model.1} parent=1 // pred_region
      _
    $region29: #{run_model.1} parent=1 // pred_fallthru
      _
    // Predicated region
    $region30: #{run_model.1} parent=1 // pred_check
      _
    $region31: #{run_model.1} parent=1 // pred_check_branch
      %33 = sbr.rel (0) target = $region33
    $region32: #{run_model.1} parent=1 // pred_region
      _
    $region33: #{run_model.1} parent=1 // pred_fallthru
      _
    // Predicated region
    $region34: #{run_model.1} parent=1 // pred_check
      _
    $region35: #{run_model.1} parent=1 // pred_check_branch
      %35 = sbr.rel (0) target = $region37
    $region36: #{run_model.1} parent=1 // pred_region
      _
    $region37: #{run_model.1} parent=1 // pred_fallthru
      _
    // Predicated region
    $region38: #{run_model.1} parent=1 // pred_check
      _
    $region39: #{run_model.1} parent=1 // pred_check_branch
      %37 = sbr.rel (0) target = $region41
    $region40: #{run_model.1} parent=1 // pred_region
      _
    $region41: #{run_model.1} parent=1 // pred_fallthru
      _
    // Predicated region
    $region42: #{run_model.1} parent=1 // pred_check
      _
    $region43: #{run_model.1} parent=1 // pred_check_branch
      %39 = sbr.rel (0) target = $region45
    $region44: #{run_model.1} parent=1 // pred_region
      _
    $region45: #{run_model.1} parent=1 // pred_fallthru
      _
    %s40 = sld [smem:[#allocation3]]
    %v41 = vld [vmem:[%s3] sm:$0x1]
    %v42 = vld [vmem:[%s1] sm:$0xff]
    %v43 = vld [vmem:[%s1 + $0x8] sm:$0xff]
    %v44 = vld [vmem:[%s1 + $0x10] sm:$0xff]
    %v45 = vld [vmem:[%s1 + $0x18] sm:$0xff]
    %v46 = vld [vmem:[%s1 + $0x20] sm:$0xff]
    %v47 = vld [vmem:[%s1 + $0x28] sm:$0xff]
    %v48 = vld [vmem:[%s1 + $0x30] sm:$0xff]
    %v49 = vld [vmem:[%s1 + $0x38] sm:$0xff]
    %v50 = vld [vmem:[%s1 + $0x40] sm:$0xff]
    %v51 = vld [vmem:[%s1 + $0x48] sm:$0xff]
    %v52 = vld [vmem:[%s1 + $0x50] sm:$0xff]
    %v53 = vld [vmem:[%s1 + $0x58] sm:$0xff]
    %v54 = vld [vmem:[%s1 + $0x60] sm:$0xff]
    %v55 = vld [vmem:[%s1 + $0x68] sm:$0xff]
    %v56 = vld [vmem:[%s1 + $0x70] sm:$0xff]
    %v57 = vld [vmem:[%s1 + $0x78] sm:$0xff]
    %v58 = vld [vmem:[%s1 + $0x80] sm:$0xff]
    %v59 = vld [vmem:[%s1 + $0x88] sm:$0xff]
    %v60 = vld [vmem:[%s1 + $0x90] sm:$0xff]
    %v61 = vld [vmem:[%s1 + $0x98] sm:$0xff]
    %v62 = vld [vmem:[%s1 + $0xa0] sm:$0xff]
    %v63 = vld [vmem:[%s1 + $0xa8] sm:$0xff]
    %v64 = vld [vmem:[%s1 + $0xb0] sm:$0xff]
    %v65 = vld [vmem:[%s1 + $0xb8] sm:$0xff]
    %v66 = vld [vmem:[%s1 + $0xc0] sm:$0xff]
    %v67 = vld [vmem:[%s1 + $0xc8] sm:$0xff]
    %v68 = vld [vmem:[%s1 + $0xd0] sm:$0xff]
    %v69 = vld [vmem:[%s1 + $0xd8] sm:$0xff]
    %v70 = vld [vmem:[%s1 + $0xe0] sm:$0xff]
    %v71 = vld [vmem:[%s1 + $0xe8] sm:$0xff]
    %v73 = vlaneseq
    %v74 = vshrl.u32 %v73, 7
    %v75 = vsub.s32 0, %v74
    %v76 = vrot.slane %v41, %v75
    %v78 = vmul.f32 %v42, %v76
    %v79 = vmul.f32 %v43, %v76
    %v80 = vmul.f32 %v44, %v76
    %v81 = vmul.f32 %v45, %v76
    %v82 = vmul.f32 %v46, %v76
    %v83 = vmul.f32 %v47, %v76
    %v84 = vmul.f32 %v48, %v76
    %v85 = vmul.f32 %v49, %v76
    %v86 = vmul.f32 %v50, %v76
    %v87 = vmul.f32 %v51, %v76
    %v88 = vmul.f32 %v52, %v76
    %v89 = vmul.f32 %v53, %v76
    %v90 = vmul.f32 %v54, %v76
    %v91 = vmul.f32 %v55, %v76
    %v92 = vmul.f32 %v56, %v76
    %v93 = vmul.f32 %v57, %v76
    %v94 = vmul.f32 %v58, %v76
    %v95 = vmul.f32 %v59, %v76
    %v96 = vmul.f32 %v60, %v76
    %v97 = vmul.f32 %v61, %v76
    %v98 = vmul.f32 %v62, %v76
    %v99 = vmul.f32 %v63, %v76
    %v100 = vmul.f32 %v64, %v76
    %v101 = vmul.f32 %v65, %v76
    %v102 = vmul.f32 %v66, %v76
    %v103 = vmul.f32 %v67, %v76
    %v104 = vmul.f32 %v68, %v76
    %v105 = vmul.f32 %v69, %v76
    %v106 = vmul.f32 %v70, %v76
    %v107 = vmul.f32 %v71, %v76
    %vm108 = vcmask 146432
    %v109 = vsel %vm108, %v78, 0.0
    %110 = vadd.xlane.f32.xlu0 %v109
    %v111 = vpop.xlane.xlu0 %110
    %v112 = vsel %vm108, %v79, 0.0
    %113 = vadd.xlane.f32.xlu0 %v112
    %v114 = vpop.xlane.xlu0 %113
    %v115 = vsel %vm108, %v80, 0.0
    %116 = vadd.xlane.f32.xlu0 %v115
    %v117 = vpop.xlane.xlu0 %116
    %v118 = vsel %vm108, %v81, 0.0
    %119 = vadd.xlane.f32.xlu0 %v118
    %v120 = vpop.xlane.xlu0 %119
    %v121 = vsel %vm108, %v82, 0.0
    %122 = vadd.xlane.f32.xlu0 %v121
    %v123 = vpop.xlane.xlu0 %122
    %v124 = vsel %vm108, %v83, 0.0
    %125 = vadd.xlane.f32.xlu0 %v124
    %v126 = vpop.xlane.xlu0 %125
    %v127 = vsel %vm108, %v84, 0.0
    %128 = vadd.xlane.f32.xlu0 %v127
    %v129 = vpop.xlane.xlu0 %128
    %v130 = vsel %vm108, %v85, 0.0
    %131 = vadd.xlane.f32.xlu0 %v130
    %v132 = vpop.xlane.xlu0 %131
    %v133 = vsel %vm108, %v86, 0.0
    %134 = vadd.xlane.f32.xlu0 %v133
    %v135 = vpop.xlane.xlu0 %134
    %v136 = vsel %vm108, %v87, 0.0
    %137 = vadd.xlane.f32.xlu0 %v136
    %v138 = vpop.xlane.xlu0 %137
    %v139 = vsel %vm108, %v88, 0.0
    %140 = vadd.xlane.f32.xlu0 %v139
    %v141 = vpop.xlane.xlu0 %140
    %v142 = vsel %vm108, %v89, 0.0
    %143 = vadd.xlane.f32.xlu0 %v142
    %v144 = vpop.xlane.xlu0 %143
    %v145 = vsel %vm108, %v90, 0.0
    %146 = vadd.xlane.f32.xlu0 %v145
    %v147 = vpop.xlane.xlu0 %146
    %v148 = vsel %vm108, %v91, 0.0
    %149 = vadd.xlane.f32.xlu0 %v148
    %v150 = vpop.xlane.xlu0 %149
    %v151 = vsel %vm108, %v92, 0.0
    %152 = vadd.xlane.f32.xlu0 %v151
    %v153 = vpop.xlane.xlu0 %152
    %v154 = vsel %vm108, %v93, 0.0
    %155 = vadd.xlane.f32.xlu0 %v154
    %v156 = vpop.xlane.xlu0 %155
    %v157 = vsel %vm108, %v94, 0.0
    %158 = vadd.xlane.f32.xlu0 %v157
    %v159 = vpop.xlane.xlu0 %158
    %v160 = vsel %vm108, %v95, 0.0
    %161 = vadd.xlane.f32.xlu0 %v160
    %v162 = vpop.xlane.xlu0 %161
    %v163 = vsel %vm108, %v96, 0.0
    %164 = vadd.xlane.f32.xlu0 %v163
    %v165 = vpop.xlane.xlu0 %164
    %v166 = vsel %vm108, %v97, 0.0
    %167 = vadd.xlane.f32.xlu0 %v166
    %v168 = vpop.xlane.xlu0 %167
    %v169 = vsel %vm108, %v98, 0.0
    %170 = vadd.xlane.f32.xlu0 %v169
    %v171 = vpop.xlane.xlu0 %170
    %v172 = vsel %vm108, %v99, 0.0
    %173 = vadd.xlane.f32.xlu0 %v172
    %v174 = vpop.xlane.xlu0 %173
    %v175 = vsel %vm108, %v100, 0.0
    %176 = vadd.xlane.f32.xlu0 %v175
    %v177 = vpop.xlane.xlu0 %176
    %v178 = vsel %vm108, %v101, 0.0
    %179 = vadd.xlane.f32.xlu0 %v178
    %v180 = vpop.xlane.xlu0 %179
    %v181 = vsel %vm108, %v102, 0.0
    %182 = vadd.xlane.f32.xlu0 %v181
    %v183 = vpop.xlane.xlu0 %182
    %v184 = vsel %vm108, %v103, 0.0
    %185 = vadd.xlane.f32.xlu0 %v184
    %v186 = vpop.xlane.xlu0 %185
    %v187 = vsel %vm108, %v104, 0.0
    %188 = vadd.xlane.f32.xlu0 %v187
    %v189 = vpop.xlane.xlu0 %188
    %v190 = vsel %vm108, %v105, 0.0
    %191 = vadd.xlane.f32.xlu0 %v190
    %v192 = vpop.xlane.xlu0 %191
    %v193 = vsel %vm108, %v106, 0.0
    %194 = vadd.xlane.f32.xlu0 %v193
    %v195 = vpop.xlane.xlu0 %194
    %v196 = vsel %vm108, %v107, 0.0
    %197 = vadd.xlane.f32.xlu0 %v196
    %v198 = vpop.xlane.xlu0 %197
    %v199 = vstv %s40
    %v200 = vadd.f32 %v111, %v199
    %v201 = vadd.f32 %v114, %v199
    %v202 = vadd.f32 %v117, %v199
    %v203 = vadd.f32 %v120, %v199
    %v204 = vadd.f32 %v123, %v199
    %v205 = vadd.f32 %v126, %v199
    %v206 = vadd.f32 %v129, %v199
    %v207 = vadd.f32 %v132, %v199
    %v208 = vadd.f32 %v135, %v199
    %v209 = vadd.f32 %v138, %v199
    %v210 = vadd.f32 %v141, %v199
    %v211 = vadd.f32 %v144, %v199
    %v212 = vadd.f32 %v147, %v199
    %v213 = vadd.f32 %v150, %v199
    %v214 = vadd.f32 %v153, %v199
    %v215 = vadd.f32 %v156, %v199
    %v216 = vadd.f32 %v159, %v199
    %v217 = vadd.f32 %v162, %v199
    %v218 = vadd.f32 %v165, %v199
    %v219 = vadd.f32 %v168, %v199
    %v220 = vadd.f32 %v171, %v199
    %v221 = vadd.f32 %v174, %v199
    %v222 = vadd.f32 %v177, %v199
    %v223 = vadd.f32 %v180, %v199
    %v224 = vadd.f32 %v183, %v199
    %v225 = vadd.f32 %v186, %v199
    %v226 = vadd.f32 %v189, %v199
    %v227 = vadd.f32 %v192, %v199
    %v228 = vadd.f32 %v195, %v199
    %v229 = vadd.f32 %v198, %v199
    %v230 = vld [vmem:[%s2] sm:$0x1f]
    %v231 = vld [vmem:[%s2 + $0x8] sm:$0x1f]
    %v232 = vld [vmem:[%s2 + $0x10] sm:$0x1f]
    %v233 = vld [vmem:[%s2 + $0x18] sm:$0x1f]
    %v234 = vmul.f32 %v230, %v76
    %v235 = vmul.f32 %v231, %v76
    %v236 = vmul.f32 %v232, %v76
    %v237 = vmul.f32 %v233, %v76
    %vm238 = vcmask 143360
    %v239 = vsel %vm238, %v234, 0.0
    %240 = vadd.xlane.f32.xlu0 %v239
    %v241 = vpop.xlane.xlu0 %240
    %v242 = vsel %vm238, %v235, 0.0
    %243 = vadd.xlane.f32.xlu0 %v242
    %v244 = vpop.xlane.xlu0 %243
    %v245 = vsel %vm238, %v236, 0.0
    %246 = vadd.xlane.f32.xlu0 %v245
    %v247 = vpop.xlane.xlu0 %246
    %v248 = vsel %vm238, %v237, 0.0
    %249 = vadd.xlane.f32.xlu0 %v248
    %v250 = vpop.xlane.xlu0 %249
    %v251 = vadd.f32 %v241, %v199
    %v252 = vadd.f32 %v244, %v199
    %v253 = vadd.f32 %v247, %v199
    %v254 = vadd.f32 %v250, %v199
    %v255 = vld [vmem:[%s5] sm:$0x7]
    %v256 = vld [vmem:[%s0] sm:$0xff]
    %v257 = vld [vmem:[%s0 + $0x8] sm:$0xff]
    %v258 = vld [vmem:[%s0 + $0x10] sm:$0xff]
    %v259 = vld [vmem:[%s0 + $0x18] sm:$0xff]
    %v260 = vld [vmem:[%s0 + $0x20] sm:$0xff]
    %v261 = vld [vmem:[%s0 + $0x28] sm:$0xff]
    %v262 = vld [vmem:[%s0 + $0x30] sm:$0xff]
    %v263 = vld [vmem:[%s0 + $0x38] sm:$0xff]
    %v264 = vld [vmem:[%s0 + $0x40] sm:$0xff]
    %v265 = vld [vmem:[%s0 + $0x48] sm:$0xff]
    %v266 = vld [vmem:[%s0 + $0x50] sm:$0xff]
    %v267 = vld [vmem:[%s0 + $0x58] sm:$0xff]
    %v268 = vld [vmem:[%s0 + $0x60] sm:$0xff]
    %v269 = vld [vmem:[%s0 + $0x68] sm:$0xff]
    %v270 = vld [vmem:[%s0 + $0x70] sm:$0xff]
    %v271 = vld [vmem:[%s0 + $0x78] sm:$0xff]
    %v272 = vld [vmem:[%s0 + $0x80] sm:$0xff]
    %v273 = vld [vmem:[%s0 + $0x88] sm:$0xff]
    %v274 = vld [vmem:[%s0 + $0x90] sm:$0xff]
    %v275 = vld [vmem:[%s0 + $0x98] sm:$0xff]
    %v276 = vld [vmem:[%s0 + $0xa0] sm:$0xff]
    %v277 = vld [vmem:[%s0 + $0xa8] sm:$0xff]
    %v278 = vld [vmem:[%s0 + $0xb0] sm:$0xff]
    %v279 = vld [vmem:[%s0 + $0xb8] sm:$0xff]
    %v280 = vld [vmem:[%s0 + $0xc0] sm:$0xff]
    %v281 = vld [vmem:[%s0 + $0xc8] sm:$0xff]
    %v282 = vld [vmem:[%s0 + $0xd0] sm:$0xff]
    %v283 = vld [vmem:[%s0 + $0xd8] sm:$0xff]
    %v284 = vld [vmem:[%s0 + $0xe0] sm:$0xff]
    %v285 = vld [vmem:[%s0 + $0xe8] sm:$0xff]
    %vm286 = vcmask 23552
    %v288 = vsel %vm286, %v256, 0
    %v291 = vsel %vm286, %v257, 0
    %v294 = vsel %vm286, %v258, 0
    %v297 = vsel %vm286, %v259, 0
    %v300 = vsel %vm286, %v260, 0
    %v303 = vsel %vm286, %v261, 0
    %v306 = vsel %vm286, %v262, 0
    %v309 = vsel %vm286, %v263, 0
    %v312 = vsel %vm286, %v264, 0
    %v315 = vsel %vm286, %v265, 0
    %v318 = vsel %vm286, %v266, 0
    %v321 = vsel %vm286, %v267, 0
    %v324 = vsel %vm286, %v268, 0
    %v327 = vsel %vm286, %v269, 0
    %v330 = vsel %vm286, %v270, 0
    %v333 = vsel %vm286, %v271, 0
    %v336 = vsel %vm286, %v272, 0
    %v339 = vsel %vm286, %v273, 0
    %v342 = vsel %vm286, %v274, 0
    %v345 = vsel %vm286, %v275, 0
    %v348 = vsel %vm286, %v276, 0
    %v351 = vsel %vm286, %v277, 0
    %v354 = vsel %vm286, %v278, 0
    %v357 = vsel %vm286, %v279, 0
    %v360 = vsel %vm286, %v280, 0
    %v363 = vsel %vm286, %v281, 0
    %v366 = vsel %vm286, %v282, 0
    %v369 = vsel %vm286, %v283, 0
    %v372 = vsel %vm286, %v284, 0
    %v375 = vsel %vm286, %v285, 0
    %vm377 = vcmask 1042432
    %v379 = vsel %vm377, %v255, 0
    %381 = vmatprep.subr.mxu0 0.0
    %382 = vmatpush1.msra.mxu0 %v379
    %383 = vmatprep.subr.mxu0 0.0
    %384 = vmatpush1.msra.mxu0 0.0
    %385 = vmatprep.subr.mxu0 0.0
    %386 = vmatpush1.msra.mxu0 0.0
    %387 = vmatprep.subr.mxu0 0.0
    %388 = vmatpush1.msra.mxu0 0.0
    %389 = vmatprep.subr.mxu0 0.0
    %390 = vmatpush1.msra.mxu0 0.0
    %391 = vmatprep.subr.mxu0 0.0
    %392 = vmatpush1.msra.mxu0 0.0
    %393 = vmatprep.subr.mxu0 0.0
    %394 = vmatpush1.msra.mxu0 0.0
    %395 = vmatprep.subr.mxu0 0.0
    %396 = vmatpush1.msra.mxu0 0.0
    %397 = vmatprep.subr.mxu0 0.0
    %398 = vmatpush1.msra.mxu0 0.0
    %399 = vmatprep.subr.mxu0 0.0
    %400 = vmatpush1.msra.mxu0 0.0
    %401 = vmatprep.subr.mxu0 0.0
    %402 = vmatpush1.msra.mxu0 0.0
    %403 = vmatprep.subr.mxu0 0.0
    %404 = vmatpush1.msra.mxu0 0.0
    %405 = vmatprep.subr.mxu0 0.0
    %406 = vmatpush1.msra.mxu0 0.0
    %407 = vmatprep.subr.mxu0 0.0
    %408 = vmatpush1.msra.mxu0 0.0
    %409 = vmatprep.subr.mxu0 0.0
    %410 = vmatpush1.msra.mxu0 0.0
    %411 = vmatprep.subr.mxu0 0.0
    %412 = vmatpush1.msra.mxu0 0.0
    %413 = vmatprep.subr.mxu0 0.0
    %414 = vmatpush1.msra.mxu0 0.0
    %415 = vmatprep.subr.mxu0 0.0
    %416 = vmatpush1.msra.mxu0 0.0
    %417 = vmatprep.subr.mxu0 0.0
    %418 = vmatpush1.msra.mxu0 0.0
    %419 = vmatprep.subr.mxu0 0.0
    %420 = vmatpush1.msra.mxu0 0.0
    %421 = vmatprep.subr.mxu0 0.0
    %422 = vmatpush1.msra.mxu0 0.0
    %423 = vmatprep.subr.mxu0 0.0
    %424 = vmatpush1.msra.mxu0 0.0
    %425 = vmatprep.subr.mxu0 0.0
    %426 = vmatpush1.msra.mxu0 0.0
    %427 = vmatprep.subr.mxu0 0.0
    %428 = vmatpush1.msra.mxu0 0.0
    %429 = vmatprep.subr.mxu0 0.0
    %430 = vmatpush1.msra.mxu0 0.0
    %431 = vmatprep.subr.mxu0 0.0
    %432 = vmatpush1.msra.mxu0 0.0
    %433 = vmatprep.subr.mxu0 0.0
    %434 = vmatpush1.msra.mxu0 0.0
    %435 = vmatprep.subr.mxu0 0.0
    %436 = vmatpush1.msra.mxu0 0.0
    %437 = vmatprep.subr.mxu0 0.0
    %438 = vmatpush1.msra.mxu0 0.0
    %439 = vmatprep.subr.mxu0 0.0
    %440 = vmatpush1.msra.mxu0 0.0
    %441 = vmatprep.subr.mxu0 0.0
    %442 = vmatpush1.msra.mxu0 0.0
    %443 = vmatprep.subr.mxu0 0.0
    %444 = vmatpush1.msra.mxu0 0.0
    %445 = vmatprep.mubr.f32.mxu0 0.0
    %446 = vmatmul.mubr.f32.gmra.mrb[0].mxu0 %v288
    %v447 = vpop.f32.mrb[0].mxu0
    %v448 = vadd.f32 0.0, %v447
    %v449 = vpop.f32.mrb[0].mxu0
    %450 = vmatprep.mubr.f32.mxu0 0.0
    %451 = vmatmul.mubr.f32.gmra.mrb[0].mxu0 %v291
    %v452 = vpop.f32.mrb[0].mxu0
    %v453 = vadd.f32 0.0, %v452
    %v454 = vpop.f32.mrb[0].mxu0
    %455 = vmatprep.mubr.f32.mxu0 0.0
    %456 = vmatmul.mubr.f32.gmra.mrb[0].mxu0 %v294
    %v457 = vpop.f32.mrb[0].mxu0
    %v458 = vadd.f32 0.0, %v457
    %v459 = vpop.f32.mrb[0].mxu0
    %460 = vmatprep.mubr.f32.mxu0 0.0
    %461 = vmatmul.mubr.f32.gmra.mrb[0].mxu0 %v297
    %v462 = vpop.f32.mrb[0].mxu0
    %v463 = vadd.f32 0.0, %v462
    %v464 = vpop.f32.mrb[0].mxu0
    %465 = vmatprep.mubr.f32.mxu0 0.0
    %466 = vmatmul.mubr.f32.gmra.mrb[0].mxu0 %v300
    %v467 = vpop.f32.mrb[0].mxu0
    %v468 = vadd.f32 0.0, %v467
    %v469 = vpop.f32.mrb[0].mxu0
    %470 = vmatprep.mubr.f32.mxu0 0.0
    %471 = vmatmul.mubr.f32.gmra.mrb[0].mxu0 %v303
    %v472 = vpop.f32.mrb[0].mxu0
    %v473 = vadd.f32 0.0, %v472
    %v474 = vpop.f32.mrb[0].mxu0
    %475 = vmatprep.mubr.f32.mxu0 0.0
    %476 = vmatmul.mubr.f32.gmra.mrb[0].mxu0 %v306
    %v477 = vpop.f32.mrb[0].mxu0
    %v478 = vadd.f32 0.0, %v477
    %v479 = vpop.f32.mrb[0].mxu0
    %480 = vmatprep.mubr.f32.mxu0 0.0
    %481 = vmatmul.mubr.f32.gmra.mrb[0].mxu0 %v309
    %v482 = vpop.f32.mrb[0].mxu0
    %v483 = vadd.f32 0.0, %v482
    %v484 = vpop.f32.mrb[0].mxu0
    %485 = vmatprep.mubr.f32.mxu0 0.0
    %486 = vmatmul.mubr.f32.gmra.mrb[0].mxu0 %v312
    %v487 = vpop.f32.mrb[0].mxu0
    %v488 = vadd.f32 0.0, %v487
    %v489 = vpop.f32.mrb[0].mxu0
    %490 = vmatprep.mubr.f32.mxu0 0.0
    %491 = vmatmul.mubr.f32.gmra.mrb[0].mxu0 %v315
    %v492 = vpop.f32.mrb[0].mxu0
    %v493 = vadd.f32 0.0, %v492
    %v494 = vpop.f32.mrb[0].mxu0
    %495 = vmatprep.mubr.f32.mxu0 0.0
    %496 = vmatmul.mubr.f32.gmra.mrb[0].mxu0 %v318
    %v497 = vpop.f32.mrb[0].mxu0
    %v498 = vadd.f32 0.0, %v497
    %v499 = vpop.f32.mrb[0].mxu0
    %500 = vmatprep.mubr.f32.mxu0 0.0
    %501 = vmatmul.mubr.f32.gmra.mrb[0].mxu0 %v321
    %v502 = vpop.f32.mrb[0].mxu0
    %v503 = vadd.f32 0.0, %v502
    %v504 = vpop.f32.mrb[0].mxu0
    %505 = vmatprep.mubr.f32.mxu0 0.0
    %506 = vmatmul.mubr.f32.gmra.mrb[0].mxu0 %v324
    %v507 = vpop.f32.mrb[0].mxu0
    %v508 = vadd.f32 0.0, %v507
    %v509 = vpop.f32.mrb[0].mxu0
    %510 = vmatprep.mubr.f32.mxu0 0.0
    %511 = vmatmul.mubr.f32.gmra.mrb[0].mxu0 %v327
    %v512 = vpop.f32.mrb[0].mxu0
    %v513 = vadd.f32 0.0, %v512
    %v514 = vpop.f32.mrb[0].mxu0
    %515 = vmatprep.mubr.f32.mxu0 0.0
    %516 = vmatmul.mubr.f32.gmra.mrb[0].mxu0 %v330
    %v517 = vpop.f32.mrb[0].mxu0
    %v518 = vadd.f32 0.0, %v517
    %v519 = vpop.f32.mrb[0].mxu0
    %520 = vmatprep.mubr.f32.mxu0 0.0
    %521 = vmatmul.mubr.f32.gmra.mrb[0].mxu0 %v333
    %v522 = vpop.f32.mrb[0].mxu0
    %v523 = vadd.f32 0.0, %v522
    %v524 = vpop.f32.mrb[0].mxu0
    %525 = vmatprep.mubr.f32.mxu0 0.0
    %526 = vmatmul.mubr.f32.gmra.mrb[0].mxu0 %v336
    %v527 = vpop.f32.mrb[0].mxu0
    %v528 = vadd.f32 0.0, %v527
    %v529 = vpop.f32.mrb[0].mxu0
    %530 = vmatprep.mubr.f32.mxu0 0.0
    %531 = vmatmul.mubr.f32.gmra.mrb[0].mxu0 %v339
    %v532 = vpop.f32.mrb[0].mxu0
    %v533 = vadd.f32 0.0, %v532
    %v534 = vpop.f32.mrb[0].mxu0
    %535 = vmatprep.mubr.f32.mxu0 0.0
    %536 = vmatmul.mubr.f32.gmra.mrb[0].mxu0 %v342
    %v537 = vpop.f32.mrb[0].mxu0
    %v538 = vadd.f32 0.0, %v537
    %v539 = vpop.f32.mrb[0].mxu0
    %540 = vmatprep.mubr.f32.mxu0 0.0
    %541 = vmatmul.mubr.f32.gmra.mrb[0].mxu0 %v345
    %v542 = vpop.f32.mrb[0].mxu0
    %v543 = vadd.f32 0.0, %v542
    %v544 = vpop.f32.mrb[0].mxu0
    %545 = vmatprep.mubr.f32.mxu0 0.0
    %546 = vmatmul.mubr.f32.gmra.mrb[0].mxu0 %v348
    %v547 = vpop.f32.mrb[0].mxu0
    %v548 = vadd.f32 0.0, %v547
    %v549 = vpop.f32.mrb[0].mxu0
    %550 = vmatprep.mubr.f32.mxu0 0.0
    %551 = vmatmul.mubr.f32.gmra.mrb[0].mxu0 %v351
    %v552 = vpop.f32.mrb[0].mxu0
    %v553 = vadd.f32 0.0, %v552
    %v554 = vpop.f32.mrb[0].mxu0
    %555 = vmatprep.mubr.f32.mxu0 0.0
    %556 = vmatmul.mubr.f32.gmra.mrb[0].mxu0 %v354
    %v557 = vpop.f32.mrb[0].mxu0
    %v558 = vadd.f32 0.0, %v557
    %v559 = vpop.f32.mrb[0].mxu0
    %560 = vmatprep.mubr.f32.mxu0 0.0
    %561 = vmatmul.mubr.f32.gmra.mrb[0].mxu0 %v357
    %v562 = vpop.f32.mrb[0].mxu0
    %v563 = vadd.f32 0.0, %v562
    %v564 = vpop.f32.mrb[0].mxu0
    %565 = vmatprep.mubr.f32.mxu0 0.0
    %566 = vmatmul.mubr.f32.gmra.mrb[0].mxu0 %v360
    %v567 = vpop.f32.mrb[0].mxu0
    %v568 = vadd.f32 0.0, %v567
    %v569 = vpop.f32.mrb[0].mxu0
    %570 = vmatprep.mubr.f32.mxu0 0.0
    %571 = vmatmul.mubr.f32.gmra.mrb[0].mxu0 %v363
    %v572 = vpop.f32.mrb[0].mxu0
    %v573 = vadd.f32 0.0, %v572
    %v574 = vpop.f32.mrb[0].mxu0
    %575 = vmatprep.mubr.f32.mxu0 0.0
    %576 = vmatmul.mubr.f32.gmra.mrb[0].mxu0 %v366
    %v577 = vpop.f32.mrb[0].mxu0
    %v578 = vadd.f32 0.0, %v577
    %v579 = vpop.f32.mrb[0].mxu0
    %580 = vmatprep.mubr.f32.mxu0 0.0
    %581 = vmatmul.mubr.f32.gmra.mrb[0].mxu0 %v369
    %v582 = vpop.f32.mrb[0].mxu0
    %v583 = vadd.f32 0.0, %v582
    %v584 = vpop.f32.mrb[0].mxu0
    %585 = vmatprep.mubr.f32.mxu0 0.0
    %586 = vmatmul.mubr.f32.gmra.mrb[0].mxu0 %v372
    %v587 = vpop.f32.mrb[0].mxu0
    %v588 = vadd.f32 0.0, %v587
    %v589 = vpop.f32.mrb[0].mxu0
    %590 = vmatprep.mubr.f32.mxu0 0.0
    %591 = vmatmul.mubr.f32.gmra.mrb[0].mxu0 %v375
    %v592 = vpop.f32.mrb[0].mxu0
    %v593 = vadd.f32 0.0, %v592
    %v594 = vpop.f32.mrb[0].mxu0
    %595 = vdwg.mxu0
    %v596 = vlaneseq
    %v597 = vshrl.u32 %v596, 7
    %v598 = vsub.s32 0, %v597
    %v599 = vrot.slane %v255, %v598
    %v600 = vmul.f32 %v200, %v599
    %v601 = vmul.f32 %v201, %v599
    %v602 = vmul.f32 %v202, %v599
    %v603 = vmul.f32 %v203, %v599
    %v604 = vmul.f32 %v204, %v599
    %v605 = vmul.f32 %v205, %v599
    %v606 = vmul.f32 %v206, %v599
    %v607 = vmul.f32 %v207, %v599
    %v608 = vmul.f32 %v208, %v599
    %v609 = vmul.f32 %v209, %v599
    %v610 = vmul.f32 %v210, %v599
    %v611 = vmul.f32 %v211, %v599
    %v612 = vmul.f32 %v212, %v599
    %v613 = vmul.f32 %v213, %v599
    %v614 = vmul.f32 %v214, %v599
    %v615 = vmul.f32 %v215, %v599
    %v616 = vmul.f32 %v216, %v599
    %v617 = vmul.f32 %v217, %v599
    %v618 = vmul.f32 %v218, %v599
    %v619 = vmul.f32 %v219, %v599
    %v620 = vmul.f32 %v220, %v599
    %v621 = vmul.f32 %v221, %v599
    %v622 = vmul.f32 %v222, %v599
    %v623 = vmul.f32 %v223, %v599
    %v624 = vmul.f32 %v224, %v599
    %v625 = vmul.f32 %v225, %v599
    %v626 = vmul.f32 %v226, %v599
    %v627 = vmul.f32 %v227, %v599
    %v628 = vmul.f32 %v228, %v599
    %v629 = vmul.f32 %v229, %v599
    %v630 = vsub.f32 %v448, %v600
    %v631 = vsub.f32 %v453, %v601
    %v632 = vsub.f32 %v458, %v602
    %v633 = vsub.f32 %v463, %v603
    %v634 = vsub.f32 %v468, %v604
    %v635 = vsub.f32 %v473, %v605
    %v636 = vsub.f32 %v478, %v606
    %v637 = vsub.f32 %v483, %v607
    %v638 = vsub.f32 %v488, %v608
    %v639 = vsub.f32 %v493, %v609
    %v640 = vsub.f32 %v498, %v610
    %v641 = vsub.f32 %v503, %v611
    %v642 = vsub.f32 %v508, %v612
    %v643 = vsub.f32 %v513, %v613
    %v644 = vsub.f32 %v518, %v614
    %v645 = vsub.f32 %v523, %v615
    %v646 = vsub.f32 %v528, %v616
    %v647 = vsub.f32 %v533, %v617
    %v648 = vsub.f32 %v538, %v618
    %v649 = vsub.f32 %v543, %v619
    %v650 = vsub.f32 %v548, %v620
    %v651 = vsub.f32 %v553, %v621
    %v652 = vsub.f32 %v558, %v622
    %v653 = vsub.f32 %v563, %v623
    %v654 = vsub.f32 %v568, %v624
    %v655 = vsub.f32 %v573, %v625
    %v656 = vsub.f32 %v578, %v626
    %v657 = vsub.f32 %v583, %v627
    %v658 = vsub.f32 %v588, %v628
    %v659 = vsub.f32 %v593, %v629
    %v660 = vld [vmem:[%s6] sm:$0x1]
    %v662 = vlaneseq
    %v663 = vshrl.u32 %v662, 7
    %v664 = vsub.s32 0, %v663
    %v665 = vrot.slane %v660, %v664
    %v667 = vadd.f32 %v630, %v665
    %v668 = vadd.f32 %v631, %v665
    %v669 = vadd.f32 %v632, %v665
    %v670 = vadd.f32 %v633, %v665
    %v671 = vadd.f32 %v634, %v665
    %v672 = vadd.f32 %v635, %v665
    %v673 = vadd.f32 %v636, %v665
    %v674 = vadd.f32 %v637, %v665
    %v675 = vadd.f32 %v638, %v665
    %v676 = vadd.f32 %v639, %v665
    %v677 = vadd.f32 %v640, %v665
    %v678 = vadd.f32 %v641, %v665
    %v679 = vadd.f32 %v642, %v665
    %v680 = vadd.f32 %v643, %v665
    %v681 = vadd.f32 %v644, %v665
    %v682 = vadd.f32 %v645, %v665
    %v683 = vadd.f32 %v646, %v665
    %v684 = vadd.f32 %v647, %v665
    %v685 = vadd.f32 %v648, %v665
    %v686 = vadd.f32 %v649, %v665
    %v687 = vadd.f32 %v650, %v665
    %v688 = vadd.f32 %v651, %v665
    %v689 = vadd.f32 %v652, %v665
    %v690 = vadd.f32 %v653, %v665
    %v691 = vadd.f32 %v654, %v665
    %v692 = vadd.f32 %v655, %v665
    %v693 = vadd.f32 %v656, %v665
    %v694 = vadd.f32 %v657, %v665
    %v695 = vadd.f32 %v658, %v665
    %v696 = vadd.f32 %v659, %v665
    %vm697 = vcmask 392192
    %698 = vst.msk [vmem:[#allocation2] sm:$0xff] %vm697, %v667
    %699 = vst.msk [vmem:[#allocation2 + $0x8] sm:$0xff] %vm697, %v668
    %700 = vst.msk [vmem:[#allocation2 + $0x10] sm:$0xff] %vm697, %v669
    %701 = vst.msk [vmem:[#allocation2 + $0x18] sm:$0xff] %vm697, %v670
    %702 = vst.msk [vmem:[#allocation2 + $0x20] sm:$0xff] %vm697, %v671
    %703 = vst.msk [vmem:[#allocation2 + $0x28] sm:$0xff] %vm697, %v672
    %704 = vst.msk [vmem:[#allocation2 + $0x30] sm:$0xff] %vm697, %v673
    %705 = vst.msk [vmem:[#allocation2 + $0x38] sm:$0xff] %vm697, %v674
    %706 = vst.msk [vmem:[#allocation2 + $0x40] sm:$0xff] %vm697, %v675
    %707 = vst.msk [vmem:[#allocation2 + $0x48] sm:$0xff] %vm697, %v676
    %708 = vst.msk [vmem:[#allocation2 + $0x50] sm:$0xff] %vm697, %v677
    %709 = vst.msk [vmem:[#allocation2 + $0x58] sm:$0xff] %vm697, %v678
    %710 = vst.msk [vmem:[#allocation2 + $0x60] sm:$0xff] %vm697, %v679
    %711 = vst.msk [vmem:[#allocation2 + $0x68] sm:$0xff] %vm697, %v680
    %712 = vst.msk [vmem:[#allocation2 + $0x70] sm:$0xff] %vm697, %v681
    %713 = vst.msk [vmem:[#allocation2 + $0x78] sm:$0xff] %vm697, %v682
    %714 = vst.msk [vmem:[#allocation2 + $0x80] sm:$0xff] %vm697, %v683
    %715 = vst.msk [vmem:[#allocation2 + $0x88] sm:$0xff] %vm697, %v684
    %716 = vst.msk [vmem:[#allocation2 + $0x90] sm:$0xff] %vm697, %v685
    %717 = vst.msk [vmem:[#allocation2 + $0x98] sm:$0xff] %vm697, %v686
    %718 = vst.msk [vmem:[#allocation2 + $0xa0] sm:$0xff] %vm697, %v687
    %719 = vst.msk [vmem:[#allocation2 + $0xa8] sm:$0xff] %vm697, %v688
    %720 = vst.msk [vmem:[#allocation2 + $0xb0] sm:$0xff] %vm697, %v689
    %721 = vst.msk [vmem:[#allocation2 + $0xb8] sm:$0xff] %vm697, %v690
    %722 = vst.msk [vmem:[#allocation2 + $0xc0] sm:$0xff] %vm697, %v691
    %723 = vst.msk [vmem:[#allocation2 + $0xc8] sm:$0xff] %vm697, %v692
    %724 = vst.msk [vmem:[#allocation2 + $0xd0] sm:$0xff] %vm697, %v693
    %725 = vst.msk [vmem:[#allocation2 + $0xd8] sm:$0xff] %vm697, %v694
    %726 = vst.msk [vmem:[#allocation2 + $0xe0] sm:$0xff] %vm697, %v695
    %727 = vst.msk [vmem:[#allocation2 + $0xe8] sm:$0xff] %vm697, %v696
    %v728 = vld [vmem:[%s8] sm:$0xff]
    %v729 = vld [vmem:[%s8 + $0x8] sm:$0xff]
    %v730 = vld [vmem:[%s7] sm:$0x1]
    %v731 = vld [vmem:[#allocation2] sm:$0xff]
    %vm732 = vcmask 130048
    %v734 = vsel %vm732, 0.0, 0
    %736 = vmatprep.subr.mxu0 0.0
    %737 = vmatpush1.msra.mxu0 %v728
    %738 = vmatprep.subr.mxu0 0.0
    %739 = vmatpush1.msra.mxu0 %v729
    %740 = vmatprep.subr.mxu0 0.0
    %741 = vmatpush1.msra.mxu0 0.0
    %742 = vmatprep.subr.mxu0 0.0
    %743 = vmatpush1.msra.mxu0 0.0
    %744 = vmatprep.subr.mxu0 0.0
    %745 = vmatpush1.msra.mxu0 0.0
    %746 = vmatprep.subr.mxu0 0.0
    %747 = vmatpush1.msra.mxu0 0.0
    %748 = vmatprep.subr.mxu0 0.0
    %749 = vmatpush1.msra.mxu0 0.0
    %750 = vmatprep.subr.mxu0 0.0
    %751 = vmatpush1.msra.mxu0 0.0
    %752 = vmatprep.subr.mxu0 0.0
    %753 = vmatpush1.msra.mxu0 0.0
    %754 = vmatprep.subr.mxu0 0.0
    %755 = vmatpush1.msra.mxu0 0.0
    %756 = vmatprep.subr.mxu0 0.0
    %757 = vmatpush1.msra.mxu0 0.0
    %758 = vmatprep.subr.mxu0 0.0
    %759 = vmatpush1.msra.mxu0 0.0
    %760 = vmatprep.subr.mxu0 0.0
    %761 = vmatpush1.msra.mxu0 0.0
    %762 = vmatprep.subr.mxu0 0.0
    %763 = vmatpush1.msra.mxu0 0.0
    %764 = vmatprep.subr.mxu0 0.0
    %765 = vmatpush1.msra.mxu0 0.0
    %766 = vmatprep.subr.mxu0 0.0
    %767 = vmatpush1.msra.mxu0 0.0
    %768 = vmatprep.subr.mxu0 0.0
    %769 = vmatpush1.msra.mxu0 0.0
    %770 = vmatprep.subr.mxu0 0.0
    %771 = vmatpush1.msra.mxu0 0.0
    %772 = vmatprep.subr.mxu0 0.0
    %773 = vmatpush1.msra.mxu0 0.0
    %774 = vmatprep.subr.mxu0 0.0
    %775 = vmatpush1.msra.mxu0 0.0
    %776 = vmatprep.subr.mxu0 0.0
    %777 = vmatpush1.msra.mxu0 0.0
    %778 = vmatprep.subr.mxu0 0.0
    %779 = vmatpush1.msra.mxu0 0.0
    %780 = vmatprep.subr.mxu0 0.0
    %781 = vmatpush1.msra.mxu0 0.0
    %782 = vmatprep.subr.mxu0 0.0
    %783 = vmatpush1.msra.mxu0 0.0
    %784 = vmatprep.subr.mxu0 0.0
    %785 = vmatpush1.msra.mxu0 0.0
    %786 = vmatprep.subr.mxu0 0.0
    %787 = vmatpush1.msra.mxu0 0.0
    %788 = vmatprep.subr.mxu0 0.0
    %789 = vmatpush1.msra.mxu0 0.0
    %790 = vmatprep.subr.mxu0 0.0
    %791 = vmatpush1.msra.mxu0 0.0
    %792 = vmatprep.subr.mxu0 0.0
    %793 = vmatpush1.msra.mxu0 0.0
    %794 = vmatprep.subr.mxu0 0.0
    %795 = vmatpush1.msra.mxu0 0.0
    %796 = vmatprep.subr.mxu0 0.0
    %797 = vmatpush1.msra.mxu0 0.0
    %798 = vmatprep.subr.mxu0 0.0
    %799 = vmatpush1.msra.mxu0 0.0
    %800 = vmatprep.mubr.f32.mxu0 0.0
    %801 = vmatmul.mubr.f32.gmra.mrb[0].mxu0 %v734
    %v802 = vpop.f32.mrb[0].mxu0
    %v803 = vadd.f32 0.0, %v802
    %v804 = vpop.f32.mrb[0].mxu0
    %805 = vdwg.mxu0
    %v806 = vadd.f32 %v731, %v803
    %v807 = vxor.u32 %v806, 2147483648
    %v808 = vmul.f32 %v807, 1.442695
    %v809 = vpow.pop %v808
    %v810 = vadd.f32 %v809, 1.0
    %v811 = vrcp.pop %v810
    %v812 = vmul.f32 1.0, %v811
    %v814 = vlaneseq
    %v815 = vshrl.u32 %v814, 7
    %v816 = vsub.s32 0, %v815
    %v817 = vrot.slane %v730, %v816
    %818 = vrot.lane.b32.xlu0 %v817, 32
    %v819 = vpop.permute.xlu0 %818
    %v821 = vadd.f32 %v803, %v819
    %823 = vrot.lane.b32.xlu0 %v821, 96
    %v824 = vpop.permute.xlu0 %823
    %v826 = vmul.f32 %v812, %v824
    %828 = vrot.lane.b32.xlu0 %v826, 32
    %v829 = vpop.permute.xlu0 %828
    %v831 = vadd.f32 %v731, %v829
    %v832 = vtanh.pop %v831
    %v833 = vsub.f32 1.0, %v812
    %835 = vrot.lane.b32.xlu0 %v832, 112
    %v836 = vpop.permute.xlu0 %835
    %v838 = vmul.f32 %v833, %v836
    %v839 = vmul.f32 %v812, 0.0
    %v840 = vadd.f32 %v838, %v839
    %v841 = vadd.f32 %v840, 0.0
    %s842 = scalar_lea.vmem [#allocation2], 8
    %v843 = vld [vmem:[%s842] sm:$0xff]
    %845 = vrot.lane.b32.xlu0 %v840, 112
    %v846 = vpop.permute.xlu0 %845
    %v847 = vsel %vm732, %v846, 0
    %849 = vmatprep.subr.mxu0 0.0
    %850 = vmatpush1.msra.mxu0 %v728
    %851 = vmatprep.subr.mxu0 0.0
    %852 = vmatpush1.msra.mxu0 %v729
    %853 = vmatprep.subr.mxu0 0.0
    %854 = vmatpush1.msra.mxu0 0.0
    %855 = vmatprep.subr.mxu0 0.0
    %856 = vmatpush1.msra.mxu0 0.0
    %857 = vmatprep.subr.mxu0 0.0
    %858 = vmatpush1.msra.mxu0 0.0
    %859 = vmatprep.subr.mxu0 0.0
    %860 = vmatpush1.msra.mxu0 0.0
    %861 = vmatprep.subr.mxu0 0.0
    %862 = vmatpush1.msra.mxu0 0.0
    %863 = vmatprep.subr.mxu0 0.0
    %864 = vmatpush1.msra.mxu0 0.0
    %865 = vmatprep.subr.mxu0 0.0
    %866 = vmatpush1.msra.mxu0 0.0
    %867 = vmatprep.subr.mxu0 0.0
    %868 = vmatpush1.msra.mxu0 0.0
    %869 = vmatprep.subr.mxu0 0.0
    %870 = vmatpush1.msra.mxu0 0.0
    %871 = vmatprep.subr.mxu0 0.0
    %872 = vmatpush1.msra.mxu0 0.0
    %873 = vmatprep.subr.mxu0 0.0
    %874 = vmatpush1.msra.mxu0 0.0
    %875 = vmatprep.subr.mxu0 0.0
    %876 = vmatpush1.msra.mxu0 0.0
    %877 = vmatprep.subr.mxu0 0.0
    %878 = vmatpush1.msra.mxu0 0.0
    %879 = vmatprep.subr.mxu0 0.0
    %880 = vmatpush1.msra.mxu0 0.0
    %881 = vmatprep.subr.mxu0 0.0
    %882 = vmatpush1.msra.mxu0 0.0
    %883 = vmatprep.subr.mxu0 0.0
    %884 = vmatpush1.msra.mxu0 0.0
    %885 = vmatprep.subr.mxu0 0.0
    %886 = vmatpush1.msra.mxu0 0.0
    %887 = vmatprep.subr.mxu0 0.0
    %888 = vmatpush1.msra.mxu0 0.0
    %889 = vmatprep.subr.mxu0 0.0
    %890 = vmatpush1.msra.mxu0 0.0
    %891 = vmatprep.subr.mxu0 0.0
    %892 = vmatpush1.msra.mxu0 0.0
    %893 = vmatprep.subr.mxu0 0.0
    %894 = vmatpush1.msra.mxu0 0.0
    %895 = vmatprep.subr.mxu0 0.0
    %896 = vmatpush1.msra.mxu0 0.0
    %897 = vmatprep.subr.mxu0 0.0
    %898 = vmatpush1.msra.mxu0 0.0
    %899 = vmatprep.subr.mxu0 0.0
    %900 = vmatpush1.msra.mxu0 0.0
    %901 = vmatprep.subr.mxu0 0.0
    %902 = vmatpush1.msra.mxu0 0.0
    %903 = vmatprep.subr.mxu0 0.0
    %904 = vmatpush1.msra.mxu0 0.0
    %905 = vmatprep.subr.mxu0 0.0
    %906 = vmatpush1.msra.mxu0 0.0
    %907 = vmatprep.subr.mxu0 0.0
    %908 = vmatpush1.msra.mxu0 0.0
    %909 = vmatprep.subr.mxu0 0.0
    %910 = vmatpush1.msra.mxu0 0.0
    %911 = vmatprep.subr.mxu0 0.0
    %912 = vmatpush1.msra.mxu0 0.0
    %913 = vmatprep.mubr.f32.mxu0 0.0
    %914 = vmatmul.mubr.f32.gmra.mrb[0].mxu0 %v847
    %v915 = vpop.f32.mrb[0].mxu0
    %v916 = vadd.f32 0.0, %v915
    %v917 = vpop.f32.mrb[0].mxu0
    %918 = vdwg.mxu0
    %v919 = vadd.f32 %v843, %v916
    %v920 = vxor.u32 %v919, 2147483648
    %v921 = vmul.f32 %v920, 1.442695
    %v922 = vpow.pop %v921
    %v923 = vadd.f32 %v922, 1.0
    %v924 = vrcp.pop %v923
    %v925 = vmul.f32 1.0, %v924
    %v926 = vadd.f32 %v916, %v819
    %928 = vrot.lane.b32.xlu0 %v926, 96
    %v929 = vpop.permute.xlu0 %928
    %v931 = vmul.f32 %v925, %v929
    %933 = vrot.lane.b32.xlu0 %v931, 32
    %v934 = vpop.permute.xlu0 %933
    %v936 = vadd.f32 %v843, %v934
    %v937 = vtanh.pop %v936
    %v938 = vsub.f32 1.0, %v925
    %940 = vrot.lane.b32.xlu0 %v937, 112
    %v941 = vpop.permute.xlu0 %940
    %v943 = vmul.f32 %v938, %v941
    %v944 = vmul.f32 %v925, %v840
    %v945 = vadd.f32 %v943, %v944
    %v946 = vadd.f32 %v841, %v945
    %s947 = scalar_lea.vmem [#allocation2], 16
    %v948 = vld [vmem:[%s947] sm:$0xff]
    %950 = vrot.lane.b32.xlu0 %v945, 112
    %v951 = vpop.permute.xlu0 %950
    %v952 = vsel %vm732, %v951, 0
    %954 = vmatprep.subr.mxu0 0.0
    %955 = vmatpush1.msra.mxu0 %v728
    %956 = vmatprep.subr.mxu0 0.0
    %957 = vmatpush1.msra.mxu0 %v729
    %958 = vmatprep.subr.mxu0 0.0
    %959 = vmatpush1.msra.mxu0 0.0
    %960 = vmatprep.subr.mxu0 0.0
    %961 = vmatpush1.msra.mxu0 0.0
    %962 = vmatprep.subr.mxu0 0.0
    %963 = vmatpush1.msra.mxu0 0.0
    %964 = vmatprep.subr.mxu0 0.0
    %965 = vmatpush1.msra.mxu0 0.0
    %966 = vmatprep.subr.mxu0 0.0
    %967 = vmatpush1.msra.mxu0 0.0
    %968 = vmatprep.subr.mxu0 0.0
    %969 = vmatpush1.msra.mxu0 0.0
    %970 = vmatprep.subr.mxu0 0.0
    %971 = vmatpush1.msra.mxu0 0.0
    %972 = vmatprep.subr.mxu0 0.0
    %973 = vmatpush1.msra.mxu0 0.0
    %974 = vmatprep.subr.mxu0 0.0
    %975 = vmatpush1.msra.mxu0 0.0
    %976 = vmatprep.subr.mxu0 0.0
    %977 = vmatpush1.msra.mxu0 0.0
    %978 = vmatprep.subr.mxu0 0.0
    %979 = vmatpush1.msra.mxu0 0.0
    %980 = vmatprep.subr.mxu0 0.0
    %981 = vmatpush1.msra.mxu0 0.0
    %982 = vmatprep.subr.mxu0 0.0
    %983 = vmatpush1.msra.mxu0 0.0
    %984 = vmatprep.subr.mxu0 0.0
    %985 = vmatpush1.msra.mxu0 0.0
    %986 = vmatprep.subr.mxu0 0.0
    %987 = vmatpush1.msra.mxu0 0.0
    %988 = vmatprep.subr.mxu0 0.0
    %989 = vmatpush1.msra.mxu0 0.0
    %990 = vmatprep.subr.mxu0 0.0
    %991 = vmatpush1.msra.mxu0 0.0
    %992 = vmatprep.subr.mxu0 0.0
    %993 = vmatpush1.msra.mxu0 0.0
    %994 = vmatprep.subr.mxu0 0.0
    %995 = vmatpush1.msra.mxu0 0.0
    %996 = vmatprep.subr.mxu0 0.0
    %997 = vmatpush1.msra.mxu0 0.0
    %998 = vmatprep.subr.mxu0 0.0
    %999 = vmatpush1.msra.mxu0 0.0
    %1000 = vmatprep.subr.mxu0 0.0
    %1001 = vmatpush1.msra.mxu0 0.0
    %1002 = vmatprep.subr.mxu0 0.0
    %1003 = vmatpush1.msra.mxu0 0.0
    %1004 = vmatprep.subr.mxu0 0.0
    %1005 = vmatpush1.msra.mxu0 0.0
    %1006 = vmatprep.subr.mxu0 0.0
    %1007 = vmatpush1.msra.mxu0 0.0
    %1008 = vmatprep.subr.mxu0 0.0
    %1009 = vmatpush1.msra.mxu0 0.0
    %1010 = vmatprep.subr.mxu0 0.0
    %1011 = vmatpush1.msra.mxu0 0.0
    %1012 = vmatprep.subr.mxu0 0.0
    %1013 = vmatpush1.msra.mxu0 0.0
    %1014 = vmatprep.subr.mxu0 0.0
    %1015 = vmatpush1.msra.mxu0 0.0
    %1016 = vmatprep.subr.mxu0 0.0
    %1017 = vmatpush1.msra.mxu0 0.0
    %1018 = vmatprep.mubr.f32.mxu0 0.0
    %1019 = vmatmul.mubr.f32.gmra.mrb[0].mxu0 %v952
    %v1020 = vpop.f32.mrb[0].mxu0
    %v1021 = vadd.f32 0.0, %v1020
    %v1022 = vpop.f32.mrb[0].mxu0
    %1023 = vdwg.mxu0
    %v1024 = vadd.f32 %v948, %v1021
    %v1025 = vxor.u32 %v1024, 2147483648
    %v1026 = vmul.f32 %v1025, 1.442695
    %v1027 = vpow.pop %v1026
    %v1028 = vadd.f32 %v1027, 1.0
    %v1029 = vrcp.pop %v1028
    %v1030 = vmul.f32 1.0, %v1029
    %v1031 = vadd.f32 %v1021, %v819
    %1033 = vrot.lane.b32.xlu0 %v1031, 96
    %v1034 = vpop.permute.xlu0 %1033
    %v1036 = vmul.f32 %v1030, %v1034
    %1038 = vrot.lane.b32.xlu0 %v1036, 32
    %v1039 = vpop.permute.xlu0 %1038
    %v1041 = vadd.f32 %v948, %v1039
    %v1042 = vtanh.pop %v1041
    %v1043 = vsub.f32 1.0, %v1030
    %1045 = vrot.lane.b32.xlu0 %v1042, 112
    %v1046 = vpop.permute.xlu0 %1045
    %v1048 = vmul.f32 %v1043, %v1046
    %v1049 = vmul.f32 %v1030, %v945
    %v1050 = vadd.f32 %v1048, %v1049
    %v1051 = vadd.f32 %v946, %v1050
    %s1052 = scalar_lea.vmem [#allocation2], 24
    %v1053 = vld [vmem:[%s1052] sm:$0xff]
    %1055 = vrot.lane.b32.xlu0 %v1050, 112
    %v1056 = vpop.permute.xlu0 %1055
    %v1057 = vsel %vm732, %v1056, 0
    %1059 = vmatprep.subr.mxu0 0.0
    %1060 = vmatpush1.msra.mxu0 %v728
    %1061 = vmatprep.subr.mxu0 0.0
    %1062 = vmatpush1.msra.mxu0 %v729
    %1063 = vmatprep.subr.mxu0 0.0
    %1064 = vmatpush1.msra.mxu0 0.0
    %1065 = vmatprep.subr.mxu0 0.0
    %1066 = vmatpush1.msra.mxu0 0.0
    %1067 = vmatprep.subr.mxu0 0.0
    %1068 = vmatpush1.msra.mxu0 0.0
    %1069 = vmatprep.subr.mxu0 0.0
    %1070 = vmatpush1.msra.mxu0 0.0
    %1071 = vmatprep.subr.mxu0 0.0
    %1072 = vmatpush1.msra.mxu0 0.0
    %1073 = vmatprep.subr.mxu0 0.0
    %1074 = vmatpush1.msra.mxu0 0.0
    %1075 = vmatprep.subr.mxu0 0.0
    %1076 = vmatpush1.msra.mxu0 0.0
    %1077 = vmatprep.subr.mxu0 0.0
    %1078 = vmatpush1.msra.mxu0 0.0
    %1079 = vmatprep.subr.mxu0 0.0
    %1080 = vmatpush1.msra.mxu0 0.0
    %1081 = vmatprep.subr.mxu0 0.0
    %1082 = vmatpush1.msra.mxu0 0.0
    %1083 = vmatprep.subr.mxu0 0.0
    %1084 = vmatpush1.msra.mxu0 0.0
    %1085 = vmatprep.subr.mxu0 0.0
    %1086 = vmatpush1.msra.mxu0 0.0
    %1087 = vmatprep.subr.mxu0 0.0
    %1088 = vmatpush1.msra.mxu0 0.0
    %1089 = vmatprep.subr.mxu0 0.0
    %1090 = vmatpush1.msra.mxu0 0.0
    %1091 = vmatprep.subr.mxu0 0.0
    %1092 = vmatpush1.msra.mxu0 0.0
    %1093 = vmatprep.subr.mxu0 0.0
    %1094 = vmatpush1.msra.mxu0 0.0
    %1095 = vmatprep.subr.mxu0 0.0
    %1096 = vmatpush1.msra.mxu0 0.0
    %1097 = vmatprep.subr.mxu0 0.0
    %1098 = vmatpush1.msra.mxu0 0.0
    %1099 = vmatprep.subr.mxu0 0.0
    %1100 = vmatpush1.msra.mxu0 0.0
    %1101 = vmatprep.subr.mxu0 0.0
    %1102 = vmatpush1.msra.mxu0 0.0
    %1103 = vmatprep.subr.mxu0 0.0
    %1104 = vmatpush1.msra.mxu0 0.0
    %1105 = vmatprep.subr.mxu0 0.0
    %1106 = vmatpush1.msra.mxu0 0.0
    %1107 = vmatprep.subr.mxu0 0.0
    %1108 = vmatpush1.msra.mxu0 0.0
    %1109 = vmatprep.subr.mxu0 0.0
    %1110 = vmatpush1.msra.mxu0 0.0
    %1111 = vmatprep.subr.mxu0 0.0
    %1112 = vmatpush1.msra.mxu0 0.0
    %1113 = vmatprep.subr.mxu0 0.0
    %1114 = vmatpush1.msra.mxu0 0.0
    %1115 = vmatprep.subr.mxu0 0.0
    %1116 = vmatpush1.msra.mxu0 0.0
    %1117 = vmatprep.subr.mxu0 0.0
    %1118 = vmatpush1.msra.mxu0 0.0
    %1119 = vmatprep.subr.mxu0 0.0
    %1120 = vmatpush1.msra.mxu0 0.0
    %1121 = vmatprep.subr.mxu0 0.0
    %1122 = vmatpush1.msra.mxu0 0.0
    %1123 = vmatprep.mubr.f32.mxu0 0.0
    %1124 = vmatmul.mubr.f32.gmra.mrb[0].mxu0 %v1057
    %v1125 = vpop.f32.mrb[0].mxu0
    %v1126 = vadd.f32 0.0, %v1125
    %v1127 = vpop.f32.mrb[0].mxu0
    %1128 = vdwg.mxu0
    %v1129 = vadd.f32 %v1053, %v1126
    %v1130 = vxor.u32 %v1129, 2147483648
    %v1131 = vmul.f32 %v1130, 1.442695
    %v1132 = vpow.pop %v1131
    %v1133 = vadd.f32 %v1132, 1.0
    %v1134 = vrcp.pop %v1133
    %v1135 = vmul.f32 1.0, %v1134
    %v1136 = vadd.f32 %v1126, %v819
    %1138 = vrot.lane.b32.xlu0 %v1136, 96
    %v1139 = vpop.permute.xlu0 %1138
    %v1141 = vmul.f32 %v1135, %v1139
    %1143 = vrot.lane.b32.xlu0 %v1141, 32
    %v1144 = vpop.permute.xlu0 %1143
    %v1146 = vadd.f32 %v1053, %v1144
    %v1147 = vtanh.pop %v1146
    %v1148 = vsub.f32 1.0, %v1135
    %1150 = vrot.lane.b32.xlu0 %v1147, 112
    %v1151 = vpop.permute.xlu0 %1150
    %v1153 = vmul.f32 %v1148, %v1151
    %v1154 = vmul.f32 %v1135, %v1050
    %v1155 = vadd.f32 %v1153, %v1154
    %v1156 = vadd.f32 %v1051, %v1155
    %s1157 = scalar_lea.vmem [#allocation2], 32
    %v1158 = vld [vmem:[%s1157] sm:$0xff]
    %1160 = vrot.lane.b32.xlu0 %v1155, 112
    %v1161 = vpop.permute.xlu0 %1160
    %v1162 = vsel %vm732, %v1161, 0
    %1164 = vmatprep.subr.mxu0 0.0
    %1165 = vmatpush1.msra.mxu0 %v728
    %1166 = vmatprep.subr.mxu0 0.0
    %1167 = vmatpush1.msra.mxu0 %v729
    %1168 = vmatprep.subr.mxu0 0.0
    %1169 = vmatpush1.msra.mxu0 0.0
    %1170 = vmatprep.subr.mxu0 0.0
    %1171 = vmatpush1.msra.mxu0 0.0
    %1172 = vmatprep.subr.mxu0 0.0
    %1173 = vmatpush1.msra.mxu0 0.0
    %1174 = vmatprep.subr.mxu0 0.0
    %1175 = vmatpush1.msra.mxu0 0.0
    %1176 = vmatprep.subr.mxu0 0.0
    %1177 = vmatpush1.msra.mxu0 0.0
    %1178 = vmatprep.subr.mxu0 0.0
    %1179 = vmatpush1.msra.mxu0 0.0
    %1180 = vmatprep.subr.mxu0 0.0
    %1181 = vmatpush1.msra.mxu0 0.0
    %1182 = vmatprep.subr.mxu0 0.0
    %1183 = vmatpush1.msra.mxu0 0.0
    %1184 = vmatprep.subr.mxu0 0.0
    %1185 = vmatpush1.msra.mxu0 0.0
    %1186 = vmatprep.subr.mxu0 0.0
    %1187 = vmatpush1.msra.mxu0 0.0
    %1188 = vmatprep.subr.mxu0 0.0
    %1189 = vmatpush1.msra.mxu0 0.0
    %1190 = vmatprep.subr.mxu0 0.0
    %1191 = vmatpush1.msra.mxu0 0.0
    %1192 = vmatprep.subr.mxu0 0.0
    %1193 = vmatpush1.msra.mxu0 0.0
    %1194 = vmatprep.subr.mxu0 0.0
    %1195 = vmatpush1.msra.mxu0 0.0
    %1196 = vmatprep.subr.mxu0 0.0
    %1197 = vmatpush1.msra.mxu0 0.0
    %1198 = vmatprep.subr.mxu0 0.0
    %1199 = vmatpush1.msra.mxu0 0.0
    %1200 = vmatprep.subr.mxu0 0.0
    %1201 = vmatpush1.msra.mxu0 0.0
    %1202 = vmatprep.subr.mxu0 0.0
    %1203 = vmatpush1.msra.mxu0 0.0
    %1204 = vmatprep.subr.mxu0 0.0
    %1205 = vmatpush1.msra.mxu0 0.0
    %1206 = vmatprep.subr.mxu0 0.0
    %1207 = vmatpush1.msra.mxu0 0.0
    %1208 = vmatprep.subr.mxu0 0.0
    %1209 = vmatpush1.msra.mxu0 0.0
    %1210 = vmatprep.subr.mxu0 0.0
    %1211 = vmatpush1.msra.mxu0 0.0
    %1212 = vmatprep.subr.mxu0 0.0
    %1213 = vmatpush1.msra.mxu0 0.0
    %1214 = vmatprep.subr.mxu0 0.0
    %1215 = vmatpush1.msra.mxu0 0.0
    %1216 = vmatprep.subr.mxu0 0.0
    %1217 = vmatpush1.msra.mxu0 0.0
    %1218 = vmatprep.subr.mxu0 0.0
    %1219 = vmatpush1.msra.mxu0 0.0
    %1220 = vmatprep.subr.mxu0 0.0
    %1221 = vmatpush1.msra.mxu0 0.0
    %1222 = vmatprep.subr.mxu0 0.0
    %1223 = vmatpush1.msra.mxu0 0.0
    %1224 = vmatprep.subr.mxu0 0.0
    %1225 = vmatpush1.msra.mxu0 0.0
    %1226 = vmatprep.subr.mxu0 0.0
    %1227 = vmatpush1.msra.mxu0 0.0
    %1228 = vmatprep.mubr.f32.mxu0 0.0
    %1229 = vmatmul.mubr.f32.gmra.mrb[0].mxu0 %v1162
    %v1230 = vpop.f32.mrb[0].mxu0
    %v1231 = vadd.f32 0.0, %v1230
    %v1232 = vpop.f32.mrb[0].mxu0
    %1233 = vdwg.mxu0
    %v1234 = vadd.f32 %v1158, %v1231
    %v1235 = vxor.u32 %v1234, 2147483648
    %v1236 = vmul.f32 %v1235, 1.442695
    %v1237 = vpow.pop %v1236
    %v1238 = vadd.f32 %v1237, 1.0
    %v1239 = vrcp.pop %v1238
    %v1240 = vmul.f32 1.0, %v1239
    %v1241 = vadd.f32 %v1231, %v819
    %1243 = vrot.lane.b32.xlu0 %v1241, 96
    %v1244 = vpop.permute.xlu0 %1243
    %v1246 = vmul.f32 %v1240, %v1244
    %1248 = vrot.lane.b32.xlu0 %v1246, 32
    %v1249 = vpop.permute.xlu0 %1248
    %v1251 = vadd.f32 %v1158, %v1249
    %v1252 = vtanh.pop %v1251
    %v1253 = vsub.f32 1.0, %v1240
    %1255 = vrot.lane.b32.xlu0 %v1252, 112
    %v1256 = vpop.permute.xlu0 %1255
    %v1258 = vmul.f32 %v1253, %v1256
    %v1259 = vmul.f32 %v1240, %v1155
    %v1260 = vadd.f32 %v1258, %v1259
    %v1261 = vadd.f32 %v1156, %v1260
    %s1262 = scalar_lea.vmem [#allocation2], 40
    %v1263 = vld [vmem:[%s1262] sm:$0xff]
    %1265 = vrot.lane.b32.xlu0 %v1260, 112
    %v1266 = vpop.permute.xlu0 %1265
    %v1267 = vsel %vm732, %v1266, 0
    %1269 = vmatprep.subr.mxu0 0.0
    %1270 = vmatpush1.msra.mxu0 %v728
    %1271 = vmatprep.subr.mxu0 0.0
    %1272 = vmatpush1.msra.mxu0 %v729
    %1273 = vmatprep.subr.mxu0 0.0
    %1274 = vmatpush1.msra.mxu0 0.0
    %1275 = vmatprep.subr.mxu0 0.0
    %1276 = vmatpush1.msra.mxu0 0.0
    %1277 = vmatprep.subr.mxu0 0.0
    %1278 = vmatpush1.msra.mxu0 0.0
    %1279 = vmatprep.subr.mxu0 0.0
    %1280 = vmatpush1.msra.mxu0 0.0
    %1281 = vmatprep.subr.mxu0 0.0
    %1282 = vmatpush1.msra.mxu0 0.0
    %1283 = vmatprep.subr.mxu0 0.0
    %1284 = vmatpush1.msra.mxu0 0.0
    %1285 = vmatprep.subr.mxu0 0.0
    %1286 = vmatpush1.msra.mxu0 0.0
    %1287 = vmatprep.subr.mxu0 0.0
    %1288 = vmatpush1.msra.mxu0 0.0
    %1289 = vmatprep.subr.mxu0 0.0
    %1290 = vmatpush1.msra.mxu0 0.0
    %1291 = vmatprep.subr.mxu0 0.0
    %1292 = vmatpush1.msra.mxu0 0.0
    %1293 = vmatprep.subr.mxu0 0.0
    %1294 = vmatpush1.msra.mxu0 0.0
    %1295 = vmatprep.subr.mxu0 0.0
    %1296 = vmatpush1.msra.mxu0 0.0
    %1297 = vmatprep.subr.mxu0 0.0
    %1298 = vmatpush1.msra.mxu0 0.0
    %1299 = vmatprep.subr.mxu0 0.0
    %1300 = vmatpush1.msra.mxu0 0.0
    %1301 = vmatprep.subr.mxu0 0.0
    %1302 = vmatpush1.msra.mxu0 0.0
    %1303 = vmatprep.subr.mxu0 0.0
    %1304 = vmatpush1.msra.mxu0 0.0
    %1305 = vmatprep.subr.mxu0 0.0
    %1306 = vmatpush1.msra.mxu0 0.0
    %1307 = vmatprep.subr.mxu0 0.0
    %1308 = vmatpush1.msra.mxu0 0.0
    %1309 = vmatprep.subr.mxu0 0.0
    %1310 = vmatpush1.msra.mxu0 0.0
    %1311 = vmatprep.subr.mxu0 0.0
    %1312 = vmatpush1.msra.mxu0 0.0
    %1313 = vmatprep.subr.mxu0 0.0
    %1314 = vmatpush1.msra.mxu0 0.0
    %1315 = vmatprep.subr.mxu0 0.0
    %1316 = vmatpush1.msra.mxu0 0.0
    %1317 = vmatprep.subr.mxu0 0.0
    %1318 = vmatpush1.msra.mxu0 0.0
    %1319 = vmatprep.subr.mxu0 0.0
    %1320 = vmatpush1.msra.mxu0 0.0
    %1321 = vmatprep.subr.mxu0 0.0
    %1322 = vmatpush1.msra.mxu0 0.0
    %1323 = vmatprep.subr.mxu0 0.0
    %1324 = vmatpush1.msra.mxu0 0.0
    %1325 = vmatprep.subr.mxu0 0.0
    %1326 = vmatpush1.msra.mxu0 0.0
    %1327 = vmatprep.subr.mxu0 0.0
    %1328 = vmatpush1.msra.mxu0 0.0
    %1329 = vmatprep.subr.mxu0 0.0
    %1330 = vmatpush1.msra.mxu0 0.0
    %1331 = vmatprep.subr.mxu0 0.0
    %1332 = vmatpush1.msra.mxu0 0.0
    %1333 = vmatprep.mubr.f32.mxu0 0.0
    %1334 = vmatmul.mubr.f32.gmra.mrb[0].mxu0 %v1267
    %v1335 = vpop.f32.mrb[0].mxu0
    %v1336 = vadd.f32 0.0, %v1335
    %v1337 = vpop.f32.mrb[0].mxu0
    %1338 = vdwg.mxu0
    %v1339 = vadd.f32 %v1263, %v1336
    %v1340 = vxor.u32 %v1339, 2147483648
    %v1341 = vmul.f32 %v1340, 1.442695
    %v1342 = vpow.pop %v1341
    %v1343 = vadd.f32 %v1342, 1.0
    %v1344 = vrcp.pop %v1343
    %v1345 = vmul.f32 1.0, %v1344
    %v1346 = vadd.f32 %v1336, %v819
    %1348 = vrot.lane.b32.xlu0 %v1346, 96
    %v1349 = vpop.permute.xlu0 %1348
    %v1351 = vmul.f32 %v1345, %v1349
    %1353 = vrot.lane.b32.xlu0 %v1351, 32
    %v1354 = vpop.permute.xlu0 %1353
    %v1356 = vadd.f32 %v1263, %v1354
    %v1357 = vtanh.pop %v1356
    %v1358 = vsub.f32 1.0, %v1345
    %1360 = vrot.lane.b32.xlu0 %v1357, 112
    %v1361 = vpop.permute.xlu0 %1360
    %v1363 = vmul.f32 %v1358, %v1361
    %v1364 = vmul.f32 %v1345, %v1260
    %v1365 = vadd.f32 %v1363, %v1364
    %v1366 = vadd.f32 %v1261, %v1365
    %s1367 = scalar_lea.vmem [#allocation2], 48
    %v1368 = vld [vmem:[%s1367] sm:$0xff]
    %1370 = vrot.lane.b32.xlu0 %v1365, 112
    %v1371 = vpop.permute.xlu0 %1370
    %v1372 = vsel %vm732, %v1371, 0
    %1374 = vmatprep.subr.mxu0 0.0
    %1375 = vmatpush1.msra.mxu0 %v728
    %1376 = vmatprep.subr.mxu0 0.0
    %1377 = vmatpush1.msra.mxu0 %v729
    %1378 = vmatprep.subr.mxu0 0.0
    %1379 = vmatpush1.msra.mxu0 0.0
    %1380 = vmatprep.subr.mxu0 0.0
    %1381 = vmatpush1.msra.mxu0 0.0
    %1382 = vmatprep.subr.mxu0 0.0
    %1383 = vmatpush1.msra.mxu0 0.0
    %1384 = vmatprep.subr.mxu0 0.0
    %1385 = vmatpush1.msra.mxu0 0.0
    %1386 = vmatprep.subr.mxu0 0.0
    %1387 = vmatpush1.msra.mxu0 0.0
    %1388 = vmatprep.subr.mxu0 0.0
    %1389 = vmatpush1.msra.mxu0 0.0
    %1390 = vmatprep.subr.mxu0 0.0
    %1391 = vmatpush1.msra.mxu0 0.0
    %1392 = vmatprep.subr.mxu0 0.0
    %1393 = vmatpush1.msra.mxu0 0.0
    %1394 = vmatprep.subr.mxu0 0.0
    %1395 = vmatpush1.msra.mxu0 0.0
    %1396 = vmatprep.subr.mxu0 0.0
    %1397 = vmatpush1.msra.mxu0 0.0
    %1398 = vmatprep.subr.mxu0 0.0
    %1399 = vmatpush1.msra.mxu0 0.0
    %1400 = vmatprep.subr.mxu0 0.0
    %1401 = vmatpush1.msra.mxu0 0.0
    %1402 = vmatprep.subr.mxu0 0.0
    %1403 = vmatpush1.msra.mxu0 0.0
    %1404 = vmatprep.subr.mxu0 0.0
    %1405 = vmatpush1.msra.mxu0 0.0
    %1406 = vmatprep.subr.mxu0 0.0
    %1407 = vmatpush1.msra.mxu0 0.0
    %1408 = vmatprep.subr.mxu0 0.0
    %1409 = vmatpush1.msra.mxu0 0.0
    %1410 = vmatprep.subr.mxu0 0.0
    %1411 = vmatpush1.msra.mxu0 0.0
    %1412 = vmatprep.subr.mxu0 0.0
    %1413 = vmatpush1.msra.mxu0 0.0
    %1414 = vmatprep.subr.mxu0 0.0
    %1415 = vmatpush1.msra.mxu0 0.0
    %1416 = vmatprep.subr.mxu0 0.0
    %1417 = vmatpush1.msra.mxu0 0.0
    %1418 = vmatprep.subr.mxu0 0.0
    %1419 = vmatpush1.msra.mxu0 0.0
    %1420 = vmatprep.subr.mxu0 0.0
    %1421 = vmatpush1.msra.mxu0 0.0
    %1422 = vmatprep.subr.mxu0 0.0
    %1423 = vmatpush1.msra.mxu0 0.0
    %1424 = vmatprep.subr.mxu0 0.0
    %1425 = vmatpush1.msra.mxu0 0.0
    %1426 = vmatprep.subr.mxu0 0.0
    %1427 = vmatpush1.msra.mxu0 0.0
    %1428 = vmatprep.subr.mxu0 0.0
    %1429 = vmatpush1.msra.mxu0 0.0
    %1430 = vmatprep.subr.mxu0 0.0
    %1431 = vmatpush1.msra.mxu0 0.0
    %1432 = vmatprep.subr.mxu0 0.0
    %1433 = vmatpush1.msra.mxu0 0.0
    %1434 = vmatprep.subr.mxu0 0.0
    %1435 = vmatpush1.msra.mxu0 0.0
    %1436 = vmatprep.subr.mxu0 0.0
    %1437 = vmatpush1.msra.mxu0 0.0
    %1438 = vmatprep.mubr.f32.mxu0 0.0
    %1439 = vmatmul.mubr.f32.gmra.mrb[0].mxu0 %v1372
    %v1440 = vpop.f32.mrb[0].mxu0
    %v1441 = vadd.f32 0.0, %v1440
    %v1442 = vpop.f32.mrb[0].mxu0
    %1443 = vdwg.mxu0
    %v1444 = vadd.f32 %v1368, %v1441
    %v1445 = vxor.u32 %v1444, 2147483648
    %v1446 = vmul.f32 %v1445, 1.442695
    %v1447 = vpow.pop %v1446
    %v1448 = vadd.f32 %v1447, 1.0
    %v1449 = vrcp.pop %v1448
    %v1450 = vmul.f32 1.0, %v1449
    %v1451 = vadd.f32 %v1441, %v819
    %1453 = vrot.lane.b32.xlu0 %v1451, 96
    %v1454 = vpop.permute.xlu0 %1453
    %v1456 = vmul.f32 %v1450, %v1454
    %1458 = vrot.lane.b32.xlu0 %v1456, 32
    %v1459 = vpop.permute.xlu0 %1458
    %v1461 = vadd.f32 %v1368, %v1459
    %v1462 = vtanh.pop %v1461
    %v1463 = vsub.f32 1.0, %v1450
    %1465 = vrot.lane.b32.xlu0 %v1462, 112
    %v1466 = vpop.permute.xlu0 %1465
    %v1468 = vmul.f32 %v1463, %v1466
    %v1469 = vmul.f32 %v1450, %v1365
    %v1470 = vadd.f32 %v1468, %v1469
    %v1471 = vadd.f32 %v1366, %v1470
    %s1472 = scalar_lea.vmem [#allocation2], 56
    %v1473 = vld [vmem:[%s1472] sm:$0xff]
    %1475 = vrot.lane.b32.xlu0 %v1470, 112
    %v1476 = vpop.permute.xlu0 %1475
    %v1477 = vsel %vm732, %v1476, 0
    %1479 = vmatprep.subr.mxu0 0.0
    %1480 = vmatpush1.msra.mxu0 %v728
    %1481 = vmatprep.subr.mxu0 0.0
    %1482 = vmatpush1.msra.mxu0 %v729
    %1483 = vmatprep.subr.mxu0 0.0
    %1484 = vmatpush1.msra.mxu0 0.0
    %1485 = vmatprep.subr.mxu0 0.0
    %1486 = vmatpush1.msra.mxu0 0.0
    %1487 = vmatprep.subr.mxu0 0.0
    %1488 = vmatpush1.msra.mxu0 0.0
    %1489 = vmatprep.subr.mxu0 0.0
    %1490 = vmatpush1.msra.mxu0 0.0
    %1491 = vmatprep.subr.mxu0 0.0
    %1492 = vmatpush1.msra.mxu0 0.0
    %1493 = vmatprep.subr.mxu0 0.0
    %1494 = vmatpush1.msra.mxu0 0.0
    %1495 = vmatprep.subr.mxu0 0.0
    %1496 = vmatpush1.msra.mxu0 0.0
    %1497 = vmatprep.subr.mxu0 0.0
    %1498 = vmatpush1.msra.mxu0 0.0
    %1499 = vmatprep.subr.mxu0 0.0
    %1500 = vmatpush1.msra.mxu0 0.0
    %1501 = vmatprep.subr.mxu0 0.0
    %1502 = vmatpush1.msra.mxu0 0.0
    %1503 = vmatprep.subr.mxu0 0.0
    %1504 = vmatpush1.msra.mxu0 0.0
    %1505 = vmatprep.subr.mxu0 0.0
    %1506 = vmatpush1.msra.mxu0 0.0
    %1507 = vmatprep.subr.mxu0 0.0
    %1508 = vmatpush1.msra.mxu0 0.0
    %1509 = vmatprep.subr.mxu0 0.0
    %1510 = vmatpush1.msra.mxu0 0.0
    %1511 = vmatprep.subr.mxu0 0.0
    %1512 = vmatpush1.msra.mxu0 0.0
    %1513 = vmatprep.subr.mxu0 0.0
    %1514 = vmatpush1.msra.mxu0 0.0
    %1515 = vmatprep.subr.mxu0 0.0
    %1516 = vmatpush1.msra.mxu0 0.0
    %1517 = vmatprep.subr.mxu0 0.0
    %1518 = vmatpush1.msra.mxu0 0.0
    %1519 = vmatprep.subr.mxu0 0.0
    %1520 = vmatpush1.msra.mxu0 0.0
    %1521 = vmatprep.subr.mxu0 0.0
    %1522 = vmatpush1.msra.mxu0 0.0
    %1523 = vmatprep.subr.mxu0 0.0
    %1524 = vmatpush1.msra.mxu0 0.0
    %1525 = vmatprep.subr.mxu0 0.0
    %1526 = vmatpush1.msra.mxu0 0.0
    %1527 = vmatprep.subr.mxu0 0.0
    %1528 = vmatpush1.msra.mxu0 0.0
    %1529 = vmatprep.subr.mxu0 0.0
    %1530 = vmatpush1.msra.mxu0 0.0
    %1531 = vmatprep.subr.mxu0 0.0
    %1532 = vmatpush1.msra.mxu0 0.0
    %1533 = vmatprep.subr.mxu0 0.0
    %1534 = vmatpush1.msra.mxu0 0.0
    %1535 = vmatprep.subr.mxu0 0.0
    %1536 = vmatpush1.msra.mxu0 0.0
    %1537 = vmatprep.subr.mxu0 0.0
    %1538 = vmatpush1.msra.mxu0 0.0
    %1539 = vmatprep.subr.mxu0 0.0
    %1540 = vmatpush1.msra.mxu0 0.0
    %1541 = vmatprep.subr.mxu0 0.0
    %1542 = vmatpush1.msra.mxu0 0.0
    %1543 = vmatprep.mubr.f32.mxu0 0.0
    %1544 = vmatmul.mubr.f32.gmra.mrb[0].mxu0 %v1477
    %v1545 = vpop.f32.mrb[0].mxu0
    %v1546 = vadd.f32 0.0, %v1545
    %v1547 = vpop.f32.mrb[0].mxu0
    %1548 = vdwg.mxu0
    %v1549 = vadd.f32 %v1473, %v1546
    %v1550 = vxor.u32 %v1549, 2147483648
    %v1551 = vmul.f32 %v1550, 1.442695
    %v1552 = vpow.pop %v1551
    %v1553 = vadd.f32 %v1552, 1.0
    %v1554 = vrcp.pop %v1553
    %v1555 = vmul.f32 1.0, %v1554
    %v1556 = vadd.f32 %v1546, %v819
    %1558 = vrot.lane.b32.xlu0 %v1556, 96
    %v1559 = vpop.permute.xlu0 %1558
    %v1561 = vmul.f32 %v1555, %v1559
    %1563 = vrot.lane.b32.xlu0 %v1561, 32
    %v1564 = vpop.permute.xlu0 %1563
    %v1566 = vadd.f32 %v1473, %v1564
    %v1567 = vtanh.pop %v1566
    %v1568 = vsub.f32 1.0, %v1555
    %1570 = vrot.lane.b32.xlu0 %v1567, 112
    %v1571 = vpop.permute.xlu0 %1570
    %v1573 = vmul.f32 %v1568, %v1571
    %v1574 = vmul.f32 %v1555, %v1470
    %v1575 = vadd.f32 %v1573, %v1574
    %v1576 = vadd.f32 %v1471, %v1575
    %s1577 = scalar_lea.vmem [#allocation2], 64
    %v1578 = vld [vmem:[%s1577] sm:$0xff]
    %1580 = vrot.lane.b32.xlu0 %v1575, 112
    %v1581 = vpop.permute.xlu0 %1580
    %v1582 = vsel %vm732, %v1581, 0
    %1584 = vmatprep.subr.mxu0 0.0
    %1585 = vmatpush1.msra.mxu0 %v728
    %1586 = vmatprep.subr.mxu0 0.0
    %1587 = vmatpush1.msra.mxu0 %v729
    %1588 = vmatprep.subr.mxu0 0.0
    %1589 = vmatpush1.msra.mxu0 0.0
    %1590 = vmatprep.subr.mxu0 0.0
    %1591 = vmatpush1.msra.mxu0 0.0
    %1592 = vmatprep.subr.mxu0 0.0
    %1593 = vmatpush1.msra.mxu0 0.0
    %1594 = vmatprep.subr.mxu0 0.0
    %1595 = vmatpush1.msra.mxu0 0.0
    %1596 = vmatprep.subr.mxu0 0.0
    %1597 = vmatpush1.msra.mxu0 0.0
    %1598 = vmatprep.subr.mxu0 0.0
    %1599 = vmatpush1.msra.mxu0 0.0
    %1600 = vmatprep.subr.mxu0 0.0
    %1601 = vmatpush1.msra.mxu0 0.0
    %1602 = vmatprep.subr.mxu0 0.0
    %1603 = vmatpush1.msra.mxu0 0.0
    %1604 = vmatprep.subr.mxu0 0.0
    %1605 = vmatpush1.msra.mxu0 0.0
    %1606 = vmatprep.subr.mxu0 0.0
    %1607 = vmatpush1.msra.mxu0 0.0
    %1608 = vmatprep.subr.mxu0 0.0
    %1609 = vmatpush1.msra.mxu0 0.0
    %1610 = vmatprep.subr.mxu0 0.0
    %1611 = vmatpush1.msra.mxu0 0.0
    %1612 = vmatprep.subr.mxu0 0.0
    %1613 = vmatpush1.msra.mxu0 0.0
    %1614 = vmatprep.subr.mxu0 0.0
    %1615 = vmatpush1.msra.mxu0 0.0
    %1616 = vmatprep.subr.mxu0 0.0
    %1617 = vmatpush1.msra.mxu0 0.0
    %1618 = vmatprep.subr.mxu0 0.0
    %1619 = vmatpush1.msra.mxu0 0.0
    %1620 = vmatprep.subr.mxu0 0.0
    %1621 = vmatpush1.msra.mxu0 0.0
    %1622 = vmatprep.subr.mxu0 0.0
    %1623 = vmatpush1.msra.mxu0 0.0
    %1624 = vmatprep.subr.mxu0 0.0
    %1625 = vmatpush1.msra.mxu0 0.0
    %1626 = vmatprep.subr.mxu0 0.0
    %1627 = vmatpush1.msra.mxu0 0.0
    %1628 = vmatprep.subr.mxu0 0.0
    %1629 = vmatpush1.msra.mxu0 0.0
    %1630 = vmatprep.subr.mxu0 0.0
    %1631 = vmatpush1.msra.mxu0 0.0
    %1632 = vmatprep.subr.mxu0 0.0
    %1633 = vmatpush1.msra.mxu0 0.0
    %1634 = vmatprep.subr.mxu0 0.0
    %1635 = vmatpush1.msra.mxu0 0.0
    %1636 = vmatprep.subr.mxu0 0.0
    %1637 = vmatpush1.msra.mxu0 0.0
    %1638 = vmatprep.subr.mxu0 0.0
    %1639 = vmatpush1.msra.mxu0 0.0
    %1640 = vmatprep.subr.mxu0 0.0
    %1641 = vmatpush1.msra.mxu0 0.0
    %1642 = vmatprep.subr.mxu0 0.0
    %1643 = vmatpush1.msra.mxu0 0.0
    %1644 = vmatprep.subr.mxu0 0.0
    %1645 = vmatpush1.msra.mxu0 0.0
    %1646 = vmatprep.subr.mxu0 0.0
    %1647 = vmatpush1.msra.mxu0 0.0
    %1648 = vmatprep.mubr.f32.mxu0 0.0
    %1649 = vmatmul.mubr.f32.gmra.mrb[0].mxu0 %v1582
    %v1650 = vpop.f32.mrb[0].mxu0
    %v1651 = vadd.f32 0.0, %v1650
    %v1652 = vpop.f32.mrb[0].mxu0
    %1653 = vdwg.mxu0
    %v1654 = vadd.f32 %v1578, %v1651
    %v1655 = vxor.u32 %v1654, 2147483648
    %v1656 = vmul.f32 %v1655, 1.442695
    %v1657 = vpow.pop %v1656
    %v1658 = vadd.f32 %v1657, 1.0
    %v1659 = vrcp.pop %v1658
    %v1660 = vmul.f32 1.0, %v1659
    %v1661 = vadd.f32 %v1651, %v819
    %1663 = vrot.lane.b32.xlu0 %v1661, 96
    %v1664 = vpop.permute.xlu0 %1663
    %v1666 = vmul.f32 %v1660, %v1664
    %1668 = vrot.lane.b32.xlu0 %v1666, 32
    %v1669 = vpop.permute.xlu0 %1668
    %v1671 = vadd.f32 %v1578, %v1669
    %v1672 = vtanh.pop %v1671
    %v1673 = vsub.f32 1.0, %v1660
    %1675 = vrot.lane.b32.xlu0 %v1672, 112
    %v1676 = vpop.permute.xlu0 %1675
    %v1678 = vmul.f32 %v1673, %v1676
    %v1679 = vmul.f32 %v1660, %v1575
    %v1680 = vadd.f32 %v1678, %v1679
    %v1681 = vadd.f32 %v1576, %v1680
    %s1682 = scalar_lea.vmem [#allocation2], 72
    %v1683 = vld [vmem:[%s1682] sm:$0xff]
    %1685 = vrot.lane.b32.xlu0 %v1680, 112
    %v1686 = vpop.permute.xlu0 %1685
    %v1687 = vsel %vm732, %v1686, 0
    %1689 = vmatprep.subr.mxu0 0.0
    %1690 = vmatpush1.msra.mxu0 %v728
    %1691 = vmatprep.subr.mxu0 0.0
    %1692 = vmatpush1.msra.mxu0 %v729
    %1693 = vmatprep.subr.mxu0 0.0
    %1694 = vmatpush1.msra.mxu0 0.0
    %1695 = vmatprep.subr.mxu0 0.0
    %1696 = vmatpush1.msra.mxu0 0.0
    %1697 = vmatprep.subr.mxu0 0.0
    %1698 = vmatpush1.msra.mxu0 0.0
    %1699 = vmatprep.subr.mxu0 0.0
    %1700 = vmatpush1.msra.mxu0 0.0
    %1701 = vmatprep.subr.mxu0 0.0
    %1702 = vmatpush1.msra.mxu0 0.0
    %1703 = vmatprep.subr.mxu0 0.0
    %1704 = vmatpush1.msra.mxu0 0.0
    %1705 = vmatprep.subr.mxu0 0.0
    %1706 = vmatpush1.msra.mxu0 0.0
    %1707 = vmatprep.subr.mxu0 0.0
    %1708 = vmatpush1.msra.mxu0 0.0
    %1709 = vmatprep.subr.mxu0 0.0
    %1710 = vmatpush1.msra.mxu0 0.0
    %1711 = vmatprep.subr.mxu0 0.0
    %1712 = vmatpush1.msra.mxu0 0.0
    %1713 = vmatprep.subr.mxu0 0.0
    %1714 = vmatpush1.msra.mxu0 0.0
    %1715 = vmatprep.subr.mxu0 0.0
    %1716 = vmatpush1.msra.mxu0 0.0
    %1717 = vmatprep.subr.mxu0 0.0
    %1718 = vmatpush1.msra.mxu0 0.0
    %1719 = vmatprep.subr.mxu0 0.0
    %1720 = vmatpush1.msra.mxu0 0.0
    %1721 = vmatprep.subr.mxu0 0.0
    %1722 = vmatpush1.msra.mxu0 0.0
    %1723 = vmatprep.subr.mxu0 0.0
    %1724 = vmatpush1.msra.mxu0 0.0
    %1725 = vmatprep.subr.mxu0 0.0
    %1726 = vmatpush1.msra.mxu0 0.0
    %1727 = vmatprep.subr.mxu0 0.0
    %1728 = vmatpush1.msra.mxu0 0.0
    %1729 = vmatprep.subr.mxu0 0.0
    %1730 = vmatpush1.msra.mxu0 0.0
    %1731 = vmatprep.subr.mxu0 0.0
    %1732 = vmatpush1.msra.mxu0 0.0
    %1733 = vmatprep.subr.mxu0 0.0
    %1734 = vmatpush1.msra.mxu0 0.0
    %1735 = vmatprep.subr.mxu0 0.0
    %1736 = vmatpush1.msra.mxu0 0.0
    %1737 = vmatprep.subr.mxu0 0.0
    %1738 = vmatpush1.msra.mxu0 0.0
    %1739 = vmatprep.subr.mxu0 0.0
    %1740 = vmatpush1.msra.mxu0 0.0
    %1741 = vmatprep.subr.mxu0 0.0
    %1742 = vmatpush1.msra.mxu0 0.0
    %1743 = vmatprep.subr.mxu0 0.0
    %1744 = vmatpush1.msra.mxu0 0.0
    %1745 = vmatprep.subr.mxu0 0.0
    %1746 = vmatpush1.msra.mxu0 0.0
    %1747 = vmatprep.subr.mxu0 0.0
    %1748 = vmatpush1.msra.mxu0 0.0
    %1749 = vmatprep.subr.mxu0 0.0
    %1750 = vmatpush1.msra.mxu0 0.0
    %1751 = vmatprep.subr.mxu0 0.0
    %1752 = vmatpush1.msra.mxu0 0.0
    %1753 = vmatprep.mubr.f32.mxu0 0.0
    %1754 = vmatmul.mubr.f32.gmra.mrb[0].mxu0 %v1687
    %v1755 = vpop.f32.mrb[0].mxu0
    %v1756 = vadd.f32 0.0, %v1755
    %v1757 = vpop.f32.mrb[0].mxu0
    %1758 = vdwg.mxu0
    %v1759 = vadd.f32 %v1683, %v1756
    %v1760 = vxor.u32 %v1759, 2147483648
    %v1761 = vmul.f32 %v1760, 1.442695
    %v1762 = vpow.pop %v1761
    %v1763 = vadd.f32 %v1762, 1.0
    %v1764 = vrcp.pop %v1763
    %v1765 = vmul.f32 1.0, %v1764
    %v1766 = vadd.f32 %v1756, %v819
    %1768 = vrot.lane.b32.xlu0 %v1766, 96
    %v1769 = vpop.permute.xlu0 %1768
    %v1771 = vmul.f32 %v1765, %v1769
    %1773 = vrot.lane.b32.xlu0 %v1771, 32
    %v1774 = vpop.permute.xlu0 %1773
    %v1776 = vadd.f32 %v1683, %v1774
    %v1777 = vtanh.pop %v1776
    %v1778 = vsub.f32 1.0, %v1765
    %1780 = vrot.lane.b32.xlu0 %v1777, 112
    %v1781 = vpop.permute.xlu0 %1780
    %v1783 = vmul.f32 %v1778, %v1781
    %v1784 = vmul.f32 %v1765, %v1680
    %v1785 = vadd.f32 %v1783, %v1784
    %v1786 = vadd.f32 %v1681, %v1785
    %s1787 = scalar_lea.vmem [#allocation2], 80
    %v1788 = vld [vmem:[%s1787] sm:$0xff]
    %1790 = vrot.lane.b32.xlu0 %v1785, 112
    %v1791 = vpop.permute.xlu0 %1790
    %v1792 = vsel %vm732, %v1791, 0
    %1794 = vmatprep.subr.mxu0 0.0
    %1795 = vmatpush1.msra.mxu0 %v728
    %1796 = vmatprep.subr.mxu0 0.0
    %1797 = vmatpush1.msra.mxu0 %v729
    %1798 = vmatprep.subr.mxu0 0.0
    %1799 = vmatpush1.msra.mxu0 0.0
    %1800 = vmatprep.subr.mxu0 0.0
    %1801 = vmatpush1.msra.mxu0 0.0
    %1802 = vmatprep.subr.mxu0 0.0
    %1803 = vmatpush1.msra.mxu0 0.0
    %1804 = vmatprep.subr.mxu0 0.0
    %1805 = vmatpush1.msra.mxu0 0.0
    %1806 = vmatprep.subr.mxu0 0.0
    %1807 = vmatpush1.msra.mxu0 0.0
    %1808 = vmatprep.subr.mxu0 0.0
    %1809 = vmatpush1.msra.mxu0 0.0
    %1810 = vmatprep.subr.mxu0 0.0
    %1811 = vmatpush1.msra.mxu0 0.0
    %1812 = vmatprep.subr.mxu0 0.0
    %1813 = vmatpush1.msra.mxu0 0.0
    %1814 = vmatprep.subr.mxu0 0.0
    %1815 = vmatpush1.msra.mxu0 0.0
    %1816 = vmatprep.subr.mxu0 0.0
    %1817 = vmatpush1.msra.mxu0 0.0
    %1818 = vmatprep.subr.mxu0 0.0
    %1819 = vmatpush1.msra.mxu0 0.0
    %1820 = vmatprep.subr.mxu0 0.0
    %1821 = vmatpush1.msra.mxu0 0.0
    %1822 = vmatprep.subr.mxu0 0.0
    %1823 = vmatpush1.msra.mxu0 0.0
    %1824 = vmatprep.subr.mxu0 0.0
    %1825 = vmatpush1.msra.mxu0 0.0
    %1826 = vmatprep.subr.mxu0 0.0
    %1827 = vmatpush1.msra.mxu0 0.0
    %1828 = vmatprep.subr.mxu0 0.0
    %1829 = vmatpush1.msra.mxu0 0.0
    %1830 = vmatprep.subr.mxu0 0.0
    %1831 = vmatpush1.msra.mxu0 0.0
    %1832 = vmatprep.subr.mxu0 0.0
    %1833 = vmatpush1.msra.mxu0 0.0
    %1834 = vmatprep.subr.mxu0 0.0
    %1835 = vmatpush1.msra.mxu0 0.0
    %1836 = vmatprep.subr.mxu0 0.0
    %1837 = vmatpush1.msra.mxu0 0.0
    %1838 = vmatprep.subr.mxu0 0.0
    %1839 = vmatpush1.msra.mxu0 0.0
    %1840 = vmatprep.subr.mxu0 0.0
    %1841 = vmatpush1.msra.mxu0 0.0
    %1842 = vmatprep.subr.mxu0 0.0
    %1843 = vmatpush1.msra.mxu0 0.0
    %1844 = vmatprep.subr.mxu0 0.0
    %1845 = vmatpush1.msra.mxu0 0.0
    %1846 = vmatprep.subr.mxu0 0.0
    %1847 = vmatpush1.msra.mxu0 0.0
    %1848 = vmatprep.subr.mxu0 0.0
    %1849 = vmatpush1.msra.mxu0 0.0
    %1850 = vmatprep.subr.mxu0 0.0
    %1851 = vmatpush1.msra.mxu0 0.0
    %1852 = vmatprep.subr.mxu0 0.0
    %1853 = vmatpush1.msra.mxu0 0.0
    %1854 = vmatprep.subr.mxu0 0.0
    %1855 = vmatpush1.msra.mxu0 0.0
    %1856 = vmatprep.subr.mxu0 0.0
    %1857 = vmatpush1.msra.mxu0 0.0
    %1858 = vmatprep.mubr.f32.mxu0 0.0
    %1859 = vmatmul.mubr.f32.gmra.mrb[0].mxu0 %v1792
    %v1860 = vpop.f32.mrb[0].mxu0
    %v1861 = vadd.f32 0.0, %v1860
    %v1862 = vpop.f32.mrb[0].mxu0
    %1863 = vdwg.mxu0
    %v1864 = vadd.f32 %v1788, %v1861
    %v1865 = vxor.u32 %v1864, 2147483648
    %v1866 = vmul.f32 %v1865, 1.442695
    %v1867 = vpow.pop %v1866
    %v1868 = vadd.f32 %v1867, 1.0
    %v1869 = vrcp.pop %v1868
    %v1870 = vmul.f32 1.0, %v1869
    %v1871 = vadd.f32 %v1861, %v819
    %1873 = vrot.lane.b32.xlu0 %v1871, 96
    %v1874 = vpop.permute.xlu0 %1873
    %v1876 = vmul.f32 %v1870, %v1874
    %1878 = vrot.lane.b32.xlu0 %v1876, 32
    %v1879 = vpop.permute.xlu0 %1878
    %v1881 = vadd.f32 %v1788, %v1879
    %v1882 = vtanh.pop %v1881
    %v1883 = vsub.f32 1.0, %v1870
    %1885 = vrot.lane.b32.xlu0 %v1882, 112
    %v1886 = vpop.permute.xlu0 %1885
    %v1888 = vmul.f32 %v1883, %v1886
    %v1889 = vmul.f32 %v1870, %v1785
    %v1890 = vadd.f32 %v1888, %v1889
    %v1891 = vadd.f32 %v1786, %v1890
    %s1892 = scalar_lea.vmem [#allocation2], 88
    %v1893 = vld [vmem:[%s1892] sm:$0xff]
    %1895 = vrot.lane.b32.xlu0 %v1890, 112
    %v1896 = vpop.permute.xlu0 %1895
    %v1897 = vsel %vm732, %v1896, 0
    %1899 = vmatprep.subr.mxu0 0.0
    %1900 = vmatpush1.msra.mxu0 %v728
    %1901 = vmatprep.subr.mxu0 0.0
    %1902 = vmatpush1.msra.mxu0 %v729
    %1903 = vmatprep.subr.mxu0 0.0
    %1904 = vmatpush1.msra.mxu0 0.0
    %1905 = vmatprep.subr.mxu0 0.0
    %1906 = vmatpush1.msra.mxu0 0.0
    %1907 = vmatprep.subr.mxu0 0.0
    %1908 = vmatpush1.msra.mxu0 0.0
    %1909 = vmatprep.subr.mxu0 0.0
    %1910 = vmatpush1.msra.mxu0 0.0
    %1911 = vmatprep.subr.mxu0 0.0
    %1912 = vmatpush1.msra.mxu0 0.0
    %1913 = vmatprep.subr.mxu0 0.0
    %1914 = vmatpush1.msra.mxu0 0.0
    %1915 = vmatprep.subr.mxu0 0.0
    %1916 = vmatpush1.msra.mxu0 0.0
    %1917 = vmatprep.subr.mxu0 0.0
    %1918 = vmatpush1.msra.mxu0 0.0
    %1919 = vmatprep.subr.mxu0 0.0
    %1920 = vmatpush1.msra.mxu0 0.0
    %1921 = vmatprep.subr.mxu0 0.0
    %1922 = vmatpush1.msra.mxu0 0.0
    %1923 = vmatprep.subr.mxu0 0.0
    %1924 = vmatpush1.msra.mxu0 0.0
    %1925 = vmatprep.subr.mxu0 0.0
    %1926 = vmatpush1.msra.mxu0 0.0
    %1927 = vmatprep.subr.mxu0 0.0
    %1928 = vmatpush1.msra.mxu0 0.0
    %1929 = vmatprep.subr.mxu0 0.0
    %1930 = vmatpush1.msra.mxu0 0.0
    %1931 = vmatprep.subr.mxu0 0.0
    %1932 = vmatpush1.msra.mxu0 0.0
    %1933 = vmatprep.subr.mxu0 0.0
    %1934 = vmatpush1.msra.mxu0 0.0
    %1935 = vmatprep.subr.mxu0 0.0
    %1936 = vmatpush1.msra.mxu0 0.0
    %1937 = vmatprep.subr.mxu0 0.0
    %1938 = vmatpush1.msra.mxu0 0.0
    %1939 = vmatprep.subr.mxu0 0.0
    %1940 = vmatpush1.msra.mxu0 0.0
    %1941 = vmatprep.subr.mxu0 0.0
    %1942 = vmatpush1.msra.mxu0 0.0
    %1943 = vmatprep.subr.mxu0 0.0
    %1944 = vmatpush1.msra.mxu0 0.0
    %1945 = vmatprep.subr.mxu0 0.0
    %1946 = vmatpush1.msra.mxu0 0.0
    %1947 = vmatprep.subr.mxu0 0.0
    %1948 = vmatpush1.msra.mxu0 0.0
    %1949 = vmatprep.subr.mxu0 0.0
    %1950 = vmatpush1.msra.mxu0 0.0
    %1951 = vmatprep.subr.mxu0 0.0
    %1952 = vmatpush1.msra.mxu0 0.0
    %1953 = vmatprep.subr.mxu0 0.0
    %1954 = vmatpush1.msra.mxu0 0.0
    %1955 = vmatprep.subr.mxu0 0.0
    %1956 = vmatpush1.msra.mxu0 0.0
    %1957 = vmatprep.subr.mxu0 0.0
    %1958 = vmatpush1.msra.mxu0 0.0
    %1959 = vmatprep.subr.mxu0 0.0
    %1960 = vmatpush1.msra.mxu0 0.0
    %1961 = vmatprep.subr.mxu0 0.0
    %1962 = vmatpush1.msra.mxu0 0.0
    %1963 = vmatprep.mubr.f32.mxu0 0.0
    %1964 = vmatmul.mubr.f32.gmra.mrb[0].mxu0 %v1897
    %v1965 = vpop.f32.mrb[0].mxu0
    %v1966 = vadd.f32 0.0, %v1965
    %v1967 = vpop.f32.mrb[0].mxu0
    %1968 = vdwg.mxu0
    %v1969 = vadd.f32 %v1893, %v1966
    %v1970 = vxor.u32 %v1969, 2147483648
    %v1971 = vmul.f32 %v1970, 1.442695
    %v1972 = vpow.pop %v1971
    %v1973 = vadd.f32 %v1972, 1.0
    %v1974 = vrcp.pop %v1973
    %v1975 = vmul.f32 1.0, %v1974
    %v1976 = vadd.f32 %v1966, %v819
    %1978 = vrot.lane.b32.xlu0 %v1976, 96
    %v1979 = vpop.permute.xlu0 %1978
    %v1981 = vmul.f32 %v1975, %v1979
    %1983 = vrot.lane.b32.xlu0 %v1981, 32
    %v1984 = vpop.permute.xlu0 %1983
    %v1986 = vadd.f32 %v1893, %v1984
    %v1987 = vtanh.pop %v1986
    %v1988 = vsub.f32 1.0, %v1975
    %1990 = vrot.lane.b32.xlu0 %v1987, 112
    %v1991 = vpop.permute.xlu0 %1990
    %v1993 = vmul.f32 %v1988, %v1991
    %v1994 = vmul.f32 %v1975, %v1890
    %v1995 = vadd.f32 %v1993, %v1994
    %v1996 = vadd.f32 %v1891, %v1995
    %s1997 = scalar_lea.vmem [#allocation2], 96
    %v1998 = vld [vmem:[%s1997] sm:$0xff]
    %2000 = vrot.lane.b32.xlu0 %v1995, 112
    %v2001 = vpop.permute.xlu0 %2000
    %v2002 = vsel %vm732, %v2001, 0
    %2004 = vmatprep.subr.mxu0 0.0
    %2005 = vmatpush1.msra.mxu0 %v728
    %2006 = vmatprep.subr.mxu0 0.0
    %2007 = vmatpush1.msra.mxu0 %v729
    %2008 = vmatprep.subr.mxu0 0.0
    %2009 = vmatpush1.msra.mxu0 0.0
    %2010 = vmatprep.subr.mxu0 0.0
    %2011 = vmatpush1.msra.mxu0 0.0
    %2012 = vmatprep.subr.mxu0 0.0
    %2013 = vmatpush1.msra.mxu0 0.0
    %2014 = vmatprep.subr.mxu0 0.0
    %2015 = vmatpush1.msra.mxu0 0.0
    %2016 = vmatprep.subr.mxu0 0.0
    %2017 = vmatpush1.msra.mxu0 0.0
    %2018 = vmatprep.subr.mxu0 0.0
    %2019 = vmatpush1.msra.mxu0 0.0
    %2020 = vmatprep.subr.mxu0 0.0
    %2021 = vmatpush1.msra.mxu0 0.0
    %2022 = vmatprep.subr.mxu0 0.0
    %2023 = vmatpush1.msra.mxu0 0.0
    %2024 = vmatprep.subr.mxu0 0.0
    %2025 = vmatpush1.msra.mxu0 0.0
    %2026 = vmatprep.subr.mxu0 0.0
    %2027 = vmatpush1.msra.mxu0 0.0
    %2028 = vmatprep.subr.mxu0 0.0
    %2029 = vmatpush1.msra.mxu0 0.0
    %2030 = vmatprep.subr.mxu0 0.0
    %2031 = vmatpush1.msra.mxu0 0.0
    %2032 = vmatprep.subr.mxu0 0.0
    %2033 = vmatpush1.msra.mxu0 0.0
    %2034 = vmatprep.subr.mxu0 0.0
    %2035 = vmatpush1.msra.mxu0 0.0
    %2036 = vmatprep.subr.mxu0 0.0
    %2037 = vmatpush1.msra.mxu0 0.0
    %2038 = vmatprep.subr.mxu0 0.0
    %2039 = vmatpush1.msra.mxu0 0.0
    %2040 = vmatprep.subr.mxu0 0.0
    %2041 = vmatpush1.msra.mxu0 0.0
    %2042 = vmatprep.subr.mxu0 0.0
    %2043 = vmatpush1.msra.mxu0 0.0
    %2044 = vmatprep.subr.mxu0 0.0
    %2045 = vmatpush1.msra.mxu0 0.0
    %2046 = vmatprep.subr.mxu0 0.0
    %2047 = vmatpush1.msra.mxu0 0.0
    %2048 = vmatprep.subr.mxu0 0.0
    %2049 = vmatpush1.msra.mxu0 0.0
    %2050 = vmatprep.subr.mxu0 0.0
    %2051 = vmatpush1.msra.mxu0 0.0
    %2052 = vmatprep.subr.mxu0 0.0
    %2053 = vmatpush1.msra.mxu0 0.0
    %2054 = vmatprep.subr.mxu0 0.0
    %2055 = vmatpush1.msra.mxu0 0.0
    %2056 = vmatprep.subr.mxu0 0.0
    %2057 = vmatpush1.msra.mxu0 0.0
    %2058 = vmatprep.subr.mxu0 0.0
    %2059 = vmatpush1.msra.mxu0 0.0
    %2060 = vmatprep.subr.mxu0 0.0
    %2061 = vmatpush1.msra.mxu0 0.0
    %2062 = vmatprep.subr.mxu0 0.0
    %2063 = vmatpush1.msra.mxu0 0.0
    %2064 = vmatprep.subr.mxu0 0.0
    %2065 = vmatpush1.msra.mxu0 0.0
    %2066 = vmatprep.subr.mxu0 0.0
    %2067 = vmatpush1.msra.mxu0 0.0
    %2068 = vmatprep.mubr.f32.mxu0 0.0
    %2069 = vmatmul.mubr.f32.gmra.mrb[0].mxu0 %v2002
    %v2070 = vpop.f32.mrb[0].mxu0
    %v2071 = vadd.f32 0.0, %v2070
    %v2072 = vpop.f32.mrb[0].mxu0
    %2073 = vdwg.mxu0
    %v2074 = vadd.f32 %v1998, %v2071
    %v2075 = vxor.u32 %v2074, 2147483648
    %v2076 = vmul.f32 %v2075, 1.442695
    %v2077 = vpow.pop %v2076
    %v2078 = vadd.f32 %v2077, 1.0
    %v2079 = vrcp.pop %v2078
    %v2080 = vmul.f32 1.0, %v2079
    %v2081 = vadd.f32 %v2071, %v819
    %2083 = vrot.lane.b32.xlu0 %v2081, 96
    %v2084 = vpop.permute.xlu0 %2083
    %v2086 = vmul.f32 %v2080, %v2084
    %2088 = vrot.lane.b32.xlu0 %v2086, 32
    %v2089 = vpop.permute.xlu0 %2088
    %v2091 = vadd.f32 %v1998, %v2089
    %v2092 = vtanh.pop %v2091
    %v2093 = vsub.f32 1.0, %v2080
    %2095 = vrot.lane.b32.xlu0 %v2092, 112
    %v2096 = vpop.permute.xlu0 %2095
    %v2098 = vmul.f32 %v2093, %v2096
    %v2099 = vmul.f32 %v2080, %v1995
    %v2100 = vadd.f32 %v2098, %v2099
    %v2101 = vadd.f32 %v1996, %v2100
    %s2102 = scalar_lea.vmem [#allocation2], 104
    %v2103 = vld [vmem:[%s2102] sm:$0xff]
    %2105 = vrot.lane.b32.xlu0 %v2100, 112
    %v2106 = vpop.permute.xlu0 %2105
    %v2107 = vsel %vm732, %v2106, 0
    %2109 = vmatprep.subr.mxu0 0.0
    %2110 = vmatpush1.msra.mxu0 %v728
    %2111 = vmatprep.subr.mxu0 0.0
    %2112 = vmatpush1.msra.mxu0 %v729
    %2113 = vmatprep.subr.mxu0 0.0
    %2114 = vmatpush1.msra.mxu0 0.0
    %2115 = vmatprep.subr.mxu0 0.0
    %2116 = vmatpush1.msra.mxu0 0.0
    %2117 = vmatprep.subr.mxu0 0.0
    %2118 = vmatpush1.msra.mxu0 0.0
    %2119 = vmatprep.subr.mxu0 0.0
    %2120 = vmatpush1.msra.mxu0 0.0
    %2121 = vmatprep.subr.mxu0 0.0
    %2122 = vmatpush1.msra.mxu0 0.0
    %2123 = vmatprep.subr.mxu0 0.0
    %2124 = vmatpush1.msra.mxu0 0.0
    %2125 = vmatprep.subr.mxu0 0.0
    %2126 = vmatpush1.msra.mxu0 0.0
    %2127 = vmatprep.subr.mxu0 0.0
    %2128 = vmatpush1.msra.mxu0 0.0
    %2129 = vmatprep.subr.mxu0 0.0
    %2130 = vmatpush1.msra.mxu0 0.0
    %2131 = vmatprep.subr.mxu0 0.0
    %2132 = vmatpush1.msra.mxu0 0.0
    %2133 = vmatprep.subr.mxu0 0.0
    %2134 = vmatpush1.msra.mxu0 0.0
    %2135 = vmatprep.subr.mxu0 0.0
    %2136 = vmatpush1.msra.mxu0 0.0
    %2137 = vmatprep.subr.mxu0 0.0
    %2138 = vmatpush1.msra.mxu0 0.0
    %2139 = vmatprep.subr.mxu0 0.0
    %2140 = vmatpush1.msra.mxu0 0.0
    %2141 = vmatprep.subr.mxu0 0.0
    %2142 = vmatpush1.msra.mxu0 0.0
    %2143 = vmatprep.subr.mxu0 0.0
    %2144 = vmatpush1.msra.mxu0 0.0
    %2145 = vmatprep.subr.mxu0 0.0
    %2146 = vmatpush1.msra.mxu0 0.0
    %2147 = vmatprep.subr.mxu0 0.0
    %2148 = vmatpush1.msra.mxu0 0.0
    %2149 = vmatprep.subr.mxu0 0.0
    %2150 = vmatpush1.msra.mxu0 0.0
    %2151 = vmatprep.subr.mxu0 0.0
    %2152 = vmatpush1.msra.mxu0 0.0
    %2153 = vmatprep.subr.mxu0 0.0
    %2154 = vmatpush1.msra.mxu0 0.0
    %2155 = vmatprep.subr.mxu0 0.0
    %2156 = vmatpush1.msra.mxu0 0.0
    %2157 = vmatprep.subr.mxu0 0.0
    %2158 = vmatpush1.msra.mxu0 0.0
    %2159 = vmatprep.subr.mxu0 0.0
    %2160 = vmatpush1.msra.mxu0 0.0
    %2161 = vmatprep.subr.mxu0 0.0
    %2162 = vmatpush1.msra.mxu0 0.0
    %2163 = vmatprep.subr.mxu0 0.0
    %2164 = vmatpush1.msra.mxu0 0.0
    %2165 = vmatprep.subr.mxu0 0.0
    %2166 = vmatpush1.msra.mxu0 0.0
    %2167 = vmatprep.subr.mxu0 0.0
    %2168 = vmatpush1.msra.mxu0 0.0
    %2169 = vmatprep.subr.mxu0 0.0
    %2170 = vmatpush1.msra.mxu0 0.0
    %2171 = vmatprep.subr.mxu0 0.0
    %2172 = vmatpush1.msra.mxu0 0.0
    %2173 = vmatprep.mubr.f32.mxu0 0.0
    %2174 = vmatmul.mubr.f32.gmra.mrb[0].mxu0 %v2107
    %v2175 = vpop.f32.mrb[0].mxu0
    %v2176 = vadd.f32 0.0, %v2175
    %v2177 = vpop.f32.mrb[0].mxu0
    %2178 = vdwg.mxu0
    %v2179 = vadd.f32 %v2103, %v2176
    %v2180 = vxor.u32 %v2179, 2147483648
    %v2181 = vmul.f32 %v2180, 1.442695
    %v2182 = vpow.pop %v2181
    %v2183 = vadd.f32 %v2182, 1.0
    %v2184 = vrcp.pop %v2183
    %v2185 = vmul.f32 1.0, %v2184
    %v2186 = vadd.f32 %v2176, %v819
    %2188 = vrot.lane.b32.xlu0 %v2186, 96
    %v2189 = vpop.permute.xlu0 %2188
    %v2191 = vmul.f32 %v2185, %v2189
    %2193 = vrot.lane.b32.xlu0 %v2191, 32
    %v2194 = vpop.permute.xlu0 %2193
    %v2196 = vadd.f32 %v2103, %v2194
    %v2197 = vtanh.pop %v2196
    %v2198 = vsub.f32 1.0, %v2185
    %2200 = vrot.lane.b32.xlu0 %v2197, 112
    %v2201 = vpop.permute.xlu0 %2200
    %v2203 = vmul.f32 %v2198, %v2201
    %v2204 = vmul.f32 %v2185, %v2100
    %v2205 = vadd.f32 %v2203, %v2204
    %v2206 = vadd.f32 %v2101, %v2205
    %s2207 = scalar_lea.vmem [#allocation2], 112
    %v2208 = vld [vmem:[%s2207] sm:$0xff]
    %2210 = vrot.lane.b32.xlu0 %v2205, 112
    %v2211 = vpop.permute.xlu0 %2210
    %v2212 = vsel %vm732, %v2211, 0
    %2214 = vmatprep.subr.mxu0 0.0
    %2215 = vmatpush1.msra.mxu0 %v728
    %2216 = vmatprep.subr.mxu0 0.0
    %2217 = vmatpush1.msra.mxu0 %v729
    %2218 = vmatprep.subr.mxu0 0.0
    %2219 = vmatpush1.msra.mxu0 0.0
    %2220 = vmatprep.subr.mxu0 0.0
    %2221 = vmatpush1.msra.mxu0 0.0
    %2222 = vmatprep.subr.mxu0 0.0
    %2223 = vmatpush1.msra.mxu0 0.0
    %2224 = vmatprep.subr.mxu0 0.0
    %2225 = vmatpush1.msra.mxu0 0.0
    %2226 = vmatprep.subr.mxu0 0.0
    %2227 = vmatpush1.msra.mxu0 0.0
    %2228 = vmatprep.subr.mxu0 0.0
    %2229 = vmatpush1.msra.mxu0 0.0
    %2230 = vmatprep.subr.mxu0 0.0
    %2231 = vmatpush1.msra.mxu0 0.0
    %2232 = vmatprep.subr.mxu0 0.0
    %2233 = vmatpush1.msra.mxu0 0.0
    %2234 = vmatprep.subr.mxu0 0.0
    %2235 = vmatpush1.msra.mxu0 0.0
    %2236 = vmatprep.subr.mxu0 0.0
    %2237 = vmatpush1.msra.mxu0 0.0
    %2238 = vmatprep.subr.mxu0 0.0
    %2239 = vmatpush1.msra.mxu0 0.0
    %2240 = vmatprep.subr.mxu0 0.0
    %2241 = vmatpush1.msra.mxu0 0.0
    %2242 = vmatprep.subr.mxu0 0.0
    %2243 = vmatpush1.msra.mxu0 0.0
    %2244 = vmatprep.subr.mxu0 0.0
    %2245 = vmatpush1.msra.mxu0 0.0
    %2246 = vmatprep.subr.mxu0 0.0
    %2247 = vmatpush1.msra.mxu0 0.0
    %2248 = vmatprep.subr.mxu0 0.0
    %2249 = vmatpush1.msra.mxu0 0.0
    %2250 = vmatprep.subr.mxu0 0.0
    %2251 = vmatpush1.msra.mxu0 0.0
    %2252 = vmatprep.subr.mxu0 0.0
    %2253 = vmatpush1.msra.mxu0 0.0
    %2254 = vmatprep.subr.mxu0 0.0
    %2255 = vmatpush1.msra.mxu0 0.0
    %2256 = vmatprep.subr.mxu0 0.0
    %2257 = vmatpush1.msra.mxu0 0.0
    %2258 = vmatprep.subr.mxu0 0.0
    %2259 = vmatpush1.msra.mxu0 0.0
    %2260 = vmatprep.subr.mxu0 0.0
    %2261 = vmatpush1.msra.mxu0 0.0
    %2262 = vmatprep.subr.mxu0 0.0
    %2263 = vmatpush1.msra.mxu0 0.0
    %2264 = vmatprep.subr.mxu0 0.0
    %2265 = vmatpush1.msra.mxu0 0.0
    %2266 = vmatprep.subr.mxu0 0.0
    %2267 = vmatpush1.msra.mxu0 0.0
    %2268 = vmatprep.subr.mxu0 0.0
    %2269 = vmatpush1.msra.mxu0 0.0
    %2270 = vmatprep.subr.mxu0 0.0
    %2271 = vmatpush1.msra.mxu0 0.0
    %2272 = vmatprep.subr.mxu0 0.0
    %2273 = vmatpush1.msra.mxu0 0.0
    %2274 = vmatprep.subr.mxu0 0.0
    %2275 = vmatpush1.msra.mxu0 0.0
    %2276 = vmatprep.subr.mxu0 0.0
    %2277 = vmatpush1.msra.mxu0 0.0
    %2278 = vmatprep.mubr.f32.mxu0 0.0
    %2279 = vmatmul.mubr.f32.gmra.mrb[0].mxu0 %v2212
    %v2280 = vpop.f32.mrb[0].mxu0
    %v2281 = vadd.f32 0.0, %v2280
    %v2282 = vpop.f32.mrb[0].mxu0
    %2283 = vdwg.mxu0
    %v2284 = vadd.f32 %v2208, %v2281
    %v2285 = vxor.u32 %v2284, 2147483648
    %v2286 = vmul.f32 %v2285, 1.442695
    %v2287 = vpow.pop %v2286
    %v2288 = vadd.f32 %v2287, 1.0
    %v2289 = vrcp.pop %v2288
    %v2290 = vmul.f32 1.0, %v2289
    %v2291 = vadd.f32 %v2281, %v819
    %2293 = vrot.lane.b32.xlu0 %v2291, 96
    %v2294 = vpop.permute.xlu0 %2293
    %v2296 = vmul.f32 %v2290, %v2294
    %2298 = vrot.lane.b32.xlu0 %v2296, 32
    %v2299 = vpop.permute.xlu0 %2298
    %v2301 = vadd.f32 %v2208, %v2299
    %v2302 = vtanh.pop %v2301
    %v2303 = vsub.f32 1.0, %v2290
    %2305 = vrot.lane.b32.xlu0 %v2302, 112
    %v2306 = vpop.permute.xlu0 %2305
    %v2308 = vmul.f32 %v2303, %v2306
    %v2309 = vmul.f32 %v2290, %v2205
    %v2310 = vadd.f32 %v2308, %v2309
    %v2311 = vadd.f32 %v2206, %v2310
    %s2312 = scalar_lea.vmem [#allocation2], 120
    %v2313 = vld [vmem:[%s2312] sm:$0xff]
    %2315 = vrot.lane.b32.xlu0 %v2310, 112
    %v2316 = vpop.permute.xlu0 %2315
    %v2317 = vsel %vm732, %v2316, 0
    %2319 = vmatprep.subr.mxu0 0.0
    %2320 = vmatpush1.msra.mxu0 %v728
    %2321 = vmatprep.subr.mxu0 0.0
    %2322 = vmatpush1.msra.mxu0 %v729
    %2323 = vmatprep.subr.mxu0 0.0
    %2324 = vmatpush1.msra.mxu0 0.0
    %2325 = vmatprep.subr.mxu0 0.0
    %2326 = vmatpush1.msra.mxu0 0.0
    %2327 = vmatprep.subr.mxu0 0.0
    %2328 = vmatpush1.msra.mxu0 0.0
    %2329 = vmatprep.subr.mxu0 0.0
    %2330 = vmatpush1.msra.mxu0 0.0
    %2331 = vmatprep.subr.mxu0 0.0
    %2332 = vmatpush1.msra.mxu0 0.0
    %2333 = vmatprep.subr.mxu0 0.0
    %2334 = vmatpush1.msra.mxu0 0.0
    %2335 = vmatprep.subr.mxu0 0.0
    %2336 = vmatpush1.msra.mxu0 0.0
    %2337 = vmatprep.subr.mxu0 0.0
    %2338 = vmatpush1.msra.mxu0 0.0
    %2339 = vmatprep.subr.mxu0 0.0
    %2340 = vmatpush1.msra.mxu0 0.0
    %2341 = vmatprep.subr.mxu0 0.0
    %2342 = vmatpush1.msra.mxu0 0.0
    %2343 = vmatprep.subr.mxu0 0.0
    %2344 = vmatpush1.msra.mxu0 0.0
    %2345 = vmatprep.subr.mxu0 0.0
    %2346 = vmatpush1.msra.mxu0 0.0
    %2347 = vmatprep.subr.mxu0 0.0
    %2348 = vmatpush1.msra.mxu0 0.0
    %2349 = vmatprep.subr.mxu0 0.0
    %2350 = vmatpush1.msra.mxu0 0.0
    %2351 = vmatprep.subr.mxu0 0.0
    %2352 = vmatpush1.msra.mxu0 0.0
    %2353 = vmatprep.subr.mxu0 0.0
    %2354 = vmatpush1.msra.mxu0 0.0
    %2355 = vmatprep.subr.mxu0 0.0
    %2356 = vmatpush1.msra.mxu0 0.0
    %2357 = vmatprep.subr.mxu0 0.0
    %2358 = vmatpush1.msra.mxu0 0.0
    %2359 = vmatprep.subr.mxu0 0.0
    %2360 = vmatpush1.msra.mxu0 0.0
    %2361 = vmatprep.subr.mxu0 0.0
    %2362 = vmatpush1.msra.mxu0 0.0
    %2363 = vmatprep.subr.mxu0 0.0
    %2364 = vmatpush1.msra.mxu0 0.0
    %2365 = vmatprep.subr.mxu0 0.0
    %2366 = vmatpush1.msra.mxu0 0.0
    %2367 = vmatprep.subr.mxu0 0.0
    %2368 = vmatpush1.msra.mxu0 0.0
    %2369 = vmatprep.subr.mxu0 0.0
    %2370 = vmatpush1.msra.mxu0 0.0
    %2371 = vmatprep.subr.mxu0 0.0
    %2372 = vmatpush1.msra.mxu0 0.0
    %2373 = vmatprep.subr.mxu0 0.0
    %2374 = vmatpush1.msra.mxu0 0.0
    %2375 = vmatprep.subr.mxu0 0.0
    %2376 = vmatpush1.msra.mxu0 0.0
    %2377 = vmatprep.subr.mxu0 0.0
    %2378 = vmatpush1.msra.mxu0 0.0
    %2379 = vmatprep.subr.mxu0 0.0
    %2380 = vmatpush1.msra.mxu0 0.0
    %2381 = vmatprep.subr.mxu0 0.0
    %2382 = vmatpush1.msra.mxu0 0.0
    %2383 = vmatprep.mubr.f32.mxu0 0.0
    %2384 = vmatmul.mubr.f32.gmra.mrb[0].mxu0 %v2317
    %v2385 = vpop.f32.mrb[0].mxu0
    %v2386 = vadd.f32 0.0, %v2385
    %v2387 = vpop.f32.mrb[0].mxu0
    %2388 = vdwg.mxu0
    %v2389 = vadd.f32 %v2313, %v2386
    %v2390 = vxor.u32 %v2389, 2147483648
    %v2391 = vmul.f32 %v2390, 1.442695
    %v2392 = vpow.pop %v2391
    %v2393 = vadd.f32 %v2392, 1.0
    %v2394 = vrcp.pop %v2393
    %v2395 = vmul.f32 1.0, %v2394
    %v2396 = vadd.f32 %v2386, %v819
    %2398 = vrot.lane.b32.xlu0 %v2396, 96
    %v2399 = vpop.permute.xlu0 %2398
    %v2401 = vmul.f32 %v2395, %v2399
    %2403 = vrot.lane.b32.xlu0 %v2401, 32
    %v2404 = vpop.permute.xlu0 %2403
    %v2406 = vadd.f32 %v2313, %v2404
    %v2407 = vtanh.pop %v2406
    %v2408 = vsub.f32 1.0, %v2395
    %2410 = vrot.lane.b32.xlu0 %v2407, 112
    %v2411 = vpop.permute.xlu0 %2410
    %v2413 = vmul.f32 %v2408, %v2411
    %v2414 = vmul.f32 %v2395, %v2310
    %v2415 = vadd.f32 %v2413, %v2414
    %v2416 = vadd.f32 %v2311, %v2415
    %s2417 = scalar_lea.vmem [#allocation2], 128
    %v2418 = vld [vmem:[%s2417] sm:$0xff]
    %2420 = vrot.lane.b32.xlu0 %v2415, 112
    %v2421 = vpop.permute.xlu0 %2420
    %v2422 = vsel %vm732, %v2421, 0
    %2424 = vmatprep.subr.mxu0 0.0
    %2425 = vmatpush1.msra.mxu0 %v728
    %2426 = vmatprep.subr.mxu0 0.0
    %2427 = vmatpush1.msra.mxu0 %v729
    %2428 = vmatprep.subr.mxu0 0.0
    %2429 = vmatpush1.msra.mxu0 0.0
    %2430 = vmatprep.subr.mxu0 0.0
    %2431 = vmatpush1.msra.mxu0 0.0
    %2432 = vmatprep.subr.mxu0 0.0
    %2433 = vmatpush1.msra.mxu0 0.0
    %2434 = vmatprep.subr.mxu0 0.0
    %2435 = vmatpush1.msra.mxu0 0.0
    %2436 = vmatprep.subr.mxu0 0.0
    %2437 = vmatpush1.msra.mxu0 0.0
    %2438 = vmatprep.subr.mxu0 0.0
    %2439 = vmatpush1.msra.mxu0 0.0
    %2440 = vmatprep.subr.mxu0 0.0
    %2441 = vmatpush1.msra.mxu0 0.0
    %2442 = vmatprep.subr.mxu0 0.0
    %2443 = vmatpush1.msra.mxu0 0.0
    %2444 = vmatprep.subr.mxu0 0.0
    %2445 = vmatpush1.msra.mxu0 0.0
    %2446 = vmatprep.subr.mxu0 0.0
    %2447 = vmatpush1.msra.mxu0 0.0
    %2448 = vmatprep.subr.mxu0 0.0
    %2449 = vmatpush1.msra.mxu0 0.0
    %2450 = vmatprep.subr.mxu0 0.0
    %2451 = vmatpush1.msra.mxu0 0.0
    %2452 = vmatprep.subr.mxu0 0.0
    %2453 = vmatpush1.msra.mxu0 0.0
    %2454 = vmatprep.subr.mxu0 0.0
    %2455 = vmatpush1.msra.mxu0 0.0
    %2456 = vmatprep.subr.mxu0 0.0
    %2457 = vmatpush1.msra.mxu0 0.0
    %2458 = vmatprep.subr.mxu0 0.0
    %2459 = vmatpush1.msra.mxu0 0.0
    %2460 = vmatprep.subr.mxu0 0.0
    %2461 = vmatpush1.msra.mxu0 0.0
    %2462 = vmatprep.subr.mxu0 0.0
    %2463 = vmatpush1.msra.mxu0 0.0
    %2464 = vmatprep.subr.mxu0 0.0
    %2465 = vmatpush1.msra.mxu0 0.0
    %2466 = vmatprep.subr.mxu0 0.0
    %2467 = vmatpush1.msra.mxu0 0.0
    %2468 = vmatprep.subr.mxu0 0.0
    %2469 = vmatpush1.msra.mxu0 0.0
    %2470 = vmatprep.subr.mxu0 0.0
    %2471 = vmatpush1.msra.mxu0 0.0
    %2472 = vmatprep.subr.mxu0 0.0
    %2473 = vmatpush1.msra.mxu0 0.0
    %2474 = vmatprep.subr.mxu0 0.0
    %2475 = vmatpush1.msra.mxu0 0.0
    %2476 = vmatprep.subr.mxu0 0.0
    %2477 = vmatpush1.msra.mxu0 0.0
    %2478 = vmatprep.subr.mxu0 0.0
    %2479 = vmatpush1.msra.mxu0 0.0
    %2480 = vmatprep.subr.mxu0 0.0
    %2481 = vmatpush1.msra.mxu0 0.0
    %2482 = vmatprep.subr.mxu0 0.0
    %2483 = vmatpush1.msra.mxu0 0.0
    %2484 = vmatprep.subr.mxu0 0.0
    %2485 = vmatpush1.msra.mxu0 0.0
    %2486 = vmatprep.subr.mxu0 0.0
    %2487 = vmatpush1.msra.mxu0 0.0
    %2488 = vmatprep.mubr.f32.mxu0 0.0
    %2489 = vmatmul.mubr.f32.gmra.mrb[0].mxu0 %v2422
    %v2490 = vpop.f32.mrb[0].mxu0
    %v2491 = vadd.f32 0.0, %v2490
    %v2492 = vpop.f32.mrb[0].mxu0
    %2493 = vdwg.mxu0
    %v2494 = vadd.f32 %v2418, %v2491
    %v2495 = vxor.u32 %v2494, 2147483648
    %v2496 = vmul.f32 %v2495, 1.442695
    %v2497 = vpow.pop %v2496
    %v2498 = vadd.f32 %v2497, 1.0
    %v2499 = vrcp.pop %v2498
    %v2500 = vmul.f32 1.0, %v2499
    %v2501 = vadd.f32 %v2491, %v819
    %2503 = vrot.lane.b32.xlu0 %v2501, 96
    %v2504 = vpop.permute.xlu0 %2503
    %v2506 = vmul.f32 %v2500, %v2504
    %2508 = vrot.lane.b32.xlu0 %v2506, 32
    %v2509 = vpop.permute.xlu0 %2508
    %v2511 = vadd.f32 %v2418, %v2509
    %v2512 = vtanh.pop %v2511
    %v2513 = vsub.f32 1.0, %v2500
    %2515 = vrot.lane.b32.xlu0 %v2512, 112
    %v2516 = vpop.permute.xlu0 %2515
    %v2518 = vmul.f32 %v2513, %v2516
    %v2519 = vmul.f32 %v2500, %v2415
    %v2520 = vadd.f32 %v2518, %v2519
    %v2521 = vadd.f32 %v2416, %v2520
    %s2522 = scalar_lea.vmem [#allocation2], 136
    %v2523 = vld [vmem:[%s2522] sm:$0xff]
    %2525 = vrot.lane.b32.xlu0 %v2520, 112
    %v2526 = vpop.permute.xlu0 %2525
    %v2527 = vsel %vm732, %v2526, 0
    %2529 = vmatprep.subr.mxu0 0.0
    %2530 = vmatpush1.msra.mxu0 %v728
    %2531 = vmatprep.subr.mxu0 0.0
    %2532 = vmatpush1.msra.mxu0 %v729
    %2533 = vmatprep.subr.mxu0 0.0
    %2534 = vmatpush1.msra.mxu0 0.0
    %2535 = vmatprep.subr.mxu0 0.0
    %2536 = vmatpush1.msra.mxu0 0.0
    %2537 = vmatprep.subr.mxu0 0.0
    %2538 = vmatpush1.msra.mxu0 0.0
    %2539 = vmatprep.subr.mxu0 0.0
    %2540 = vmatpush1.msra.mxu0 0.0
    %2541 = vmatprep.subr.mxu0 0.0
    %2542 = vmatpush1.msra.mxu0 0.0
    %2543 = vmatprep.subr.mxu0 0.0
    %2544 = vmatpush1.msra.mxu0 0.0
    %2545 = vmatprep.subr.mxu0 0.0
    %2546 = vmatpush1.msra.mxu0 0.0
    %2547 = vmatprep.subr.mxu0 0.0
    %2548 = vmatpush1.msra.mxu0 0.0
    %2549 = vmatprep.subr.mxu0 0.0
    %2550 = vmatpush1.msra.mxu0 0.0
    %2551 = vmatprep.subr.mxu0 0.0
    %2552 = vmatpush1.msra.mxu0 0.0
    %2553 = vmatprep.subr.mxu0 0.0
    %2554 = vmatpush1.msra.mxu0 0.0
    %2555 = vmatprep.subr.mxu0 0.0
    %2556 = vmatpush1.msra.mxu0 0.0
    %2557 = vmatprep.subr.mxu0 0.0
    %2558 = vmatpush1.msra.mxu0 0.0
    %2559 = vmatprep.subr.mxu0 0.0
    %2560 = vmatpush1.msra.mxu0 0.0
    %2561 = vmatprep.subr.mxu0 0.0
    %2562 = vmatpush1.msra.mxu0 0.0
    %2563 = vmatprep.subr.mxu0 0.0
    %2564 = vmatpush1.msra.mxu0 0.0
    %2565 = vmatprep.subr.mxu0 0.0
    %2566 = vmatpush1.msra.mxu0 0.0
    %2567 = vmatprep.subr.mxu0 0.0
    %2568 = vmatpush1.msra.mxu0 0.0
    %2569 = vmatprep.subr.mxu0 0.0
    %2570 = vmatpush1.msra.mxu0 0.0
    %2571 = vmatprep.subr.mxu0 0.0
    %2572 = vmatpush1.msra.mxu0 0.0
    %2573 = vmatprep.subr.mxu0 0.0
    %2574 = vmatpush1.msra.mxu0 0.0
    %2575 = vmatprep.subr.mxu0 0.0
    %2576 = vmatpush1.msra.mxu0 0.0
    %2577 = vmatprep.subr.mxu0 0.0
    %2578 = vmatpush1.msra.mxu0 0.0
    %2579 = vmatprep.subr.mxu0 0.0
    %2580 = vmatpush1.msra.mxu0 0.0
    %2581 = vmatprep.subr.mxu0 0.0
    %2582 = vmatpush1.msra.mxu0 0.0
    %2583 = vmatprep.subr.mxu0 0.0
    %2584 = vmatpush1.msra.mxu0 0.0
    %2585 = vmatprep.subr.mxu0 0.0
    %2586 = vmatpush1.msra.mxu0 0.0
    %2587 = vmatprep.subr.mxu0 0.0
    %2588 = vmatpush1.msra.mxu0 0.0
    %2589 = vmatprep.subr.mxu0 0.0
    %2590 = vmatpush1.msra.mxu0 0.0
    %2591 = vmatprep.subr.mxu0 0.0
    %2592 = vmatpush1.msra.mxu0 0.0
    %2593 = vmatprep.mubr.f32.mxu0 0.0
    %2594 = vmatmul.mubr.f32.gmra.mrb[0].mxu0 %v2527
    %v2595 = vpop.f32.mrb[0].mxu0
    %v2596 = vadd.f32 0.0, %v2595
    %v2597 = vpop.f32.mrb[0].mxu0
    %2598 = vdwg.mxu0
    %v2599 = vadd.f32 %v2523, %v2596
    %v2600 = vxor.u32 %v2599, 2147483648
    %v2601 = vmul.f32 %v2600, 1.442695
    %v2602 = vpow.pop %v2601
    %v2603 = vadd.f32 %v2602, 1.0
    %v2604 = vrcp.pop %v2603
    %v2605 = vmul.f32 1.0, %v2604
    %v2606 = vadd.f32 %v2596, %v819
    %2608 = vrot.lane.b32.xlu0 %v2606, 96
    %v2609 = vpop.permute.xlu0 %2608
    %v2611 = vmul.f32 %v2605, %v2609
    %2613 = vrot.lane.b32.xlu0 %v2611, 32
    %v2614 = vpop.permute.xlu0 %2613
    %v2616 = vadd.f32 %v2523, %v2614
    %v2617 = vtanh.pop %v2616
    %v2618 = vsub.f32 1.0, %v2605
    %2620 = vrot.lane.b32.xlu0 %v2617, 112
    %v2621 = vpop.permute.xlu0 %2620
    %v2623 = vmul.f32 %v2618, %v2621
    %v2624 = vmul.f32 %v2605, %v2520
    %v2625 = vadd.f32 %v2623, %v2624
    %v2626 = vadd.f32 %v2521, %v2625
    %s2627 = scalar_lea.vmem [#allocation2], 144
    %v2628 = vld [vmem:[%s2627] sm:$0xff]
    %2630 = vrot.lane.b32.xlu0 %v2625, 112
    %v2631 = vpop.permute.xlu0 %2630
    %v2632 = vsel %vm732, %v2631, 0
    %2634 = vmatprep.subr.mxu0 0.0
    %2635 = vmatpush1.msra.mxu0 %v728
    %2636 = vmatprep.subr.mxu0 0.0
    %2637 = vmatpush1.msra.mxu0 %v729
    %2638 = vmatprep.subr.mxu0 0.0
    %2639 = vmatpush1.msra.mxu0 0.0
    %2640 = vmatprep.subr.mxu0 0.0
    %2641 = vmatpush1.msra.mxu0 0.0
    %2642 = vmatprep.subr.mxu0 0.0
    %2643 = vmatpush1.msra.mxu0 0.0
    %2644 = vmatprep.subr.mxu0 0.0
    %2645 = vmatpush1.msra.mxu0 0.0
    %2646 = vmatprep.subr.mxu0 0.0
    %2647 = vmatpush1.msra.mxu0 0.0
    %2648 = vmatprep.subr.mxu0 0.0
    %2649 = vmatpush1.msra.mxu0 0.0
    %2650 = vmatprep.subr.mxu0 0.0
    %2651 = vmatpush1.msra.mxu0 0.0
    %2652 = vmatprep.subr.mxu0 0.0
    %2653 = vmatpush1.msra.mxu0 0.0
    %2654 = vmatprep.subr.mxu0 0.0
    %2655 = vmatpush1.msra.mxu0 0.0
    %2656 = vmatprep.subr.mxu0 0.0
    %2657 = vmatpush1.msra.mxu0 0.0
    %2658 = vmatprep.subr.mxu0 0.0
    %2659 = vmatpush1.msra.mxu0 0.0
    %2660 = vmatprep.subr.mxu0 0.0
    %2661 = vmatpush1.msra.mxu0 0.0
    %2662 = vmatprep.subr.mxu0 0.0
    %2663 = vmatpush1.msra.mxu0 0.0
    %2664 = vmatprep.subr.mxu0 0.0
    %2665 = vmatpush1.msra.mxu0 0.0
    %2666 = vmatprep.subr.mxu0 0.0
    %2667 = vmatpush1.msra.mxu0 0.0
    %2668 = vmatprep.subr.mxu0 0.0
    %2669 = vmatpush1.msra.mxu0 0.0
    %2670 = vmatprep.subr.mxu0 0.0
    %2671 = vmatpush1.msra.mxu0 0.0
    %2672 = vmatprep.subr.mxu0 0.0
    %2673 = vmatpush1.msra.mxu0 0.0
    %2674 = vmatprep.subr.mxu0 0.0
    %2675 = vmatpush1.msra.mxu0 0.0
    %2676 = vmatprep.subr.mxu0 0.0
    %2677 = vmatpush1.msra.mxu0 0.0
    %2678 = vmatprep.subr.mxu0 0.0
    %2679 = vmatpush1.msra.mxu0 0.0
    %2680 = vmatprep.subr.mxu0 0.0
    %2681 = vmatpush1.msra.mxu0 0.0
    %2682 = vmatprep.subr.mxu0 0.0
    %2683 = vmatpush1.msra.mxu0 0.0
    %2684 = vmatprep.subr.mxu0 0.0
    %2685 = vmatpush1.msra.mxu0 0.0
    %2686 = vmatprep.subr.mxu0 0.0
    %2687 = vmatpush1.msra.mxu0 0.0
    %2688 = vmatprep.subr.mxu0 0.0
    %2689 = vmatpush1.msra.mxu0 0.0
    %2690 = vmatprep.subr.mxu0 0.0
    %2691 = vmatpush1.msra.mxu0 0.0
    %2692 = vmatprep.subr.mxu0 0.0
    %2693 = vmatpush1.msra.mxu0 0.0
    %2694 = vmatprep.subr.mxu0 0.0
    %2695 = vmatpush1.msra.mxu0 0.0
    %2696 = vmatprep.subr.mxu0 0.0
    %2697 = vmatpush1.msra.mxu0 0.0
    %2698 = vmatprep.mubr.f32.mxu0 0.0
    %2699 = vmatmul.mubr.f32.gmra.mrb[0].mxu0 %v2632
    %v2700 = vpop.f32.mrb[0].mxu0
    %v2701 = vadd.f32 0.0, %v2700
    %v2702 = vpop.f32.mrb[0].mxu0
    %2703 = vdwg.mxu0
    %v2704 = vadd.f32 %v2628, %v2701
    %v2705 = vxor.u32 %v2704, 2147483648
    %v2706 = vmul.f32 %v2705, 1.442695
    %v2707 = vpow.pop %v2706
    %v2708 = vadd.f32 %v2707, 1.0
    %v2709 = vrcp.pop %v2708
    %v2710 = vmul.f32 1.0, %v2709
    %v2711 = vadd.f32 %v2701, %v819
    %2713 = vrot.lane.b32.xlu0 %v2711, 96
    %v2714 = vpop.permute.xlu0 %2713
    %v2716 = vmul.f32 %v2710, %v2714
    %2718 = vrot.lane.b32.xlu0 %v2716, 32
    %v2719 = vpop.permute.xlu0 %2718
    %v2721 = vadd.f32 %v2628, %v2719
    %v2722 = vtanh.pop %v2721
    %v2723 = vsub.f32 1.0, %v2710
    %2725 = vrot.lane.b32.xlu0 %v2722, 112
    %v2726 = vpop.permute.xlu0 %2725
    %v2728 = vmul.f32 %v2723, %v2726
    %v2729 = vmul.f32 %v2710, %v2625
    %v2730 = vadd.f32 %v2728, %v2729
    %v2731 = vadd.f32 %v2626, %v2730
    %s2732 = scalar_lea.vmem [#allocation2], 152
    %v2733 = vld [vmem:[%s2732] sm:$0xff]
    %2735 = vrot.lane.b32.xlu0 %v2730, 112
    %v2736 = vpop.permute.xlu0 %2735
    %v2737 = vsel %vm732, %v2736, 0
    %2739 = vmatprep.subr.mxu0 0.0
    %2740 = vmatpush1.msra.mxu0 %v728
    %2741 = vmatprep.subr.mxu0 0.0
    %2742 = vmatpush1.msra.mxu0 %v729
    %2743 = vmatprep.subr.mxu0 0.0
    %2744 = vmatpush1.msra.mxu0 0.0
    %2745 = vmatprep.subr.mxu0 0.0
    %2746 = vmatpush1.msra.mxu0 0.0
    %2747 = vmatprep.subr.mxu0 0.0
    %2748 = vmatpush1.msra.mxu0 0.0
    %2749 = vmatprep.subr.mxu0 0.0
    %2750 = vmatpush1.msra.mxu0 0.0
    %2751 = vmatprep.subr.mxu0 0.0
    %2752 = vmatpush1.msra.mxu0 0.0
    %2753 = vmatprep.subr.mxu0 0.0
    %2754 = vmatpush1.msra.mxu0 0.0
    %2755 = vmatprep.subr.mxu0 0.0
    %2756 = vmatpush1.msra.mxu0 0.0
    %2757 = vmatprep.subr.mxu0 0.0
    %2758 = vmatpush1.msra.mxu0 0.0
    %2759 = vmatprep.subr.mxu0 0.0
    %2760 = vmatpush1.msra.mxu0 0.0
    %2761 = vmatprep.subr.mxu0 0.0
    %2762 = vmatpush1.msra.mxu0 0.0
    %2763 = vmatprep.subr.mxu0 0.0
    %2764 = vmatpush1.msra.mxu0 0.0
    %2765 = vmatprep.subr.mxu0 0.0
    %2766 = vmatpush1.msra.mxu0 0.0
    %2767 = vmatprep.subr.mxu0 0.0
    %2768 = vmatpush1.msra.mxu0 0.0
    %2769 = vmatprep.subr.mxu0 0.0
    %2770 = vmatpush1.msra.mxu0 0.0
    %2771 = vmatprep.subr.mxu0 0.0
    %2772 = vmatpush1.msra.mxu0 0.0
    %2773 = vmatprep.subr.mxu0 0.0
    %2774 = vmatpush1.msra.mxu0 0.0
    %2775 = vmatprep.subr.mxu0 0.0
    %2776 = vmatpush1.msra.mxu0 0.0
    %2777 = vmatprep.subr.mxu0 0.0
    %2778 = vmatpush1.msra.mxu0 0.0
    %2779 = vmatprep.subr.mxu0 0.0
    %2780 = vmatpush1.msra.mxu0 0.0
    %2781 = vmatprep.subr.mxu0 0.0
    %2782 = vmatpush1.msra.mxu0 0.0
    %2783 = vmatprep.subr.mxu0 0.0
    %2784 = vmatpush1.msra.mxu0 0.0
    %2785 = vmatprep.subr.mxu0 0.0
    %2786 = vmatpush1.msra.mxu0 0.0
    %2787 = vmatprep.subr.mxu0 0.0
    %2788 = vmatpush1.msra.mxu0 0.0
    %2789 = vmatprep.subr.mxu0 0.0
    %2790 = vmatpush1.msra.mxu0 0.0
    %2791 = vmatprep.subr.mxu0 0.0
    %2792 = vmatpush1.msra.mxu0 0.0
    %2793 = vmatprep.subr.mxu0 0.0
    %2794 = vmatpush1.msra.mxu0 0.0
    %2795 = vmatprep.subr.mxu0 0.0
    %2796 = vmatpush1.msra.mxu0 0.0
    %2797 = vmatprep.subr.mxu0 0.0
    %2798 = vmatpush1.msra.mxu0 0.0
    %2799 = vmatprep.subr.mxu0 0.0
    %2800 = vmatpush1.msra.mxu0 0.0
    %2801 = vmatprep.subr.mxu0 0.0
    %2802 = vmatpush1.msra.mxu0 0.0
    %2803 = vmatprep.mubr.f32.mxu0 0.0
    %2804 = vmatmul.mubr.f32.gmra.mrb[0].mxu0 %v2737
    %v2805 = vpop.f32.mrb[0].mxu0
    %v2806 = vadd.f32 0.0, %v2805
    %v2807 = vpop.f32.mrb[0].mxu0
    %2808 = vdwg.mxu0
    %v2809 = vadd.f32 %v2733, %v2806
    %v2810 = vxor.u32 %v2809, 2147483648
    %v2811 = vmul.f32 %v2810, 1.442695
    %v2812 = vpow.pop %v2811
    %v2813 = vadd.f32 %v2812, 1.0
    %v2814 = vrcp.pop %v2813
    %v2815 = vmul.f32 1.0, %v2814
    %v2816 = vadd.f32 %v2806, %v819
    %2818 = vrot.lane.b32.xlu0 %v2816, 96
    %v2819 = vpop.permute.xlu0 %2818
    %v2821 = vmul.f32 %v2815, %v2819
    %2823 = vrot.lane.b32.xlu0 %v2821, 32
    %v2824 = vpop.permute.xlu0 %2823
    %v2826 = vadd.f32 %v2733, %v2824
    %v2827 = vtanh.pop %v2826
    %v2828 = vsub.f32 1.0, %v2815
    %2830 = vrot.lane.b32.xlu0 %v2827, 112
    %v2831 = vpop.permute.xlu0 %2830
    %v2833 = vmul.f32 %v2828, %v2831
    %v2834 = vmul.f32 %v2815, %v2730
    %v2835 = vadd.f32 %v2833, %v2834
    %v2836 = vadd.f32 %v2731, %v2835
    %s2837 = scalar_lea.vmem [#allocation2], 160
    %v2838 = vld [vmem:[%s2837] sm:$0xff]
    %2840 = vrot.lane.b32.xlu0 %v2835, 112
    %v2841 = vpop.permute.xlu0 %2840
    %v2842 = vsel %vm732, %v2841, 0
    %2844 = vmatprep.subr.mxu0 0.0
    %2845 = vmatpush1.msra.mxu0 %v728
    %2846 = vmatprep.subr.mxu0 0.0
    %2847 = vmatpush1.msra.mxu0 %v729
    %2848 = vmatprep.subr.mxu0 0.0
    %2849 = vmatpush1.msra.mxu0 0.0
    %2850 = vmatprep.subr.mxu0 0.0
    %2851 = vmatpush1.msra.mxu0 0.0
    %2852 = vmatprep.subr.mxu0 0.0
    %2853 = vmatpush1.msra.mxu0 0.0
    %2854 = vmatprep.subr.mxu0 0.0
    %2855 = vmatpush1.msra.mxu0 0.0
    %2856 = vmatprep.subr.mxu0 0.0
    %2857 = vmatpush1.msra.mxu0 0.0
    %2858 = vmatprep.subr.mxu0 0.0
    %2859 = vmatpush1.msra.mxu0 0.0
    %2860 = vmatprep.subr.mxu0 0.0
    %2861 = vmatpush1.msra.mxu0 0.0
    %2862 = vmatprep.subr.mxu0 0.0
    %2863 = vmatpush1.msra.mxu0 0.0
    %2864 = vmatprep.subr.mxu0 0.0
    %2865 = vmatpush1.msra.mxu0 0.0
    %2866 = vmatprep.subr.mxu0 0.0
    %2867 = vmatpush1.msra.mxu0 0.0
    %2868 = vmatprep.subr.mxu0 0.0
    %2869 = vmatpush1.msra.mxu0 0.0
    %2870 = vmatprep.subr.mxu0 0.0
    %2871 = vmatpush1.msra.mxu0 0.0
    %2872 = vmatprep.subr.mxu0 0.0
    %2873 = vmatpush1.msra.mxu0 0.0
    %2874 = vmatprep.subr.mxu0 0.0
    %2875 = vmatpush1.msra.mxu0 0.0
    %2876 = vmatprep.subr.mxu0 0.0
    %2877 = vmatpush1.msra.mxu0 0.0
    %2878 = vmatprep.subr.mxu0 0.0
    %2879 = vmatpush1.msra.mxu0 0.0
    %2880 = vmatprep.subr.mxu0 0.0
    %2881 = vmatpush1.msra.mxu0 0.0
    %2882 = vmatprep.subr.mxu0 0.0
    %2883 = vmatpush1.msra.mxu0 0.0
    %2884 = vmatprep.subr.mxu0 0.0
    %2885 = vmatpush1.msra.mxu0 0.0
    %2886 = vmatprep.subr.mxu0 0.0
    %2887 = vmatpush1.msra.mxu0 0.0
    %2888 = vmatprep.subr.mxu0 0.0
    %2889 = vmatpush1.msra.mxu0 0.0
    %2890 = vmatprep.subr.mxu0 0.0
    %2891 = vmatpush1.msra.mxu0 0.0
    %2892 = vmatprep.subr.mxu0 0.0
    %2893 = vmatpush1.msra.mxu0 0.0
    %2894 = vmatprep.subr.mxu0 0.0
    %2895 = vmatpush1.msra.mxu0 0.0
    %2896 = vmatprep.subr.mxu0 0.0
    %2897 = vmatpush1.msra.mxu0 0.0
    %2898 = vmatprep.subr.mxu0 0.0
    %2899 = vmatpush1.msra.mxu0 0.0
    %2900 = vmatprep.subr.mxu0 0.0
    %2901 = vmatpush1.msra.mxu0 0.0
    %2902 = vmatprep.subr.mxu0 0.0
    %2903 = vmatpush1.msra.mxu0 0.0
    %2904 = vmatprep.subr.mxu0 0.0
    %2905 = vmatpush1.msra.mxu0 0.0
    %2906 = vmatprep.subr.mxu0 0.0
    %2907 = vmatpush1.msra.mxu0 0.0
    %2908 = vmatprep.mubr.f32.mxu0 0.0
    %2909 = vmatmul.mubr.f32.gmra.mrb[0].mxu0 %v2842
    %v2910 = vpop.f32.mrb[0].mxu0
    %v2911 = vadd.f32 0.0, %v2910
    %v2912 = vpop.f32.mrb[0].mxu0
    %2913 = vdwg.mxu0
    %v2914 = vadd.f32 %v2838, %v2911
    %v2915 = vxor.u32 %v2914, 2147483648
    %v2916 = vmul.f32 %v2915, 1.442695
    %v2917 = vpow.pop %v2916
    %v2918 = vadd.f32 %v2917, 1.0
    %v2919 = vrcp.pop %v2918
    %v2920 = vmul.f32 1.0, %v2919
    %v2921 = vadd.f32 %v2911, %v819
    %2923 = vrot.lane.b32.xlu0 %v2921, 96
    %v2924 = vpop.permute.xlu0 %2923
    %v2926 = vmul.f32 %v2920, %v2924
    %2928 = vrot.lane.b32.xlu0 %v2926, 32
    %v2929 = vpop.permute.xlu0 %2928
    %v2931 = vadd.f32 %v2838, %v2929
    %v2932 = vtanh.pop %v2931
    %v2933 = vsub.f32 1.0, %v2920
    %2935 = vrot.lane.b32.xlu0 %v2932, 112
    %v2936 = vpop.permute.xlu0 %2935
    %v2938 = vmul.f32 %v2933, %v2936
    %v2939 = vmul.f32 %v2920, %v2835
    %v2940 = vadd.f32 %v2938, %v2939
    %v2941 = vadd.f32 %v2836, %v2940
    %s2942 = scalar_lea.vmem [#allocation2], 168
    %v2943 = vld [vmem:[%s2942] sm:$0xff]
    %2945 = vrot.lane.b32.xlu0 %v2940, 112
    %v2946 = vpop.permute.xlu0 %2945
    %v2947 = vsel %vm732, %v2946, 0
    %2949 = vmatprep.subr.mxu0 0.0
    %2950 = vmatpush1.msra.mxu0 %v728
    %2951 = vmatprep.subr.mxu0 0.0
    %2952 = vmatpush1.msra.mxu0 %v729
    %2953 = vmatprep.subr.mxu0 0.0
    %2954 = vmatpush1.msra.mxu0 0.0
    %2955 = vmatprep.subr.mxu0 0.0
    %2956 = vmatpush1.msra.mxu0 0.0
    %2957 = vmatprep.subr.mxu0 0.0
    %2958 = vmatpush1.msra.mxu0 0.0
    %2959 = vmatprep.subr.mxu0 0.0
    %2960 = vmatpush1.msra.mxu0 0.0
    %2961 = vmatprep.subr.mxu0 0.0
    %2962 = vmatpush1.msra.mxu0 0.0
    %2963 = vmatprep.subr.mxu0 0.0
    %2964 = vmatpush1.msra.mxu0 0.0
    %2965 = vmatprep.subr.mxu0 0.0
    %2966 = vmatpush1.msra.mxu0 0.0
    %2967 = vmatprep.subr.mxu0 0.0
    %2968 = vmatpush1.msra.mxu0 0.0
    %2969 = vmatprep.subr.mxu0 0.0
    %2970 = vmatpush1.msra.mxu0 0.0
    %2971 = vmatprep.subr.mxu0 0.0
    %2972 = vmatpush1.msra.mxu0 0.0
    %2973 = vmatprep.subr.mxu0 0.0
    %2974 = vmatpush1.msra.mxu0 0.0
    %2975 = vmatprep.subr.mxu0 0.0
    %2976 = vmatpush1.msra.mxu0 0.0
    %2977 = vmatprep.subr.mxu0 0.0
    %2978 = vmatpush1.msra.mxu0 0.0
    %2979 = vmatprep.subr.mxu0 0.0
    %2980 = vmatpush1.msra.mxu0 0.0
    %2981 = vmatprep.subr.mxu0 0.0
    %2982 = vmatpush1.msra.mxu0 0.0
    %2983 = vmatprep.subr.mxu0 0.0
    %2984 = vmatpush1.msra.mxu0 0.0
    %2985 = vmatprep.subr.mxu0 0.0
    %2986 = vmatpush1.msra.mxu0 0.0
    %2987 = vmatprep.subr.mxu0 0.0
    %2988 = vmatpush1.msra.mxu0 0.0
    %2989 = vmatprep.subr.mxu0 0.0
    %2990 = vmatpush1.msra.mxu0 0.0
    %2991 = vmatprep.subr.mxu0 0.0
    %2992 = vmatpush1.msra.mxu0 0.0
    %2993 = vmatprep.subr.mxu0 0.0
    %2994 = vmatpush1.msra.mxu0 0.0
    %2995 = vmatprep.subr.mxu0 0.0
    %2996 = vmatpush1.msra.mxu0 0.0
    %2997 = vmatprep.subr.mxu0 0.0
    %2998 = vmatpush1.msra.mxu0 0.0
    %2999 = vmatprep.subr.mxu0 0.0
    %3000 = vmatpush1.msra.mxu0 0.0
    %3001 = vmatprep.subr.mxu0 0.0
    %3002 = vmatpush1.msra.mxu0 0.0
    %3003 = vmatprep.subr.mxu0 0.0
    %3004 = vmatpush1.msra.mxu0 0.0
    %3005 = vmatprep.subr.mxu0 0.0
    %3006 = vmatpush1.msra.mxu0 0.0
    %3007 = vmatprep.subr.mxu0 0.0
    %3008 = vmatpush1.msra.mxu0 0.0
    %3009 = vmatprep.subr.mxu0 0.0
    %3010 = vmatpush1.msra.mxu0 0.0
    %3011 = vmatprep.subr.mxu0 0.0
    %3012 = vmatpush1.msra.mxu0 0.0
    %3013 = vmatprep.mubr.f32.mxu0 0.0
    %3014 = vmatmul.mubr.f32.gmra.mrb[0].mxu0 %v2947
    %v3015 = vpop.f32.mrb[0].mxu0
    %v3016 = vadd.f32 0.0, %v3015
    %v3017 = vpop.f32.mrb[0].mxu0
    %3018 = vdwg.mxu0
    %v3019 = vadd.f32 %v2943, %v3016
    %v3020 = vxor.u32 %v3019, 2147483648
    %v3021 = vmul.f32 %v3020, 1.442695
    %v3022 = vpow.pop %v3021
    %v3023 = vadd.f32 %v3022, 1.0
    %v3024 = vrcp.pop %v3023
    %v3025 = vmul.f32 1.0, %v3024
    %v3026 = vadd.f32 %v3016, %v819
    %3028 = vrot.lane.b32.xlu0 %v3026, 96
    %v3029 = vpop.permute.xlu0 %3028
    %v3031 = vmul.f32 %v3025, %v3029
    %3033 = vrot.lane.b32.xlu0 %v3031, 32
    %v3034 = vpop.permute.xlu0 %3033
    %v3036 = vadd.f32 %v2943, %v3034
    %v3037 = vtanh.pop %v3036
    %v3038 = vsub.f32 1.0, %v3025
    %3040 = vrot.lane.b32.xlu0 %v3037, 112
    %v3041 = vpop.permute.xlu0 %3040
    %v3043 = vmul.f32 %v3038, %v3041
    %v3044 = vmul.f32 %v3025, %v2940
    %v3045 = vadd.f32 %v3043, %v3044
    %v3046 = vadd.f32 %v2941, %v3045
    %s3047 = scalar_lea.vmem [#allocation2], 176
    %v3048 = vld [vmem:[%s3047] sm:$0xff]
    %3050 = vrot.lane.b32.xlu0 %v3045, 112
    %v3051 = vpop.permute.xlu0 %3050
    %v3052 = vsel %vm732, %v3051, 0
    %3054 = vmatprep.subr.mxu0 0.0
    %3055 = vmatpush1.msra.mxu0 %v728
    %3056 = vmatprep.subr.mxu0 0.0
    %3057 = vmatpush1.msra.mxu0 %v729
    %3058 = vmatprep.subr.mxu0 0.0
    %3059 = vmatpush1.msra.mxu0 0.0
    %3060 = vmatprep.subr.mxu0 0.0
    %3061 = vmatpush1.msra.mxu0 0.0
    %3062 = vmatprep.subr.mxu0 0.0
    %3063 = vmatpush1.msra.mxu0 0.0
    %3064 = vmatprep.subr.mxu0 0.0
    %3065 = vmatpush1.msra.mxu0 0.0
    %3066 = vmatprep.subr.mxu0 0.0
    %3067 = vmatpush1.msra.mxu0 0.0
    %3068 = vmatprep.subr.mxu0 0.0
    %3069 = vmatpush1.msra.mxu0 0.0
    %3070 = vmatprep.subr.mxu0 0.0
    %3071 = vmatpush1.msra.mxu0 0.0
    %3072 = vmatprep.subr.mxu0 0.0
    %3073 = vmatpush1.msra.mxu0 0.0
    %3074 = vmatprep.subr.mxu0 0.0
    %3075 = vmatpush1.msra.mxu0 0.0
    %3076 = vmatprep.subr.mxu0 0.0
    %3077 = vmatpush1.msra.mxu0 0.0
    %3078 = vmatprep.subr.mxu0 0.0
    %3079 = vmatpush1.msra.mxu0 0.0
    %3080 = vmatprep.subr.mxu0 0.0
    %3081 = vmatpush1.msra.mxu0 0.0
    %3082 = vmatprep.subr.mxu0 0.0
    %3083 = vmatpush1.msra.mxu0 0.0
    %3084 = vmatprep.subr.mxu0 0.0
    %3085 = vmatpush1.msra.mxu0 0.0
    %3086 = vmatprep.subr.mxu0 0.0
    %3087 = vmatpush1.msra.mxu0 0.0
    %3088 = vmatprep.subr.mxu0 0.0
    %3089 = vmatpush1.msra.mxu0 0.0
    %3090 = vmatprep.subr.mxu0 0.0
    %3091 = vmatpush1.msra.mxu0 0.0
    %3092 = vmatprep.subr.mxu0 0.0
    %3093 = vmatpush1.msra.mxu0 0.0
    %3094 = vmatprep.subr.mxu0 0.0
    %3095 = vmatpush1.msra.mxu0 0.0
    %3096 = vmatprep.subr.mxu0 0.0
    %3097 = vmatpush1.msra.mxu0 0.0
    %3098 = vmatprep.subr.mxu0 0.0
    %3099 = vmatpush1.msra.mxu0 0.0
    %3100 = vmatprep.subr.mxu0 0.0
    %3101 = vmatpush1.msra.mxu0 0.0
    %3102 = vmatprep.subr.mxu0 0.0
    %3103 = vmatpush1.msra.mxu0 0.0
    %3104 = vmatprep.subr.mxu0 0.0
    %3105 = vmatpush1.msra.mxu0 0.0
    %3106 = vmatprep.subr.mxu0 0.0
    %3107 = vmatpush1.msra.mxu0 0.0
    %3108 = vmatprep.subr.mxu0 0.0
    %3109 = vmatpush1.msra.mxu0 0.0
    %3110 = vmatprep.subr.mxu0 0.0
    %3111 = vmatpush1.msra.mxu0 0.0
    %3112 = vmatprep.subr.mxu0 0.0
    %3113 = vmatpush1.msra.mxu0 0.0
    %3114 = vmatprep.subr.mxu0 0.0
    %3115 = vmatpush1.msra.mxu0 0.0
    %3116 = vmatprep.subr.mxu0 0.0
    %3117 = vmatpush1.msra.mxu0 0.0
    %3118 = vmatprep.mubr.f32.mxu0 0.0
    %3119 = vmatmul.mubr.f32.gmra.mrb[0].mxu0 %v3052
    %v3120 = vpop.f32.mrb[0].mxu0
    %v3121 = vadd.f32 0.0, %v3120
    %v3122 = vpop.f32.mrb[0].mxu0
    %3123 = vdwg.mxu0
    %v3124 = vadd.f32 %v3048, %v3121
    %v3125 = vxor.u32 %v3124, 2147483648
    %v3126 = vmul.f32 %v3125, 1.442695
    %v3127 = vpow.pop %v3126
    %v3128 = vadd.f32 %v3127, 1.0
    %v3129 = vrcp.pop %v3128
    %v3130 = vmul.f32 1.0, %v3129
    %v3131 = vadd.f32 %v3121, %v819
    %3133 = vrot.lane.b32.xlu0 %v3131, 96
    %v3134 = vpop.permute.xlu0 %3133
    %v3136 = vmul.f32 %v3130, %v3134
    %3138 = vrot.lane.b32.xlu0 %v3136, 32
    %v3139 = vpop.permute.xlu0 %3138
    %v3141 = vadd.f32 %v3048, %v3139
    %v3142 = vtanh.pop %v3141
    %v3143 = vsub.f32 1.0, %v3130
    %3145 = vrot.lane.b32.xlu0 %v3142, 112
    %v3146 = vpop.permute.xlu0 %3145
    %v3148 = vmul.f32 %v3143, %v3146
    %v3149 = vmul.f32 %v3130, %v3045
    %v3150 = vadd.f32 %v3148, %v3149
    %v3151 = vadd.f32 %v3046, %v3150
    %s3152 = scalar_lea.vmem [#allocation2], 184
    %v3153 = vld [vmem:[%s3152] sm:$0xff]
    %3155 = vrot.lane.b32.xlu0 %v3150, 112
    %v3156 = vpop.permute.xlu0 %3155
    %v3157 = vsel %vm732, %v3156, 0
    %3159 = vmatprep.subr.mxu0 0.0
    %3160 = vmatpush1.msra.mxu0 %v728
    %3161 = vmatprep.subr.mxu0 0.0
    %3162 = vmatpush1.msra.mxu0 %v729
    %3163 = vmatprep.subr.mxu0 0.0
    %3164 = vmatpush1.msra.mxu0 0.0
    %3165 = vmatprep.subr.mxu0 0.0
    %3166 = vmatpush1.msra.mxu0 0.0
    %3167 = vmatprep.subr.mxu0 0.0
    %3168 = vmatpush1.msra.mxu0 0.0
    %3169 = vmatprep.subr.mxu0 0.0
    %3170 = vmatpush1.msra.mxu0 0.0
    %3171 = vmatprep.subr.mxu0 0.0
    %3172 = vmatpush1.msra.mxu0 0.0
    %3173 = vmatprep.subr.mxu0 0.0
    %3174 = vmatpush1.msra.mxu0 0.0
    %3175 = vmatprep.subr.mxu0 0.0
    %3176 = vmatpush1.msra.mxu0 0.0
    %3177 = vmatprep.subr.mxu0 0.0
    %3178 = vmatpush1.msra.mxu0 0.0
    %3179 = vmatprep.subr.mxu0 0.0
    %3180 = vmatpush1.msra.mxu0 0.0
    %3181 = vmatprep.subr.mxu0 0.0
    %3182 = vmatpush1.msra.mxu0 0.0
    %3183 = vmatprep.subr.mxu0 0.0
    %3184 = vmatpush1.msra.mxu0 0.0
    %3185 = vmatprep.subr.mxu0 0.0
    %3186 = vmatpush1.msra.mxu0 0.0
    %3187 = vmatprep.subr.mxu0 0.0
    %3188 = vmatpush1.msra.mxu0 0.0
    %3189 = vmatprep.subr.mxu0 0.0
    %3190 = vmatpush1.msra.mxu0 0.0
    %3191 = vmatprep.subr.mxu0 0.0
    %3192 = vmatpush1.msra.mxu0 0.0
    %3193 = vmatprep.subr.mxu0 0.0
    %3194 = vmatpush1.msra.mxu0 0.0
    %3195 = vmatprep.subr.mxu0 0.0
    %3196 = vmatpush1.msra.mxu0 0.0
    %3197 = vmatprep.subr.mxu0 0.0
    %3198 = vmatpush1.msra.mxu0 0.0
    %3199 = vmatprep.subr.mxu0 0.0
    %3200 = vmatpush1.msra.mxu0 0.0
    %3201 = vmatprep.subr.mxu0 0.0
    %3202 = vmatpush1.msra.mxu0 0.0
    %3203 = vmatprep.subr.mxu0 0.0
    %3204 = vmatpush1.msra.mxu0 0.0
    %3205 = vmatprep.subr.mxu0 0.0
    %3206 = vmatpush1.msra.mxu0 0.0
    %3207 = vmatprep.subr.mxu0 0.0
    %3208 = vmatpush1.msra.mxu0 0.0
    %3209 = vmatprep.subr.mxu0 0.0
    %3210 = vmatpush1.msra.mxu0 0.0
    %3211 = vmatprep.subr.mxu0 0.0
    %3212 = vmatpush1.msra.mxu0 0.0
    %3213 = vmatprep.subr.mxu0 0.0
    %3214 = vmatpush1.msra.mxu0 0.0
    %3215 = vmatprep.subr.mxu0 0.0
    %3216 = vmatpush1.msra.mxu0 0.0
    %3217 = vmatprep.subr.mxu0 0.0
    %3218 = vmatpush1.msra.mxu0 0.0
    %3219 = vmatprep.subr.mxu0 0.0
    %3220 = vmatpush1.msra.mxu0 0.0
    %3221 = vmatprep.subr.mxu0 0.0
    %3222 = vmatpush1.msra.mxu0 0.0
    %3223 = vmatprep.mubr.f32.mxu0 0.0
    %3224 = vmatmul.mubr.f32.gmra.mrb[0].mxu0 %v3157
    %v3225 = vpop.f32.mrb[0].mxu0
    %v3226 = vadd.f32 0.0, %v3225
    %v3227 = vpop.f32.mrb[0].mxu0
    %3228 = vdwg.mxu0
    %v3229 = vadd.f32 %v3153, %v3226
    %v3230 = vxor.u32 %v3229, 2147483648
    %v3231 = vmul.f32 %v3230, 1.442695
    %v3232 = vpow.pop %v3231
    %v3233 = vadd.f32 %v3232, 1.0
    %v3234 = vrcp.pop %v3233
    %v3235 = vmul.f32 1.0, %v3234
    %v3236 = vadd.f32 %v3226, %v819
    %3238 = vrot.lane.b32.xlu0 %v3236, 96
    %v3239 = vpop.permute.xlu0 %3238
    %v3241 = vmul.f32 %v3235, %v3239
    %3243 = vrot.lane.b32.xlu0 %v3241, 32
    %v3244 = vpop.permute.xlu0 %3243
    %v3246 = vadd.f32 %v3153, %v3244
    %v3247 = vtanh.pop %v3246
    %v3248 = vsub.f32 1.0, %v3235
    %3250 = vrot.lane.b32.xlu0 %v3247, 112
    %v3251 = vpop.permute.xlu0 %3250
    %v3253 = vmul.f32 %v3248, %v3251
    %v3254 = vmul.f32 %v3235, %v3150
    %v3255 = vadd.f32 %v3253, %v3254
    %v3256 = vadd.f32 %v3151, %v3255
    %s3257 = scalar_lea.vmem [#allocation2], 192
    %v3258 = vld [vmem:[%s3257] sm:$0xff]
    %3260 = vrot.lane.b32.xlu0 %v3255, 112
    %v3261 = vpop.permute.xlu0 %3260
    %v3262 = vsel %vm732, %v3261, 0
    %3264 = vmatprep.subr.mxu0 0.0
    %3265 = vmatpush1.msra.mxu0 %v728
    %3266 = vmatprep.subr.mxu0 0.0
    %3267 = vmatpush1.msra.mxu0 %v729
    %3268 = vmatprep.subr.mxu0 0.0
    %3269 = vmatpush1.msra.mxu0 0.0
    %3270 = vmatprep.subr.mxu0 0.0
    %3271 = vmatpush1.msra.mxu0 0.0
    %3272 = vmatprep.subr.mxu0 0.0
    %3273 = vmatpush1.msra.mxu0 0.0
    %3274 = vmatprep.subr.mxu0 0.0
    %3275 = vmatpush1.msra.mxu0 0.0
    %3276 = vmatprep.subr.mxu0 0.0
    %3277 = vmatpush1.msra.mxu0 0.0
    %3278 = vmatprep.subr.mxu0 0.0
    %3279 = vmatpush1.msra.mxu0 0.0
    %3280 = vmatprep.subr.mxu0 0.0
    %3281 = vmatpush1.msra.mxu0 0.0
    %3282 = vmatprep.subr.mxu0 0.0
    %3283 = vmatpush1.msra.mxu0 0.0
    %3284 = vmatprep.subr.mxu0 0.0
    %3285 = vmatpush1.msra.mxu0 0.0
    %3286 = vmatprep.subr.mxu0 0.0
    %3287 = vmatpush1.msra.mxu0 0.0
    %3288 = vmatprep.subr.mxu0 0.0
    %3289 = vmatpush1.msra.mxu0 0.0
    %3290 = vmatprep.subr.mxu0 0.0
    %3291 = vmatpush1.msra.mxu0 0.0
    %3292 = vmatprep.subr.mxu0 0.0
    %3293 = vmatpush1.msra.mxu0 0.0
    %3294 = vmatprep.subr.mxu0 0.0
    %3295 = vmatpush1.msra.mxu0 0.0
    %3296 = vmatprep.subr.mxu0 0.0
    %3297 = vmatpush1.msra.mxu0 0.0
    %3298 = vmatprep.subr.mxu0 0.0
    %3299 = vmatpush1.msra.mxu0 0.0
    %3300 = vmatprep.subr.mxu0 0.0
    %3301 = vmatpush1.msra.mxu0 0.0
    %3302 = vmatprep.subr.mxu0 0.0
    %3303 = vmatpush1.msra.mxu0 0.0
    %3304 = vmatprep.subr.mxu0 0.0
    %3305 = vmatpush1.msra.mxu0 0.0
    %3306 = vmatprep.subr.mxu0 0.0
    %3307 = vmatpush1.msra.mxu0 0.0
    %3308 = vmatprep.subr.mxu0 0.0
    %3309 = vmatpush1.msra.mxu0 0.0
    %3310 = vmatprep.subr.mxu0 0.0
    %3311 = vmatpush1.msra.mxu0 0.0
    %3312 = vmatprep.subr.mxu0 0.0
    %3313 = vmatpush1.msra.mxu0 0.0
    %3314 = vmatprep.subr.mxu0 0.0
    %3315 = vmatpush1.msra.mxu0 0.0
    %3316 = vmatprep.subr.mxu0 0.0
    %3317 = vmatpush1.msra.mxu0 0.0
    %3318 = vmatprep.subr.mxu0 0.0
    %3319 = vmatpush1.msra.mxu0 0.0
    %3320 = vmatprep.subr.mxu0 0.0
    %3321 = vmatpush1.msra.mxu0 0.0
    %3322 = vmatprep.subr.mxu0 0.0
    %3323 = vmatpush1.msra.mxu0 0.0
    %3324 = vmatprep.subr.mxu0 0.0
    %3325 = vmatpush1.msra.mxu0 0.0
    %3326 = vmatprep.subr.mxu0 0.0
    %3327 = vmatpush1.msra.mxu0 0.0
    %3328 = vmatprep.mubr.f32.mxu0 0.0
    %3329 = vmatmul.mubr.f32.gmra.mrb[0].mxu0 %v3262
    %v3330 = vpop.f32.mrb[0].mxu0
    %v3331 = vadd.f32 0.0, %v3330
    %v3332 = vpop.f32.mrb[0].mxu0
    %3333 = vdwg.mxu0
    %v3334 = vadd.f32 %v3258, %v3331
    %v3335 = vxor.u32 %v3334, 2147483648
    %v3336 = vmul.f32 %v3335, 1.442695
    %v3337 = vpow.pop %v3336
    %v3338 = vadd.f32 %v3337, 1.0
    %v3339 = vrcp.pop %v3338
    %v3340 = vmul.f32 1.0, %v3339
    %v3341 = vadd.f32 %v3331, %v819
    %3343 = vrot.lane.b32.xlu0 %v3341, 96
    %v3344 = vpop.permute.xlu0 %3343
    %v3346 = vmul.f32 %v3340, %v3344
    %3348 = vrot.lane.b32.xlu0 %v3346, 32
    %v3349 = vpop.permute.xlu0 %3348
    %v3351 = vadd.f32 %v3258, %v3349
    %v3352 = vtanh.pop %v3351
    %v3353 = vsub.f32 1.0, %v3340
    %3355 = vrot.lane.b32.xlu0 %v3352, 112
    %v3356 = vpop.permute.xlu0 %3355
    %v3358 = vmul.f32 %v3353, %v3356
    %v3359 = vmul.f32 %v3340, %v3255
    %v3360 = vadd.f32 %v3358, %v3359
    %v3361 = vadd.f32 %v3256, %v3360
    %s3362 = scalar_lea.vmem [#allocation2], 200
    %v3363 = vld [vmem:[%s3362] sm:$0xff]
    %3365 = vrot.lane.b32.xlu0 %v3360, 112
    %v3366 = vpop.permute.xlu0 %3365
    %v3367 = vsel %vm732, %v3366, 0
    %3369 = vmatprep.subr.mxu0 0.0
    %3370 = vmatpush1.msra.mxu0 %v728
    %3371 = vmatprep.subr.mxu0 0.0
    %3372 = vmatpush1.msra.mxu0 %v729
    %3373 = vmatprep.subr.mxu0 0.0
    %3374 = vmatpush1.msra.mxu0 0.0
    %3375 = vmatprep.subr.mxu0 0.0
    %3376 = vmatpush1.msra.mxu0 0.0
    %3377 = vmatprep.subr.mxu0 0.0
    %3378 = vmatpush1.msra.mxu0 0.0
    %3379 = vmatprep.subr.mxu0 0.0
    %3380 = vmatpush1.msra.mxu0 0.0
    %3381 = vmatprep.subr.mxu0 0.0
    %3382 = vmatpush1.msra.mxu0 0.0
    %3383 = vmatprep.subr.mxu0 0.0
    %3384 = vmatpush1.msra.mxu0 0.0
    %3385 = vmatprep.subr.mxu0 0.0
    %3386 = vmatpush1.msra.mxu0 0.0
    %3387 = vmatprep.subr.mxu0 0.0
    %3388 = vmatpush1.msra.mxu0 0.0
    %3389 = vmatprep.subr.mxu0 0.0
    %3390 = vmatpush1.msra.mxu0 0.0
    %3391 = vmatprep.subr.mxu0 0.0
    %3392 = vmatpush1.msra.mxu0 0.0
    %3393 = vmatprep.subr.mxu0 0.0
    %3394 = vmatpush1.msra.mxu0 0.0
    %3395 = vmatprep.subr.mxu0 0.0
    %3396 = vmatpush1.msra.mxu0 0.0
    %3397 = vmatprep.subr.mxu0 0.0
    %3398 = vmatpush1.msra.mxu0 0.0
    %3399 = vmatprep.subr.mxu0 0.0
    %3400 = vmatpush1.msra.mxu0 0.0
    %3401 = vmatprep.subr.mxu0 0.0
    %3402 = vmatpush1.msra.mxu0 0.0
    %3403 = vmatprep.subr.mxu0 0.0
    %3404 = vmatpush1.msra.mxu0 0.0
    %3405 = vmatprep.subr.mxu0 0.0
    %3406 = vmatpush1.msra.mxu0 0.0
    %3407 = vmatprep.subr.mxu0 0.0
    %3408 = vmatpush1.msra.mxu0 0.0
    %3409 = vmatprep.subr.mxu0 0.0
    %3410 = vmatpush1.msra.mxu0 0.0
    %3411 = vmatprep.subr.mxu0 0.0
    %3412 = vmatpush1.msra.mxu0 0.0
    %3413 = vmatprep.subr.mxu0 0.0
    %3414 = vmatpush1.msra.mxu0 0.0
    %3415 = vmatprep.subr.mxu0 0.0
    %3416 = vmatpush1.msra.mxu0 0.0
    %3417 = vmatprep.subr.mxu0 0.0
    %3418 = vmatpush1.msra.mxu0 0.0
    %3419 = vmatprep.subr.mxu0 0.0
    %3420 = vmatpush1.msra.mxu0 0.0
    %3421 = vmatprep.subr.mxu0 0.0
    %3422 = vmatpush1.msra.mxu0 0.0
    %3423 = vmatprep.subr.mxu0 0.0
    %3424 = vmatpush1.msra.mxu0 0.0
    %3425 = vmatprep.subr.mxu0 0.0
    %3426 = vmatpush1.msra.mxu0 0.0
    %3427 = vmatprep.subr.mxu0 0.0
    %3428 = vmatpush1.msra.mxu0 0.0
    %3429 = vmatprep.subr.mxu0 0.0
    %3430 = vmatpush1.msra.mxu0 0.0
    %3431 = vmatprep.subr.mxu0 0.0
    %3432 = vmatpush1.msra.mxu0 0.0
    %3433 = vmatprep.mubr.f32.mxu0 0.0
    %3434 = vmatmul.mubr.f32.gmra.mrb[0].mxu0 %v3367
    %v3435 = vpop.f32.mrb[0].mxu0
    %v3436 = vadd.f32 0.0, %v3435
    %v3437 = vpop.f32.mrb[0].mxu0
    %3438 = vdwg.mxu0
    %v3439 = vadd.f32 %v3363, %v3436
    %v3440 = vxor.u32 %v3439, 2147483648
    %v3441 = vmul.f32 %v3440, 1.442695
    %v3442 = vpow.pop %v3441
    %v3443 = vadd.f32 %v3442, 1.0
    %v3444 = vrcp.pop %v3443
    %v3445 = vmul.f32 1.0, %v3444
    %v3446 = vadd.f32 %v3436, %v819
    %3448 = vrot.lane.b32.xlu0 %v3446, 96
    %v3449 = vpop.permute.xlu0 %3448
    %v3451 = vmul.f32 %v3445, %v3449
    %3453 = vrot.lane.b32.xlu0 %v3451, 32
    %v3454 = vpop.permute.xlu0 %3453
    %v3456 = vadd.f32 %v3363, %v3454
    %v3457 = vtanh.pop %v3456
    %v3458 = vsub.f32 1.0, %v3445
    %3460 = vrot.lane.b32.xlu0 %v3457, 112
    %v3461 = vpop.permute.xlu0 %3460
    %v3463 = vmul.f32 %v3458, %v3461
    %v3464 = vmul.f32 %v3445, %v3360
    %v3465 = vadd.f32 %v3463, %v3464
    %v3466 = vadd.f32 %v3361, %v3465
    %s3467 = scalar_lea.vmem [#allocation2], 208
    %v3468 = vld [vmem:[%s3467] sm:$0xff]
    %3470 = vrot.lane.b32.xlu0 %v3465, 112
    %v3471 = vpop.permute.xlu0 %3470
    %v3472 = vsel %vm732, %v3471, 0
    %3474 = vmatprep.subr.mxu0 0.0
    %3475 = vmatpush1.msra.mxu0 %v728
    %3476 = vmatprep.subr.mxu0 0.0
    %3477 = vmatpush1.msra.mxu0 %v729
    %3478 = vmatprep.subr.mxu0 0.0
    %3479 = vmatpush1.msra.mxu0 0.0
    %3480 = vmatprep.subr.mxu0 0.0
    %3481 = vmatpush1.msra.mxu0 0.0
    %3482 = vmatprep.subr.mxu0 0.0
    %3483 = vmatpush1.msra.mxu0 0.0
    %3484 = vmatprep.subr.mxu0 0.0
    %3485 = vmatpush1.msra.mxu0 0.0
    %3486 = vmatprep.subr.mxu0 0.0
    %3487 = vmatpush1.msra.mxu0 0.0
    %3488 = vmatprep.subr.mxu0 0.0
    %3489 = vmatpush1.msra.mxu0 0.0
    %3490 = vmatprep.subr.mxu0 0.0
    %3491 = vmatpush1.msra.mxu0 0.0
    %3492 = vmatprep.subr.mxu0 0.0
    %3493 = vmatpush1.msra.mxu0 0.0
    %3494 = vmatprep.subr.mxu0 0.0
    %3495 = vmatpush1.msra.mxu0 0.0
    %3496 = vmatprep.subr.mxu0 0.0
    %3497 = vmatpush1.msra.mxu0 0.0
    %3498 = vmatprep.subr.mxu0 0.0
    %3499 = vmatpush1.msra.mxu0 0.0
    %3500 = vmatprep.subr.mxu0 0.0
    %3501 = vmatpush1.msra.mxu0 0.0
    %3502 = vmatprep.subr.mxu0 0.0
    %3503 = vmatpush1.msra.mxu0 0.0
    %3504 = vmatprep.subr.mxu0 0.0
    %3505 = vmatpush1.msra.mxu0 0.0
    %3506 = vmatprep.subr.mxu0 0.0
    %3507 = vmatpush1.msra.mxu0 0.0
    %3508 = vmatprep.subr.mxu0 0.0
    %3509 = vmatpush1.msra.mxu0 0.0
    %3510 = vmatprep.subr.mxu0 0.0
    %3511 = vmatpush1.msra.mxu0 0.0
    %3512 = vmatprep.subr.mxu0 0.0
    %3513 = vmatpush1.msra.mxu0 0.0
    %3514 = vmatprep.subr.mxu0 0.0
    %3515 = vmatpush1.msra.mxu0 0.0
    %3516 = vmatprep.subr.mxu0 0.0
    %3517 = vmatpush1.msra.mxu0 0.0
    %3518 = vmatprep.subr.mxu0 0.0
    %3519 = vmatpush1.msra.mxu0 0.0
    %3520 = vmatprep.subr.mxu0 0.0
    %3521 = vmatpush1.msra.mxu0 0.0
    %3522 = vmatprep.subr.mxu0 0.0
    %3523 = vmatpush1.msra.mxu0 0.0
    %3524 = vmatprep.subr.mxu0 0.0
    %3525 = vmatpush1.msra.mxu0 0.0
    %3526 = vmatprep.subr.mxu0 0.0
    %3527 = vmatpush1.msra.mxu0 0.0
    %3528 = vmatprep.subr.mxu0 0.0
    %3529 = vmatpush1.msra.mxu0 0.0
    %3530 = vmatprep.subr.mxu0 0.0
    %3531 = vmatpush1.msra.mxu0 0.0
    %3532 = vmatprep.subr.mxu0 0.0
    %3533 = vmatpush1.msra.mxu0 0.0
    %3534 = vmatprep.subr.mxu0 0.0
    %3535 = vmatpush1.msra.mxu0 0.0
    %3536 = vmatprep.subr.mxu0 0.0
    %3537 = vmatpush1.msra.mxu0 0.0
    %3538 = vmatprep.mubr.f32.mxu0 0.0
    %3539 = vmatmul.mubr.f32.gmra.mrb[0].mxu0 %v3472
    %v3540 = vpop.f32.mrb[0].mxu0
    %v3541 = vadd.f32 0.0, %v3540
    %v3542 = vpop.f32.mrb[0].mxu0
    %3543 = vdwg.mxu0
    %v3544 = vadd.f32 %v3468, %v3541
    %v3545 = vxor.u32 %v3544, 2147483648
    %v3546 = vmul.f32 %v3545, 1.442695
    %v3547 = vpow.pop %v3546
    %v3548 = vadd.f32 %v3547, 1.0
    %v3549 = vrcp.pop %v3548
    %v3550 = vmul.f32 1.0, %v3549
    %v3551 = vadd.f32 %v3541, %v819
    %3553 = vrot.lane.b32.xlu0 %v3551, 96
    %v3554 = vpop.permute.xlu0 %3553
    %v3556 = vmul.f32 %v3550, %v3554
    %3558 = vrot.lane.b32.xlu0 %v3556, 32
    %v3559 = vpop.permute.xlu0 %3558
    %v3561 = vadd.f32 %v3468, %v3559
    %v3562 = vtanh.pop %v3561
    %v3563 = vsub.f32 1.0, %v3550
    %3565 = vrot.lane.b32.xlu0 %v3562, 112
    %v3566 = vpop.permute.xlu0 %3565
    %v3568 = vmul.f32 %v3563, %v3566
    %v3569 = vmul.f32 %v3550, %v3465
    %v3570 = vadd.f32 %v3568, %v3569
    %v3571 = vadd.f32 %v3466, %v3570
    %s3572 = scalar_lea.vmem [#allocation2], 216
    %v3573 = vld [vmem:[%s3572] sm:$0xff]
    %3575 = vrot.lane.b32.xlu0 %v3570, 112
    %v3576 = vpop.permute.xlu0 %3575
    %v3577 = vsel %vm732, %v3576, 0
    %3579 = vmatprep.subr.mxu0 0.0
    %3580 = vmatpush1.msra.mxu0 %v728
    %3581 = vmatprep.subr.mxu0 0.0
    %3582 = vmatpush1.msra.mxu0 %v729
    %3583 = vmatprep.subr.mxu0 0.0
    %3584 = vmatpush1.msra.mxu0 0.0
    %3585 = vmatprep.subr.mxu0 0.0
    %3586 = vmatpush1.msra.mxu0 0.0
    %3587 = vmatprep.subr.mxu0 0.0
    %3588 = vmatpush1.msra.mxu0 0.0
    %3589 = vmatprep.subr.mxu0 0.0
    %3590 = vmatpush1.msra.mxu0 0.0
    %3591 = vmatprep.subr.mxu0 0.0
    %3592 = vmatpush1.msra.mxu0 0.0
    %3593 = vmatprep.subr.mxu0 0.0
    %3594 = vmatpush1.msra.mxu0 0.0
    %3595 = vmatprep.subr.mxu0 0.0
    %3596 = vmatpush1.msra.mxu0 0.0
    %3597 = vmatprep.subr.mxu0 0.0
    %3598 = vmatpush1.msra.mxu0 0.0
    %3599 = vmatprep.subr.mxu0 0.0
    %3600 = vmatpush1.msra.mxu0 0.0
    %3601 = vmatprep.subr.mxu0 0.0
    %3602 = vmatpush1.msra.mxu0 0.0
    %3603 = vmatprep.subr.mxu0 0.0
    %3604 = vmatpush1.msra.mxu0 0.0
    %3605 = vmatprep.subr.mxu0 0.0
    %3606 = vmatpush1.msra.mxu0 0.0
    %3607 = vmatprep.subr.mxu0 0.0
    %3608 = vmatpush1.msra.mxu0 0.0
    %3609 = vmatprep.subr.mxu0 0.0
    %3610 = vmatpush1.msra.mxu0 0.0
    %3611 = vmatprep.subr.mxu0 0.0
    %3612 = vmatpush1.msra.mxu0 0.0
    %3613 = vmatprep.subr.mxu0 0.0
    %3614 = vmatpush1.msra.mxu0 0.0
    %3615 = vmatprep.subr.mxu0 0.0
    %3616 = vmatpush1.msra.mxu0 0.0
    %3617 = vmatprep.subr.mxu0 0.0
    %3618 = vmatpush1.msra.mxu0 0.0
    %3619 = vmatprep.subr.mxu0 0.0
    %3620 = vmatpush1.msra.mxu0 0.0
    %3621 = vmatprep.subr.mxu0 0.0
    %3622 = vmatpush1.msra.mxu0 0.0
    %3623 = vmatprep.subr.mxu0 0.0
    %3624 = vmatpush1.msra.mxu0 0.0
    %3625 = vmatprep.subr.mxu0 0.0
    %3626 = vmatpush1.msra.mxu0 0.0
    %3627 = vmatprep.subr.mxu0 0.0
    %3628 = vmatpush1.msra.mxu0 0.0
    %3629 = vmatprep.subr.mxu0 0.0
    %3630 = vmatpush1.msra.mxu0 0.0
    %3631 = vmatprep.subr.mxu0 0.0
    %3632 = vmatpush1.msra.mxu0 0.0
    %3633 = vmatprep.subr.mxu0 0.0
    %3634 = vmatpush1.msra.mxu0 0.0
    %3635 = vmatprep.subr.mxu0 0.0
    %3636 = vmatpush1.msra.mxu0 0.0
    %3637 = vmatprep.subr.mxu0 0.0
    %3638 = vmatpush1.msra.mxu0 0.0
    %3639 = vmatprep.subr.mxu0 0.0
    %3640 = vmatpush1.msra.mxu0 0.0
    %3641 = vmatprep.subr.mxu0 0.0
    %3642 = vmatpush1.msra.mxu0 0.0
    %3643 = vmatprep.mubr.f32.mxu0 0.0
    %3644 = vmatmul.mubr.f32.gmra.mrb[0].mxu0 %v3577
    %v3645 = vpop.f32.mrb[0].mxu0
    %v3646 = vadd.f32 0.0, %v3645
    %v3647 = vpop.f32.mrb[0].mxu0
    %3648 = vdwg.mxu0
    %v3649 = vadd.f32 %v3573, %v3646
    %v3650 = vxor.u32 %v3649, 2147483648
    %v3651 = vmul.f32 %v3650, 1.442695
    %v3652 = vpow.pop %v3651
    %v3653 = vadd.f32 %v3652, 1.0
    %v3654 = vrcp.pop %v3653
    %v3655 = vmul.f32 1.0, %v3654
    %v3656 = vadd.f32 %v3646, %v819
    %3658 = vrot.lane.b32.xlu0 %v3656, 96
    %v3659 = vpop.permute.xlu0 %3658
    %v3661 = vmul.f32 %v3655, %v3659
    %3663 = vrot.lane.b32.xlu0 %v3661, 32
    %v3664 = vpop.permute.xlu0 %3663
    %v3666 = vadd.f32 %v3573, %v3664
    %v3667 = vtanh.pop %v3666
    %v3668 = vsub.f32 1.0, %v3655
    %3670 = vrot.lane.b32.xlu0 %v3667, 112
    %v3671 = vpop.permute.xlu0 %3670
    %v3673 = vmul.f32 %v3668, %v3671
    %v3674 = vmul.f32 %v3655, %v3570
    %v3675 = vadd.f32 %v3673, %v3674
    %v3676 = vadd.f32 %v3571, %v3675
    %s3677 = scalar_lea.vmem [#allocation2], 224
    %v3678 = vld [vmem:[%s3677] sm:$0xff]
    %3680 = vrot.lane.b32.xlu0 %v3675, 112
    %v3681 = vpop.permute.xlu0 %3680
    %v3682 = vsel %vm732, %v3681, 0
    %3684 = vmatprep.subr.mxu0 0.0
    %3685 = vmatpush1.msra.mxu0 %v728
    %3686 = vmatprep.subr.mxu0 0.0
    %3687 = vmatpush1.msra.mxu0 %v729
    %3688 = vmatprep.subr.mxu0 0.0
    %3689 = vmatpush1.msra.mxu0 0.0
    %3690 = vmatprep.subr.mxu0 0.0
    %3691 = vmatpush1.msra.mxu0 0.0
    %3692 = vmatprep.subr.mxu0 0.0
    %3693 = vmatpush1.msra.mxu0 0.0
    %3694 = vmatprep.subr.mxu0 0.0
    %3695 = vmatpush1.msra.mxu0 0.0
    %3696 = vmatprep.subr.mxu0 0.0
    %3697 = vmatpush1.msra.mxu0 0.0
    %3698 = vmatprep.subr.mxu0 0.0
    %3699 = vmatpush1.msra.mxu0 0.0
    %3700 = vmatprep.subr.mxu0 0.0
    %3701 = vmatpush1.msra.mxu0 0.0
    %3702 = vmatprep.subr.mxu0 0.0
    %3703 = vmatpush1.msra.mxu0 0.0
    %3704 = vmatprep.subr.mxu0 0.0
    %3705 = vmatpush1.msra.mxu0 0.0
    %3706 = vmatprep.subr.mxu0 0.0
    %3707 = vmatpush1.msra.mxu0 0.0
    %3708 = vmatprep.subr.mxu0 0.0
    %3709 = vmatpush1.msra.mxu0 0.0
    %3710 = vmatprep.subr.mxu0 0.0
    %3711 = vmatpush1.msra.mxu0 0.0
    %3712 = vmatprep.subr.mxu0 0.0
    %3713 = vmatpush1.msra.mxu0 0.0
    %3714 = vmatprep.subr.mxu0 0.0
    %3715 = vmatpush1.msra.mxu0 0.0
    %3716 = vmatprep.subr.mxu0 0.0
    %3717 = vmatpush1.msra.mxu0 0.0
    %3718 = vmatprep.subr.mxu0 0.0
    %3719 = vmatpush1.msra.mxu0 0.0
    %3720 = vmatprep.subr.mxu0 0.0
    %3721 = vmatpush1.msra.mxu0 0.0
    %3722 = vmatprep.subr.mxu0 0.0
    %3723 = vmatpush1.msra.mxu0 0.0
    %3724 = vmatprep.subr.mxu0 0.0
    %3725 = vmatpush1.msra.mxu0 0.0
    %3726 = vmatprep.subr.mxu0 0.0
    %3727 = vmatpush1.msra.mxu0 0.0
    %3728 = vmatprep.subr.mxu0 0.0
    %3729 = vmatpush1.msra.mxu0 0.0
    %3730 = vmatprep.subr.mxu0 0.0
    %3731 = vmatpush1.msra.mxu0 0.0
    %3732 = vmatprep.subr.mxu0 0.0
    %3733 = vmatpush1.msra.mxu0 0.0
    %3734 = vmatprep.subr.mxu0 0.0
    %3735 = vmatpush1.msra.mxu0 0.0
    %3736 = vmatprep.subr.mxu0 0.0
    %3737 = vmatpush1.msra.mxu0 0.0
    %3738 = vmatprep.subr.mxu0 0.0
    %3739 = vmatpush1.msra.mxu0 0.0
    %3740 = vmatprep.subr.mxu0 0.0
    %3741 = vmatpush1.msra.mxu0 0.0
    %3742 = vmatprep.subr.mxu0 0.0
    %3743 = vmatpush1.msra.mxu0 0.0
    %3744 = vmatprep.subr.mxu0 0.0
    %3745 = vmatpush1.msra.mxu0 0.0
    %3746 = vmatprep.subr.mxu0 0.0
    %3747 = vmatpush1.msra.mxu0 0.0
    %3748 = vmatprep.mubr.f32.mxu0 0.0
    %3749 = vmatmul.mubr.f32.gmra.mrb[0].mxu0 %v3682
    %v3750 = vpop.f32.mrb[0].mxu0
    %v3751 = vadd.f32 0.0, %v3750
    %v3752 = vpop.f32.mrb[0].mxu0
    %3753 = vdwg.mxu0
    %v3754 = vadd.f32 %v3678, %v3751
    %v3755 = vxor.u32 %v3754, 2147483648
    %v3756 = vmul.f32 %v3755, 1.442695
    %v3757 = vpow.pop %v3756
    %v3758 = vadd.f32 %v3757, 1.0
    %v3759 = vrcp.pop %v3758
    %v3760 = vmul.f32 1.0, %v3759
    %v3761 = vadd.f32 %v3751, %v819
    %3763 = vrot.lane.b32.xlu0 %v3761, 96
    %v3764 = vpop.permute.xlu0 %3763
    %v3766 = vmul.f32 %v3760, %v3764
    %3768 = vrot.lane.b32.xlu0 %v3766, 32
    %v3769 = vpop.permute.xlu0 %3768
    %v3771 = vadd.f32 %v3678, %v3769
    %v3772 = vtanh.pop %v3771
    %v3773 = vsub.f32 1.0, %v3760
    %3775 = vrot.lane.b32.xlu0 %v3772, 112
    %v3776 = vpop.permute.xlu0 %3775
    %v3778 = vmul.f32 %v3773, %v3776
    %v3779 = vmul.f32 %v3760, %v3675
    %v3780 = vadd.f32 %v3778, %v3779
    %v3781 = vadd.f32 %v3676, %v3780
    %s3782 = scalar_lea.vmem [#allocation2], 232
    %v3783 = vld [vmem:[%s3782] sm:$0xff]
    %3785 = vrot.lane.b32.xlu0 %v3780, 112
    %v3786 = vpop.permute.xlu0 %3785
    %v3787 = vsel %vm732, %v3786, 0
    %3789 = vmatprep.subr.mxu0 0.0
    %3790 = vmatpush1.msra.mxu0 %v728
    %3791 = vmatprep.subr.mxu0 0.0
    %3792 = vmatpush1.msra.mxu0 %v729
    %3793 = vmatprep.subr.mxu0 0.0
    %3794 = vmatpush1.msra.mxu0 0.0
    %3795 = vmatprep.subr.mxu0 0.0
    %3796 = vmatpush1.msra.mxu0 0.0
    %3797 = vmatprep.subr.mxu0 0.0
    %3798 = vmatpush1.msra.mxu0 0.0
    %3799 = vmatprep.subr.mxu0 0.0
    %3800 = vmatpush1.msra.mxu0 0.0
    %3801 = vmatprep.subr.mxu0 0.0
    %3802 = vmatpush1.msra.mxu0 0.0
    %3803 = vmatprep.subr.mxu0 0.0
    %3804 = vmatpush1.msra.mxu0 0.0
    %3805 = vmatprep.subr.mxu0 0.0
    %3806 = vmatpush1.msra.mxu0 0.0
    %3807 = vmatprep.subr.mxu0 0.0
    %3808 = vmatpush1.msra.mxu0 0.0
    %3809 = vmatprep.subr.mxu0 0.0
    %3810 = vmatpush1.msra.mxu0 0.0
    %3811 = vmatprep.subr.mxu0 0.0
    %3812 = vmatpush1.msra.mxu0 0.0
    %3813 = vmatprep.subr.mxu0 0.0
    %3814 = vmatpush1.msra.mxu0 0.0
    %3815 = vmatprep.subr.mxu0 0.0
    %3816 = vmatpush1.msra.mxu0 0.0
    %3817 = vmatprep.subr.mxu0 0.0
    %3818 = vmatpush1.msra.mxu0 0.0
    %3819 = vmatprep.subr.mxu0 0.0
    %3820 = vmatpush1.msra.mxu0 0.0
    %3821 = vmatprep.subr.mxu0 0.0
    %3822 = vmatpush1.msra.mxu0 0.0
    %3823 = vmatprep.subr.mxu0 0.0
    %3824 = vmatpush1.msra.mxu0 0.0
    %3825 = vmatprep.subr.mxu0 0.0
    %3826 = vmatpush1.msra.mxu0 0.0
    %3827 = vmatprep.subr.mxu0 0.0
    %3828 = vmatpush1.msra.mxu0 0.0
    %3829 = vmatprep.subr.mxu0 0.0
    %3830 = vmatpush1.msra.mxu0 0.0
    %3831 = vmatprep.subr.mxu0 0.0
    %3832 = vmatpush1.msra.mxu0 0.0
    %3833 = vmatprep.subr.mxu0 0.0
    %3834 = vmatpush1.msra.mxu0 0.0
    %3835 = vmatprep.subr.mxu0 0.0
    %3836 = vmatpush1.msra.mxu0 0.0
    %3837 = vmatprep.subr.mxu0 0.0
    %3838 = vmatpush1.msra.mxu0 0.0
    %3839 = vmatprep.subr.mxu0 0.0
    %3840 = vmatpush1.msra.mxu0 0.0
    %3841 = vmatprep.subr.mxu0 0.0
    %3842 = vmatpush1.msra.mxu0 0.0
    %3843 = vmatprep.subr.mxu0 0.0
    %3844 = vmatpush1.msra.mxu0 0.0
    %3845 = vmatprep.subr.mxu0 0.0
    %3846 = vmatpush1.msra.mxu0 0.0
    %3847 = vmatprep.subr.mxu0 0.0
    %3848 = vmatpush1.msra.mxu0 0.0
    %3849 = vmatprep.subr.mxu0 0.0
    %3850 = vmatpush1.msra.mxu0 0.0
    %3851 = vmatprep.subr.mxu0 0.0
    %3852 = vmatpush1.msra.mxu0 0.0
    %3853 = vmatprep.mubr.f32.mxu0 0.0
    %3854 = vmatmul.mubr.f32.gmra.mrb[0].mxu0 %v3787
    %v3855 = vpop.f32.mrb[0].mxu0
    %v3856 = vadd.f32 0.0, %v3855
    %v3857 = vpop.f32.mrb[0].mxu0
    %3858 = vdwg.mxu0
    %v3859 = vadd.f32 %v3783, %v3856
    %v3860 = vxor.u32 %v3859, 2147483648
    %v3861 = vmul.f32 %v3860, 1.442695
    %v3862 = vpow.pop %v3861
    %v3863 = vadd.f32 %v3862, 1.0
    %v3864 = vrcp.pop %v3863
    %v3865 = vmul.f32 1.0, %v3864
    %v3866 = vadd.f32 %v3856, %v819
    %3868 = vrot.lane.b32.xlu0 %v3866, 96
    %v3869 = vpop.permute.xlu0 %3868
    %v3871 = vmul.f32 %v3865, %v3869
    %3873 = vrot.lane.b32.xlu0 %v3871, 32
    %v3874 = vpop.permute.xlu0 %3873
    %v3876 = vadd.f32 %v3783, %v3874
    %v3877 = vtanh.pop %v3876
    %v3878 = vsub.f32 1.0, %v3865
    %3880 = vrot.lane.b32.xlu0 %v3877, 112
    %v3881 = vpop.permute.xlu0 %3880
    %v3883 = vmul.f32 %v3878, %v3881
    %v3884 = vmul.f32 %v3865, %v3780
    %v3885 = vadd.f32 %v3883, %v3884
    %v3886 = vadd.f32 %v3781, %v3885
    %v3887 = vld [vmem:[%s9] sm:$0xff]
    %v3888 = vld [vmem:[%s9 + $0x8] sm:$0xff]
    %v3889 = vld [vmem:[%s9 + $0x10] sm:$0xff]
    %v3890 = vld [vmem:[%s9 + $0x18] sm:$0xff]
    %v3891 = vmul.f32 %v3886, 0.033333335
    %3893 = vrot.lane.b32.xlu0 %v3885, 112
    %v3894 = vpop.permute.xlu0 %3893
    %v3895 = vsel %vm732, %v3894, 0
    %3897 = vmatprep.subr.mxu0 0.0
    %3898 = vmatpush1.msra.mxu0 %v3889
    %3899 = vmatprep.subr.mxu0 0.0
    %3900 = vmatpush1.msra.mxu0 %v3890
    %3901 = vmatprep.subr.mxu0 0.0
    %3902 = vmatpush1.msra.mxu0 0.0
    %3903 = vmatprep.subr.mxu0 0.0
    %3904 = vmatpush1.msra.mxu0 0.0
    %3905 = vmatprep.subr.mxu0 0.0
    %3906 = vmatpush1.msra.mxu0 0.0
    %3907 = vmatprep.subr.mxu0 0.0
    %3908 = vmatpush1.msra.mxu0 0.0
    %3909 = vmatprep.subr.mxu0 0.0
    %3910 = vmatpush1.msra.mxu0 0.0
    %3911 = vmatprep.subr.mxu0 0.0
    %3912 = vmatpush1.msra.mxu0 0.0
    %3913 = vmatprep.subr.mxu0 0.0
    %3914 = vmatpush1.msra.mxu0 0.0
    %3915 = vmatprep.subr.mxu0 0.0
    %3916 = vmatpush1.msra.mxu0 0.0
    %3917 = vmatprep.subr.mxu0 0.0
    %3918 = vmatpush1.msra.mxu0 0.0
    %3919 = vmatprep.subr.mxu0 0.0
    %3920 = vmatpush1.msra.mxu0 0.0
    %3921 = vmatprep.subr.mxu0 0.0
    %3922 = vmatpush1.msra.mxu0 0.0
    %3923 = vmatprep.subr.mxu0 0.0
    %3924 = vmatpush1.msra.mxu0 0.0
    %3925 = vmatprep.subr.mxu0 0.0
    %3926 = vmatpush1.msra.mxu0 0.0
    %3927 = vmatprep.subr.mxu0 0.0
    %3928 = vmatpush1.msra.mxu0 0.0
    %3929 = vmatprep.subr.mxu0 0.0
    %3930 = vmatpush1.msra.mxu0 0.0
    %3931 = vmatprep.subr.mxu0 0.0
    %3932 = vmatpush1.msra.mxu0 0.0
    %3933 = vmatprep.subr.mxu0 0.0
    %3934 = vmatpush1.msra.mxu0 0.0
    %3935 = vmatprep.subr.mxu0 0.0
    %3936 = vmatpush1.msra.mxu0 0.0
    %3937 = vmatprep.subr.mxu0 0.0
    %3938 = vmatpush1.msra.mxu0 0.0
    %3939 = vmatprep.subr.mxu0 0.0
    %3940 = vmatpush1.msra.mxu0 0.0
    %3941 = vmatprep.subr.mxu0 0.0
    %3942 = vmatpush1.msra.mxu0 0.0
    %3943 = vmatprep.subr.mxu0 0.0
    %3944 = vmatpush1.msra.mxu0 0.0
    %3945 = vmatprep.subr.mxu0 0.0
    %3946 = vmatpush1.msra.mxu0 0.0
    %3947 = vmatprep.subr.mxu0 0.0
    %3948 = vmatpush1.msra.mxu0 0.0
    %3949 = vmatprep.subr.mxu0 0.0
    %3950 = vmatpush1.msra.mxu0 0.0
    %3951 = vmatprep.subr.mxu0 0.0
    %3952 = vmatpush1.msra.mxu0 0.0
    %3953 = vmatprep.subr.mxu0 0.0
    %3954 = vmatpush1.msra.mxu0 0.0
    %3955 = vmatprep.subr.mxu0 0.0
    %3956 = vmatpush1.msra.mxu0 0.0
    %3957 = vmatprep.subr.mxu0 0.0
    %3958 = vmatpush1.msra.mxu0 0.0
    %3959 = vmatprep.subr.mxu0 0.0
    %3960 = vmatpush1.msra.mxu0 0.0
    %3961 = vmatprep.mubr.f32.mxu0 0.0
    %3962 = vmatmul.mubr.f32.gmra.mrb[0].mxu0 %v3895
    %v3963 = vpop.f32.mrb[0].mxu0
    %v3964 = vadd.f32 0.0, %v3963
    %v3965 = vpop.f32.mrb[0].mxu0
    %3966 = vdwg.mxu0
    %3968 = vrot.lane.b32.xlu0 %v3891, 112
    %v3969 = vpop.permute.xlu0 %3968
    %v3970 = vsel %vm732, %v3969, 0
    %3972 = vmatprep.subr.mxu0 0.0
    %3973 = vmatpush1.msra.mxu0 %v3887
    %3974 = vmatprep.subr.mxu0 0.0
    %3975 = vmatpush1.msra.mxu0 %v3888
    %3976 = vmatprep.subr.mxu0 0.0
    %3977 = vmatpush1.msra.mxu0 0.0
    %3978 = vmatprep.subr.mxu0 0.0
    %3979 = vmatpush1.msra.mxu0 0.0
    %3980 = vmatprep.subr.mxu0 0.0
    %3981 = vmatpush1.msra.mxu0 0.0
    %3982 = vmatprep.subr.mxu0 0.0
    %3983 = vmatpush1.msra.mxu0 0.0
    %3984 = vmatprep.subr.mxu0 0.0
    %3985 = vmatpush1.msra.mxu0 0.0
    %3986 = vmatprep.subr.mxu0 0.0
    %3987 = vmatpush1.msra.mxu0 0.0
    %3988 = vmatprep.subr.mxu0 0.0
    %3989 = vmatpush1.msra.mxu0 0.0
    %3990 = vmatprep.subr.mxu0 0.0
    %3991 = vmatpush1.msra.mxu0 0.0
    %3992 = vmatprep.subr.mxu0 0.0
    %3993 = vmatpush1.msra.mxu0 0.0
    %3994 = vmatprep.subr.mxu0 0.0
    %3995 = vmatpush1.msra.mxu0 0.0
    %3996 = vmatprep.subr.mxu0 0.0
    %3997 = vmatpush1.msra.mxu0 0.0
    %3998 = vmatprep.subr.mxu0 0.0
    %3999 = vmatpush1.msra.mxu0 0.0
    %4000 = vmatprep.subr.mxu0 0.0
    %4001 = vmatpush1.msra.mxu0 0.0
    %4002 = vmatprep.subr.mxu0 0.0
    %4003 = vmatpush1.msra.mxu0 0.0
    %4004 = vmatprep.subr.mxu0 0.0
    %4005 = vmatpush1.msra.mxu0 0.0
    %4006 = vmatprep.subr.mxu0 0.0
    %4007 = vmatpush1.msra.mxu0 0.0
    %4008 = vmatprep.subr.mxu0 0.0
    %4009 = vmatpush1.msra.mxu0 0.0
    %4010 = vmatprep.subr.mxu0 0.0
    %4011 = vmatpush1.msra.mxu0 0.0
    %4012 = vmatprep.subr.mxu0 0.0
    %4013 = vmatpush1.msra.mxu0 0.0
    %4014 = vmatprep.subr.mxu0 0.0
    %4015 = vmatpush1.msra.mxu0 0.0
    %4016 = vmatprep.subr.mxu0 0.0
    %4017 = vmatpush1.msra.mxu0 0.0
    %4018 = vmatprep.subr.mxu0 0.0
    %4019 = vmatpush1.msra.mxu0 0.0
    %4020 = vmatprep.subr.mxu0 0.0
    %4021 = vmatpush1.msra.mxu0 0.0
    %4022 = vmatprep.subr.mxu0 0.0
    %4023 = vmatpush1.msra.mxu0 0.0
    %4024 = vmatprep.subr.mxu0 0.0
    %4025 = vmatpush1.msra.mxu0 0.0
    %4026 = vmatprep.subr.mxu0 0.0
    %4027 = vmatpush1.msra.mxu0 0.0
    %4028 = vmatprep.subr.mxu0 0.0
    %4029 = vmatpush1.msra.mxu0 0.0
    %4030 = vmatprep.subr.mxu0 0.0
    %4031 = vmatpush1.msra.mxu0 0.0
    %4032 = vmatprep.subr.mxu0 0.0
    %4033 = vmatpush1.msra.mxu0 0.0
    %4034 = vmatprep.subr.mxu0 0.0
    %4035 = vmatpush1.msra.mxu0 0.0
    %4036 = vmatprep.mubr.f32.mxu0 0.0
    %4037 = vmatmul.mubr.f32.gmra.mrb[0].mxu0 %v3970
    %v4038 = vpop.f32.mrb[0].mxu0
    %v4039 = vadd.f32 %v3964, %v4038
    %v4040 = vpop.f32.mrb[0].mxu0
    %4041 = vdwg.mxu0
    %v4042 = vld [vmem:[%s10] sm:$0x1]
    %v4044 = vlaneseq
    %v4045 = vshrl.u32 %v4044, 7
    %v4046 = vsub.s32 0, %v4045
    %v4047 = vrot.slane %v4042, %v4046
    %v4049 = vadd.f32 %v4039, %v4047
    %v4054 = vlaneseq
    %v4055 = vand.u32 %v4054, 127
    %v4056 = vlaneseq
    %v4057 = vshrl.u32 %v4056, 7
    %v4058 = vsub.s32 %v4055, %v4057
    %v4059 = vrot.slane %v251, %v4058
    %v4060 = vlaneseq
    %v4061 = vshrl.u32 %v4060, 7
    %v4062 = vsub.s32 %v4055, %v4061
    %v4063 = vrot.slane %v252, %v4062
    %v4064 = vlaneseq
    %v4065 = vshrl.u32 %v4064, 7
    %v4066 = vsub.s32 %v4055, %v4065
    %v4067 = vrot.slane %v253, %v4066
    %v4068 = vlaneseq
    %v4069 = vshrl.u32 %v4068, 7
    %v4070 = vsub.s32 %v4055, %v4069
    %v4071 = vrot.slane %v254, %v4070
    %vm4072 = vcmask 1041409
    %v4073 = vsel %vm4072, %v4063, %v4059
    %vm4074 = vcmask 1042434
    %v4075 = vsel %vm4074, %v4067, %v4073
    %vm4076 = vcmask 1043459
    %v4077 = vsel %vm4076, %v4071, %v4075
    %v4079 = vadd.f32 %v4049, %v4077
    %vm4080 = vcmask 35840
    %4081 = vst.msk [vmem:[#allocation4] sm:$0xf] %vm4080, %v4079
    // Predicated region
    $region46: #{run_model.1} parent=1 // pred_check
      _
    $region47: #{run_model.1} parent=1 // pred_check_branch
      %4083 = sbr.rel (0) target = $region49
    $region48: #{run_model.1} parent=1 // pred_region
      %s4085 = ssub.s32 64, 64
      %4086 = vsyncadd [#allocation5], %s4085
      %s4088 = sshll.u32 [#allocation4], 4
      %s4089 = int_to_ptr.vmem [resolvable:$true] %s4088
      %4091 = dma.vmem_to_hbm [thread:$0]  %s4089, 64, %s11, [#allocation5]
    $region49: #{run_model.1} parent=1 // pred_fallthru
      _
    // Predicated region
    $region50: #{run_model.1} parent=1 // pred_check
      _
    $region51: #{run_model.1} parent=1 // pred_check_branch
      %4093 = sbr.rel (0) target = $region53
    $region52: #{run_model.1} parent=1 // pred_region
      %4094 = dma.done [#allocation5], 64
    $region53: #{run_model.1} parent=1 // pred_fallthru
      _
    %4095 = vsyncpa [#allocation5], 1

</llo_original>
